<compile_context>
chip_gen: v6e
topology: v6e:2x2x1
jax: 0.10.0
libtpu: 0.0.40
codegen_flags: <defaults>
</compile_context>

<pallas_src>
import functools

import jax
import jax.numpy as jnp
from jax.experimental import pallas as pl
from jax.experimental.pallas import tpu as pltpu


# ----------------------------- fused kernel --------------------------------

def _dqn_fused_kernel(p_ref, w1_ref, b1_ref, w2_ref, b2_ref,
                      wf1_ref, bf1_ref, wf2_ref, bf2_ref, wf3_ref, bf3_ref,
                      o_ref, p2_scr, flat_scr, *, batch):
    B = batch
    f32 = jnp.float32
    R = 256 * B                       # rows per maxpool1 window-offset group

    # ---- conv1 (+bias+relu) fused with maxpool1 ---------------------------
    # p_ref: (4R, 256) bf16 holding EXACT uint8 integer values; the /255
    # scale lives in w1 (f32), so casting to f32 is lossless and the f32
    # matmul matches the reference bit-for-bit.
    # Row order: (u, v | kh2, kw2, p, q, m, n, b); K = (kh1, kw1, ci).
    # One long matmul (single MXU push/drain stream) instead of four; pool1
    # is the elementwise max over the four R-row slabs (relu/max/bias commute).
    patches = p_ref[...].astype(f32)                                  # (4R, 256)
    c = jnp.dot(patches, w1_ref[...], preferred_element_type=f32)     # (4R, 16)
    pooled1 = jnp.maximum(jnp.maximum(c[0:R, :], c[R:2 * R, :]),
                          jnp.maximum(c[2 * R:3 * R, :], c[3 * R:4 * R, :]))
    pooled1 = jnp.maximum(pooled1 + b1_ref[...], 0.0)                 # (R, 16)
    # rows of pooled1: (kh2, kw2, p, q, m, n, b); lanes: conv1 channels.

    # ---- conv2 (+bias+relu) fused with maxpool2 ---------------------------
    # Fold the 16 (kh2, kw2) taps into K: stage tap t's 16 channels into
    # lanes [16t, 16t+16) of a (16B, 256) VMEM scratch, then ONE K=256 matmul
    # against w2 reshaped to (256, 32).
    blk = 16 * B
    for t in range(16):
        p2_scr[:, 16 * t:16 * (t + 1)] = pooled1[t * blk:(t + 1) * blk, :]
    acc = jnp.dot(p2_scr[...], w2_ref[...], preferred_element_type=f32)  # (16B, 32)
    # rows of acc: (p, q, m, n, b); maxpool2 = max over the 4 (p, q) slabs.
    slab = 4 * B
    pooled2 = jnp.maximum(
        jnp.maximum(acc[0:slab, :], acc[slab:2 * slab, :]),
        jnp.maximum(acc[2 * slab:3 * slab, :], acc[3 * slab:4 * slab, :]))
    pooled2 = jnp.maximum(pooled2 + b2_ref[...], 0.0)                 # (4B, 32)

    # ---- flatten + fc1 + fc2 + fc3 ----------------------------------------
    # PyTorch flatten(1) is realised by folding the 4 spatial (m, n) blocks
    # into lanes of a (B, 128) scratch; wf1's rows were pre-permuted once to
    # (spatial, channel) order, so fc1 is a single matmul.
    for s in range(4):
        flat_scr[:, 32 * s:32 * (s + 1)] = pooled2[s * B:(s + 1) * B, :]
    h = jnp.maximum(jnp.dot(flat_scr[...], wf1_ref[...],
                            preferred_element_type=f32) + bf1_ref[...], 0.0)
    h = jnp.maximum(jnp.dot(h, wf2_ref[...], preferred_element_type=f32)
                    + bf2_ref[...], 0.0)                              # (B, 128)
    o_ref[...] = (jnp.dot(h, wf3_ref[...], preferred_element_type=f32)
                  + bf3_ref[...])                                     # (B, A)


def _full_block(shape):
    nd = len(shape)
    return pl.BlockSpec(shape, lambda i: (0,) * nd)


# ----------------------------- wrapper-side layout glue ---------------------

def _build_conv1_pool_patches(x_u8):
    """bf16 im2col for conv1, restricted to the conv1 outputs that survive the
    two floor-mode max-pools, ordered for the fused kernel.

    x_u8: (B, 4, 32, 32) uint8 (NOT /255 -- the scale lives in w1).
    returns (4*256*B, 256) bfloat16 holding exact integer values:
      row = (u, v | kh2, kw2, p, q, m, n, b)   (pool1 offset groups leading)
      col = (kh1, kw1, ci)
    Only static shifted / strided slices are used (no gather HLO).
    """
    B, C, H, W = x_u8.shape
    assert (C, H, W) == (4, 32, 32), "kernel is specialised to 32x32x4 inputs"
    # uint8 -> bf16 is exact for 0..255 (8 significand bits).
    xc = jnp.transpose(x_u8.astype(jnp.bfloat16), (0, 2, 3, 1))   # (B, 32, 32, 4)

    # Full conv1 im2col via 64 static shifted slices:
    # pf[b, oh, ow, kh1*32 + kw1*4 + ci] = x[b, ci, oh + kh1, ow + kw1]
    rows = []
    for kh1 in range(8):
        cols = [xc[:, kh1:kh1 + 25, kw1:kw1 + 25, :] for kw1 in range(8)]
        rows.append(jnp.concatenate(cols, axis=-1))
    pf = jnp.concatenate(rows, axis=-1)                           # (B, 25, 25, 256)

    # conv1 output position needed for pool1 offset (u, v), conv2 tap
    # (kh2, kw2), pool2 offset (p, q) and pool2 output (m, n):
    #   oh = 8*m + 4*p + 2*kh2 + u ,  ow = 8*n + 4*q + 2*kw2 + v
    groups = []
    for u in (0, 1):
        for v in (0, 1):
            taps = []
            for kh2 in range(4):
                for kw2 in range(4):
                    h0 = 2 * kh2 + u
                    w0 = 2 * kw2 + v
                    sl = pf[:, h0:h0 + 13:4, w0:w0 + 13:4, :]     # (B, 4, 4, 256)
                    # axis1 index a = 2*m + p, axis2 index c = 2*n + q
                    sl = sl.reshape(B, 2, 2, 2, 2, 256)           # (b,m,p,n,q,K)
                    sl = sl.transpose(2, 4, 1, 3, 0, 5)           # (p,q,m,n,b,K)
                    taps.append(sl.reshape(16 * B, 256))
            groups.append(jnp.stack(taps, axis=0))                # (16, 16B, 256)
    return jnp.stack(groups, axis=0).reshape(4 * 256 * B, 256)    # bf16, exact ints


def prepare_params(params):
    """One-time layout transforms of the PyTorch-layout parameters.

    Hoisted out of the per-step forward (perf feedback): call once, then pass
    the result to every dqn_forward call.
    """
    # conv1: (co, ci, kh1, kw1) -> (K=(kh1,kw1,ci), co), with /255 folded in.
    w1m = params["w1"].transpose(2, 3, 1, 0).reshape(256, 16) * (1.0 / 255.0)
    # conv2: (co, ci, kh2, kw2) -> (K=(kh2,kw2,ci), co) = (256, 32)
    w2r = params["w2"].transpose(2, 3, 1, 0).reshape(256, 32)
    # PyTorch flatten(1) order is (channel, h, w); the kernel's flat lanes are
    # (spatial, channel), so permute wf1's rows once to match.
    wf1p = params["wf1"].reshape(32, 4, 512).transpose(1, 0, 2).reshape(128, 512)
    return dict(
        w1m=w1m, b1=params["b1"].reshape(1, 16),
        w2r=w2r, b2=params["b2"].reshape(1, 32),
        wf1=wf1p, bf1=params["bf1"].reshape(1, 512),
        wf2=params["wf2"], bf2=params["bf2"].reshape(1, 128),
        wf3=params["wf3"], bf3=params["bf3"].reshape(1, params["wf3"].shape[1]),
    )


def dqn_forward(prepared, x_u8):
    """Q(x) for x: (B, 4, 32, 32) uint8; matches the PyTorch DQN forward.

    `prepared` is the output of prepare_params (computed once, outside the
    per-step path).  For training-scale batches (B >= 128) the conv1 row axis
    should become a real grid axis marked "parallel" (megacore on v7x) with
    blocks sized for v7x's 64 MiB VMEM, and conv1 re-shaped so N >= 128 lanes
    per matmul; at inference batch this single-block fused kernel is
    launch/HBM-latency optimal.
    """
    B = int(x_u8.shape[0])
    A = int(prepared["wf3"].shape[1])
    patches = _build_conv1_pool_patches(x_u8)     # (4*256*B, 256) bf16, exact ints

    operands = (patches, prepared["w1m"], prepared["b1"], prepared["w2r"],
                prepared["b2"], prepared["wf1"], prepared["bf1"],
                prepared["wf2"], prepared["bf2"], prepared["wf3"],
                prepared["bf3"])

    flops = 2 * (1024 * B * 256 * 16              # conv1 (x4 pool candidates)
                 + 16 * B * 256 * 32              # conv2 (taps folded into K)
                 + B * 128 * 512                  # fc1
                 + B * 512 * 128 + B * 128 * A)   # fc2, fc3
    bytes_accessed = (int(patches.size) * 2
                      + sum(int(o.size) * 4 for o in operands[1:])
                      + B * A * 4)

    return pl.pallas_call(
        functools.partial(_dqn_fused_kernel, batch=B),
        grid=(1,),
        in_specs=[_full_block(o.shape) for o in operands],
        out_specs=pl.BlockSpec((B, A), lambda i: (0, 0)),
        out_shape=jax.ShapeDtypeStruct((B, A), jnp.float32),
        scratch_shapes=[pltpu.VMEM((16 * B, 256), jnp.float32),   # conv2 K-fold
                        pltpu.VMEM((B, 128), jnp.float32)],       # flatten
        compiler_params=pltpu.CompilerParams(
            dimension_semantics=("arbitrary",),
            vmem_limit_bytes=32 * 1024 * 1024),
        cost_estimate=pl.CostEstimate(flops=int(flops), transcendentals=0,
                                      bytes_accessed=int(bytes_accessed)),
    )(*operands)


# ----------------------------- params & reference ---------------------------

def _conv_output_size(input_shape):
    H, W, _ = input_shape
    oh1, ow1 = H - 8 + 1, W - 8 + 1                    # Conv2d(k=8, s=1)
    ph1, pw1 = oh1 // 2, ow1 // 2                      # MaxPool2d(2, 2)
    oh2, ow2 = (ph1 - 4) // 2 + 1, (pw1 - 4) // 2 + 1  # Conv2d(k=4, s=2)
    ph2, pw2 = oh2 // 2, ow2 // 2                      # MaxPool2d(2, 2)
    return 32 * ph2 * pw2


def init_params(key, input_shape, action_dim):
    """Deterministic init mirroring the PyTorch layer shapes."""
    _, _, C = input_shape
    conv_out = _conv_output_size(input_shape)
    keys = jax.random.split(key, 10)

    def u(k, shape, fan_in):
        bound = 1.0 / jnp.sqrt(jnp.float32(fan_in))
        return jax.random.uniform(k, shape, jnp.float32, -bound, bound)

    return {
        "w1": u(keys[0], (16, C, 8, 8), C * 8 * 8),
        "b1": u(keys[1], (16,), C * 8 * 8),
        "w2": u(keys[2], (32, 16, 4, 4), 16 * 4 * 4),
        "b2": u(keys[3], (32,), 16 * 4 * 4),
        "wf1": u(keys[4], (conv_out, 512), conv_out),
        "bf1": u(keys[5], (512,), conv_out),
        "wf2": u(keys[6], (512, 128), 512),
        "bf2": u(keys[7], (128,), 512),
        "wf3": u(keys[8], (128, action_dim), 128),
        "bf3": u(keys[9], (action_dim,), 128),
    }


def dqn_reference(params, x_u8):
    """Pure-XLA reference implementing the PyTorch forward verbatim."""
    prec = jax.lax.Precision.HIGHEST
    x = x_u8.astype(jnp.float32) / 255.0
    dn1 = jax.lax.conv_dimension_numbers(x.shape, params["w1"].shape,
                                         ("NCHW", "OIHW", "NCHW"))
    y = jax.lax.conv_general_dilated(x, params["w1"], (1, 1), "VALID",
                                     dimension_numbers=dn1, precision=prec)
    y = jnp.maximum(y + params["b1"][None, :, None, None], 0.0)
    y = jax.lax.reduce_window(y, -jnp.inf, jax.lax.max,
                              (1, 1, 2, 2), (1, 1, 2, 2), "VALID")
    dn2 = jax.lax.conv_dimension_numbers(y.shape, params["w2"].shape,
                                         ("NCHW", "OIHW", "NCHW"))
    y = jax.lax.conv_general_dilated(y, params["w2"], (2, 2), "VALID",
                                     dimension_numbers=dn2, precision=prec)
    y = jnp.maximum(y + params["b2"][None, :, None, None], 0.0)
    y = jax.lax.reduce_window(y, -jnp.inf, jax.lax.max,
                              (1, 1, 2, 2), (1, 1, 2, 2), "VALID")
    flat = y.reshape(y.shape[0], -1)
    h = jnp.maximum(jnp.dot(flat, params["wf1"], precision=prec)
                    + params["bf1"], 0.0)
    h = jnp.maximum(jnp.dot(h, params["wf2"], precision=prec)
                    + params["bf2"], 0.0)
    return jnp.dot(h, params["wf3"], precision=prec) + params["bf3"]


# ----------------------------- main -----------------------------------------

if __name__ == "__main__":
    input_shape = (32, 32, 4)   # (H, W, C), as the PyTorch module indexes it
    action_dim = 5
    batch = 2

    key = jax.random.PRNGKey(0)
    pkey, xkey = jax.random.split(key)
    params = init_params(pkey, input_shape, action_dim)

    x = jax.random.randint(
        xkey, (batch, input_shape[2], input_shape[0], input_shape[1]),
        0, 256, dtype=jnp.int32).astype(jnp.uint8)

    # One-time weight layout prep, hoisted out of the per-step path.
    prepared = prepare_params(params)
    jax.block_until_ready(prepared["w1m"])

    fwd = jax.jit(dqn_forward)
    q = fwd(prepared, x)
    jax.block_until_ready(q)
    assert q.shape == (batch, action_dim)
    assert q.dtype == jnp.float32

    q_ref = jax.jit(dqn_reference)(params, x)
    jax.block_until_ready(q_ref)
    max_err = float(jnp.max(jnp.abs(q - q_ref)))
    assert max_err < 2e-3, f"mismatch vs reference: {max_err}"

    print("KERNEL_OK")
</pallas_src>

<mosaic_0001>
module attributes {stable_mosaic.version = 11 : i64} {
  func.func @_dqn_fused_kernel(%arg0: i32, %arg1: memref<2048x256xbf16, #tpu.memory_space<vmem>>, %arg2: memref<256x16xf32, #tpu.memory_space<vmem>>, %arg3: memref<1x16xf32, #tpu.memory_space<vmem>>, %arg4: memref<256x32xf32, #tpu.memory_space<vmem>>, %arg5: memref<1x32xf32, #tpu.memory_space<vmem>>, %arg6: memref<128x512xf32, #tpu.memory_space<vmem>>, %arg7: memref<1x512xf32, #tpu.memory_space<vmem>>, %arg8: memref<512x128xf32, #tpu.memory_space<vmem>>, %arg9: memref<1x128xf32, #tpu.memory_space<vmem>>, %arg10: memref<128x5xf32, #tpu.memory_space<vmem>>, %arg11: memref<1x5xf32, #tpu.memory_space<vmem>>, %arg12: memref<2x5xf32, #tpu.memory_space<vmem>>, %arg13: memref<32x256xf32, #tpu.memory_space<vmem>>, %arg14: memref<2x128xf32, #tpu.memory_space<vmem>>) attributes {dimension_semantics = [#tpu.dimension_semantics<arbitrary>], iteration_bounds = array<i64: 1>, scalar_prefetch = 0 : i64, scratch_operands = 2 : i64, tpu.core_type = #tpu.core_type<tc>, window_params = [{pipeline_mode = #tpu.pipeline_mode<synchronous>, transform_indices = @transform_0, window_bounds = array<i64: 2048, 256>}, {pipeline_mode = #tpu.pipeline_mode<synchronous>, transform_indices = @transform_1, window_bounds = array<i64: 256, 16>}, {pipeline_mode = #tpu.pipeline_mode<synchronous>, transform_indices = @transform_2, window_bounds = array<i64: 1, 16>}, {pipeline_mode = #tpu.pipeline_mode<synchronous>, transform_indices = @transform_3, window_bounds = array<i64: 256, 32>}, {pipeline_mode = #tpu.pipeline_mode<synchronous>, transform_indices = @transform_4, window_bounds = array<i64: 1, 32>}, {pipeline_mode = #tpu.pipeline_mode<synchronous>, transform_indices = @transform_5, window_bounds = array<i64: 128, 512>}, {pipeline_mode = #tpu.pipeline_mode<synchronous>, transform_indices = @transform_6, window_bounds = array<i64: 1, 512>}, {pipeline_mode = #tpu.pipeline_mode<synchronous>, transform_indices = @transform_7, window_bounds = array<i64: 512, 128>}, {pipeline_mode = #tpu.pipeline_mode<synchronous>, transform_indices = @transform_8, window_bounds = array<i64: 1, 128>}, {pipeline_mode = #tpu.pipeline_mode<synchronous>, transform_indices = @transform_9, window_bounds = array<i64: 128, 5>}, {pipeline_mode = #tpu.pipeline_mode<synchronous>, transform_indices = @transform_10, window_bounds = array<i64: 1, 5>}, {pipeline_mode = #tpu.pipeline_mode<synchronous>, transform_indices = @transform_11, window_bounds = array<i64: 2, 5>}]} {
    %c0 = arith.constant 0 : index
    %c0_0 = arith.constant 0 : index
    %0 = vector.load %arg1[%c0, %c0_0] : memref<2048x256xbf16, #tpu.memory_space<vmem>>, vector<2048x256xbf16>
    %1 = arith.extf %0 : vector<2048x256xbf16> to vector<2048x256xf32>
    %c0_1 = arith.constant 0 : index
    %c0_2 = arith.constant 0 : index
    %2 = vector.load %arg2[%c0_1, %c0_2] : memref<256x16xf32, #tpu.memory_space<vmem>>, vector<256x16xf32>
    %cst = arith.constant dense<0.000000e+00> : vector<2048x16xf32>
    %3 = tpu.matmul %1, %2, %cst {dimension_numbers = #tpu.dot_dimension_numbers<[1], [0], [0], [1], [0, 0, 1, 1], [], []>} : vector<2048x256xf32>, vector<256x16xf32>, vector<2048x16xf32> -> vector<2048x16xf32>
    %4 = vector.extract_strided_slice %3 {offsets = [0, 0], sizes = [512, 16], strides = [1, 1]} : vector<2048x16xf32> to vector<512x16xf32>
    %5 = vector.extract_strided_slice %3 {offsets = [512, 0], sizes = [512, 16], strides = [1, 1]} : vector<2048x16xf32> to vector<512x16xf32>
    %6 = arith.maximumf %4, %5 : vector<512x16xf32>
    %7 = vector.extract_strided_slice %3 {offsets = [1024, 0], sizes = [512, 16], strides = [1, 1]} : vector<2048x16xf32> to vector<512x16xf32>
    %8 = vector.extract_strided_slice %3 {offsets = [1536, 0], sizes = [512, 16], strides = [1, 1]} : vector<2048x16xf32> to vector<512x16xf32>
    %9 = arith.maximumf %7, %8 : vector<512x16xf32>
    %10 = arith.maximumf %6, %9 : vector<512x16xf32>
    %c0_3 = arith.constant 0 : index
    %c0_4 = arith.constant 0 : index
    %11 = vector.load %arg3[%c0_3, %c0_4] : memref<1x16xf32, #tpu.memory_space<vmem>>, vector<1x16xf32>
    %12 = vector.broadcast %11 : vector<1x16xf32> to vector<512x16xf32>
    %13 = arith.addf %10, %12 : vector<512x16xf32>
    %cst_5 = arith.constant 0.000000e+00 : f32
    %14 = vector.broadcast %cst_5 : f32 to vector<512x16xf32>
    %15 = arith.maximumf %13, %14 : vector<512x16xf32>
    %16 = vector.extract_strided_slice %15 {offsets = [0, 0], sizes = [32, 16], strides = [1, 1]} : vector<512x16xf32> to vector<32x16xf32>
    %c0_6 = arith.constant 0 : index
    %c0_7 = arith.constant 0 : index
    %17 = vector.load %arg13[%c0_6, %c0_7] : memref<32x256xf32, #tpu.memory_space<vmem>>, vector<32x16xf32>
    tpu.vector_store %arg13[%c0_6, %c0_7], %16 {strides = array<i32>} : memref<32x256xf32, #tpu.memory_space<vmem>>, vector<32x16xf32>,
    %18 = vector.extract_strided_slice %15 {offsets = [32, 0], sizes = [32, 16], strides = [1, 1]} : vector<512x16xf32> to vector<32x16xf32>
    %c0_8 = arith.constant 0 : index
    %c16 = arith.constant 16 : index
    %19 = vector.load %arg13[%c0_8, %c16] : memref<32x256xf32, #tpu.memory_space<vmem>>, vector<32x16xf32>
    tpu.vector_store %arg13[%c0_8, %c16], %18 {strides = array<i32>} : memref<32x256xf32, #tpu.memory_space<vmem>>, vector<32x16xf32>,
    %20 = vector.extract_strided_slice %15 {offsets = [64, 0], sizes = [32, 16], strides = [1, 1]} : vector<512x16xf32> to vector<32x16xf32>
    %c0_9 = arith.constant 0 : index
    %c32 = arith.constant 32 : index
    %21 = vector.load %arg13[%c0_9, %c32] : memref<32x256xf32, #tpu.memory_space<vmem>>, vector<32x16xf32>
    tpu.vector_store %arg13[%c0_9, %c32], %20 {strides = array<i32>} : memref<32x256xf32, #tpu.memory_space<vmem>>, vector<32x16xf32>,
    %22 = vector.extract_strided_slice %15 {offsets = [96, 0], sizes = [32, 16], strides = [1, 1]} : vector<512x16xf32> to vector<32x16xf32>
    %c0_10 = arith.constant 0 : index
    %c48 = arith.constant 48 : index
    %23 = vector.load %arg13[%c0_10, %c48] : memref<32x256xf32, #tpu.memory_space<vmem>>, vector<32x16xf32>
    tpu.vector_store %arg13[%c0_10, %c48], %22 {strides = array<i32>} : memref<32x256xf32, #tpu.memory_space<vmem>>, vector<32x16xf32>,
    %24 = vector.extract_strided_slice %15 {offsets = [128, 0], sizes = [32, 16], strides = [1, 1]} : vector<512x16xf32> to vector<32x16xf32>
    %c0_11 = arith.constant 0 : index
    %c64 = arith.constant 64 : index
    %25 = vector.load %arg13[%c0_11, %c64] : memref<32x256xf32, #tpu.memory_space<vmem>>, vector<32x16xf32>
    tpu.vector_store %arg13[%c0_11, %c64], %24 {strides = array<i32>} : memref<32x256xf32, #tpu.memory_space<vmem>>, vector<32x16xf32>,
    %26 = vector.extract_strided_slice %15 {offsets = [160, 0], sizes = [32, 16], strides = [1, 1]} : vector<512x16xf32> to vector<32x16xf32>
    %c0_12 = arith.constant 0 : index
    %c80 = arith.constant 80 : index
    %27 = vector.load %arg13[%c0_12, %c80] : memref<32x256xf32, #tpu.memory_space<vmem>>, vector<32x16xf32>
    tpu.vector_store %arg13[%c0_12, %c80], %26 {strides = array<i32>} : memref<32x256xf32, #tpu.memory_space<vmem>>, vector<32x16xf32>,
    %28 = vector.extract_strided_slice %15 {offsets = [192, 0], sizes = [32, 16], strides = [1, 1]} : vector<512x16xf32> to vector<32x16xf32>
    %c0_13 = arith.constant 0 : index
    %c96 = arith.constant 96 : index
    %29 = vector.load %arg13[%c0_13, %c96] : memref<32x256xf32, #tpu.memory_space<vmem>>, vector<32x16xf32>
    tpu.vector_store %arg13[%c0_13, %c96], %28 {strides = array<i32>} : memref<32x256xf32, #tpu.memory_space<vmem>>, vector<32x16xf32>,
    %30 = vector.extract_strided_slice %15 {offsets = [224, 0], sizes = [32, 16], strides = [1, 1]} : vector<512x16xf32> to vector<32x16xf32>
    %c0_14 = arith.constant 0 : index
    %c112 = arith.constant 112 : index
    %31 = vector.load %arg13[%c0_14, %c112] : memref<32x256xf32, #tpu.memory_space<vmem>>, vector<32x16xf32>
    tpu.vector_store %arg13[%c0_14, %c112], %30 {strides = array<i32>} : memref<32x256xf32, #tpu.memory_space<vmem>>, vector<32x16xf32>,
    %32 = vector.extract_strided_slice %15 {offsets = [256, 0], sizes = [32, 16], strides = [1, 1]} : vector<512x16xf32> to vector<32x16xf32>
    %c0_15 = arith.constant 0 : index
    %c128 = arith.constant 128 : index
    %33 = vector.load %arg13[%c0_15, %c128] : memref<32x256xf32, #tpu.memory_space<vmem>>, vector<32x16xf32>
    tpu.vector_store %arg13[%c0_15, %c128], %32 {strides = array<i32>} : memref<32x256xf32, #tpu.memory_space<vmem>>, vector<32x16xf32>,
    %34 = vector.extract_strided_slice %15 {offsets = [288, 0], sizes = [32, 16], strides = [1, 1]} : vector<512x16xf32> to vector<32x16xf32>
    %c0_16 = arith.constant 0 : index
    %c144 = arith.constant 144 : index
    %35 = vector.load %arg13[%c0_16, %c144] : memref<32x256xf32, #tpu.memory_space<vmem>>, vector<32x16xf32>
    tpu.vector_store %arg13[%c0_16, %c144], %34 {strides = array<i32>} : memref<32x256xf32, #tpu.memory_space<vmem>>, vector<32x16xf32>,
    %36 = vector.extract_strided_slice %15 {offsets = [320, 0], sizes = [32, 16], strides = [1, 1]} : vector<512x16xf32> to vector<32x16xf32>
    %c0_17 = arith.constant 0 : index
    %c160 = arith.constant 160 : index
    %37 = vector.load %arg13[%c0_17, %c160] : memref<32x256xf32, #tpu.memory_space<vmem>>, vector<32x16xf32>
    tpu.vector_store %arg13[%c0_17, %c160], %36 {strides = array<i32>} : memref<32x256xf32, #tpu.memory_space<vmem>>, vector<32x16xf32>,
    %38 = vector.extract_strided_slice %15 {offsets = [352, 0], sizes = [32, 16], strides = [1, 1]} : vector<512x16xf32> to vector<32x16xf32>
    %c0_18 = arith.constant 0 : index
    %c176 = arith.constant 176 : index
    %39 = vector.load %arg13[%c0_18, %c176] : memref<32x256xf32, #tpu.memory_space<vmem>>, vector<32x16xf32>
    tpu.vector_store %arg13[%c0_18, %c176], %38 {strides = array<i32>} : memref<32x256xf32, #tpu.memory_space<vmem>>, vector<32x16xf32>,
    %40 = vector.extract_strided_slice %15 {offsets = [384, 0], sizes = [32, 16], strides = [1, 1]} : vector<512x16xf32> to vector<32x16xf32>
    %c0_19 = arith.constant 0 : index
    %c192 = arith.constant 192 : index
    %41 = vector.load %arg13[%c0_19, %c192] : memref<32x256xf32, #tpu.memory_space<vmem>>, vector<32x16xf32>
    tpu.vector_store %arg13[%c0_19, %c192], %40 {strides = array<i32>} : memref<32x256xf32, #tpu.memory_space<vmem>>, vector<32x16xf32>,
    %42 = vector.extract_strided_slice %15 {offsets = [416, 0], sizes = [32, 16], strides = [1, 1]} : vector<512x16xf32> to vector<32x16xf32>
    %c0_20 = arith.constant 0 : index
    %c208 = arith.constant 208 : index
    %43 = vector.load %arg13[%c0_20, %c208] : memref<32x256xf32, #tpu.memory_space<vmem>>, vector<32x16xf32>
    tpu.vector_store %arg13[%c0_20, %c208], %42 {strides = array<i32>} : memref<32x256xf32, #tpu.memory_space<vmem>>, vector<32x16xf32>,
    %44 = vector.extract_strided_slice %15 {offsets = [448, 0], sizes = [32, 16], strides = [1, 1]} : vector<512x16xf32> to vector<32x16xf32>
    %c0_21 = arith.constant 0 : index
    %c224 = arith.constant 224 : index
    %45 = vector.load %arg13[%c0_21, %c224] : memref<32x256xf32, #tpu.memory_space<vmem>>, vector<32x16xf32>
    tpu.vector_store %arg13[%c0_21, %c224], %44 {strides = array<i32>} : memref<32x256xf32, #tpu.memory_space<vmem>>, vector<32x16xf32>,
    %46 = vector.extract_strided_slice %15 {offsets = [480, 0], sizes = [32, 16], strides = [1, 1]} : vector<512x16xf32> to vector<32x16xf32>
    %c0_22 = arith.constant 0 : index
    %c240 = arith.constant 240 : index
    %47 = vector.load %arg13[%c0_22, %c240] : memref<32x256xf32, #tpu.memory_space<vmem>>, vector<32x16xf32>
    tpu.vector_store %arg13[%c0_22, %c240], %46 {strides = array<i32>} : memref<32x256xf32, #tpu.memory_space<vmem>>, vector<32x16xf32>,
    %c0_23 = arith.constant 0 : index
    %c0_24 = arith.constant 0 : index
    %48 = vector.load %arg13[%c0_23, %c0_24] : memref<32x256xf32, #tpu.memory_space<vmem>>, vector<32x256xf32>
    %c0_25 = arith.constant 0 : index
    %c0_26 = arith.constant 0 : index
    %49 = vector.load %arg4[%c0_25, %c0_26] : memref<256x32xf32, #tpu.memory_space<vmem>>, vector<256x32xf32>
    %cst_27 = arith.constant dense<0.000000e+00> : vector<32x32xf32>
    %50 = tpu.matmul %48, %49, %cst_27 {dimension_numbers = #tpu.dot_dimension_numbers<[1], [0], [0], [1], [0, 0, 1, 1], [], []>} : vector<32x256xf32>, vector<256x32xf32>, vector<32x32xf32> -> vector<32x32xf32>
    %51 = vector.extract_strided_slice %50 {offsets = [0, 0], sizes = [8, 32], strides = [1, 1]} : vector<32x32xf32> to vector<8x32xf32>
    %52 = vector.extract_strided_slice %50 {offsets = [8, 0], sizes = [8, 32], strides = [1, 1]} : vector<32x32xf32> to vector<8x32xf32>
    %53 = arith.maximumf %51, %52 : vector<8x32xf32>
    %54 = vector.extract_strided_slice %50 {offsets = [16, 0], sizes = [8, 32], strides = [1, 1]} : vector<32x32xf32> to vector<8x32xf32>
    %55 = vector.extract_strided_slice %50 {offsets = [24, 0], sizes = [8, 32], strides = [1, 1]} : vector<32x32xf32> to vector<8x32xf32>
    %56 = arith.maximumf %54, %55 : vector<8x32xf32>
    %57 = arith.maximumf %53, %56 : vector<8x32xf32>
    %c0_28 = arith.constant 0 : index
    %c0_29 = arith.constant 0 : index
    %58 = vector.load %arg5[%c0_28, %c0_29] : memref<1x32xf32, #tpu.memory_space<vmem>>, vector<1x32xf32>
    %59 = vector.broadcast %58 : vector<1x32xf32> to vector<8x32xf32>
    %60 = arith.addf %57, %59 : vector<8x32xf32>
    %cst_30 = arith.constant 0.000000e+00 : f32
    %61 = vector.broadcast %cst_30 : f32 to vector<8x32xf32>
    %62 = arith.maximumf %60, %61 : vector<8x32xf32>
    %63 = vector.extract_strided_slice %62 {offsets = [0, 0], sizes = [2, 32], strides = [1, 1]} : vector<8x32xf32> to vector<2x32xf32>
    %c0_31 = arith.constant 0 : index
    %c0_32 = arith.constant 0 : index
    %64 = vector.load %arg14[%c0_31, %c0_32] : memref<2x128xf32, #tpu.memory_space<vmem>>, vector<2x32xf32>
    tpu.vector_store %arg14[%c0_31, %c0_32], %63 {strides = array<i32>} : memref<2x128xf32, #tpu.memory_space<vmem>>, vector<2x32xf32>,
    %65 = vector.extract_strided_slice %62 {offsets = [2, 0], sizes = [2, 32], strides = [1, 1]} : vector<8x32xf32> to vector<2x32xf32>
    %c0_33 = arith.constant 0 : index
    %c32_34 = arith.constant 32 : index
    %66 = vector.load %arg14[%c0_33, %c32_34] : memref<2x128xf32, #tpu.memory_space<vmem>>, vector<2x32xf32>
    tpu.vector_store %arg14[%c0_33, %c32_34], %65 {strides = array<i32>} : memref<2x128xf32, #tpu.memory_space<vmem>>, vector<2x32xf32>,
    %67 = vector.extract_strided_slice %62 {offsets = [4, 0], sizes = [2, 32], strides = [1, 1]} : vector<8x32xf32> to vector<2x32xf32>
    %c0_35 = arith.constant 0 : index
    %c64_36 = arith.constant 64 : index
    %68 = vector.load %arg14[%c0_35, %c64_36] : memref<2x128xf32, #tpu.memory_space<vmem>>, vector<2x32xf32>
    tpu.vector_store %arg14[%c0_35, %c64_36], %67 {strides = array<i32>} : memref<2x128xf32, #tpu.memory_space<vmem>>, vector<2x32xf32>,
    %69 = vector.extract_strided_slice %62 {offsets = [6, 0], sizes = [2, 32], strides = [1, 1]} : vector<8x32xf32> to vector<2x32xf32>
    %c0_37 = arith.constant 0 : index
    %c96_38 = arith.constant 96 : index
    %70 = vector.load %arg14[%c0_37, %c96_38] : memref<2x128xf32, #tpu.memory_space<vmem>>, vector<2x32xf32>
    tpu.vector_store %arg14[%c0_37, %c96_38], %69 {strides = array<i32>} : memref<2x128xf32, #tpu.memory_space<vmem>>, vector<2x32xf32>,
    %c0_39 = arith.constant 0 : index
    %c0_40 = arith.constant 0 : index
    %71 = vector.load %arg14[%c0_39, %c0_40] : memref<2x128xf32, #tpu.memory_space<vmem>>, vector<2x128xf32>
    %c0_41 = arith.constant 0 : index
    %c0_42 = arith.constant 0 : index
    %72 = vector.load %arg6[%c0_41, %c0_42] : memref<128x512xf32, #tpu.memory_space<vmem>>, vector<128x512xf32>
    %cst_43 = arith.constant dense<0.000000e+00> : vector<2x512xf32>
    %73 = tpu.matmul %71, %72, %cst_43 {dimension_numbers = #tpu.dot_dimension_numbers<[1], [0], [0], [1], [0, 0, 1, 1], [], []>} : vector<2x128xf32>, vector<128x512xf32>, vector<2x512xf32> -> vector<2x512xf32>
    %c0_44 = arith.constant 0 : index
    %c0_45 = arith.constant 0 : index
    %74 = vector.load %arg7[%c0_44, %c0_45] : memref<1x512xf32, #tpu.memory_space<vmem>>, vector<1x512xf32>
    %75 = vector.broadcast %74 : vector<1x512xf32> to vector<2x512xf32>
    %76 = arith.addf %73, %75 : vector<2x512xf32>
    %cst_46 = arith.constant 0.000000e+00 : f32
    %77 = vector.broadcast %cst_46 : f32 to vector<2x512xf32>
    %78 = arith.maximumf %76, %77 : vector<2x512xf32>
    %c0_47 = arith.constant 0 : index
    %c0_48 = arith.constant 0 : index
    %79 = vector.load %arg8[%c0_47, %c0_48] : memref<512x128xf32, #tpu.memory_space<vmem>>, vector<512x128xf32>
    %cst_49 = arith.constant dense<0.000000e+00> : vector<2x128xf32>
    %80 = tpu.matmul %78, %79, %cst_49 {dimension_numbers = #tpu.dot_dimension_numbers<[1], [0], [0], [1], [0, 0, 1, 1], [], []>} : vector<2x512xf32>, vector<512x128xf32>, vector<2x128xf32> -> vector<2x128xf32>
    %c0_50 = arith.constant 0 : index
    %c0_51 = arith.constant 0 : index
    %81 = vector.load %arg9[%c0_50, %c0_51] : memref<1x128xf32, #tpu.memory_space<vmem>>, vector<1x128xf32>
    %82 = vector.broadcast %81 : vector<1x128xf32> to vector<2x128xf32>
    %83 = arith.addf %80, %82 : vector<2x128xf32>
    %cst_52 = arith.constant 0.000000e+00 : f32
    %84 = vector.broadcast %cst_52 : f32 to vector<2x128xf32>
    %85 = arith.maximumf %83, %84 : vector<2x128xf32>
    %c0_53 = arith.constant 0 : index
    %c0_54 = arith.constant 0 : index
    %86 = vector.load %arg10[%c0_53, %c0_54] : memref<128x5xf32, #tpu.memory_space<vmem>>, vector<128x5xf32>
    %cst_55 = arith.constant dense<0.000000e+00> : vector<2x5xf32>
    %87 = tpu.matmul %85, %86, %cst_55 {dimension_numbers = #tpu.dot_dimension_numbers<[1], [0], [0], [1], [0, 0, 1, 1], [], []>} : vector<2x128xf32>, vector<128x5xf32>, vector<2x5xf32> -> vector<2x5xf32>
    %c0_56 = arith.constant 0 : index
    %c0_57 = arith.constant 0 : index
    %88 = vector.load %arg11[%c0_56, %c0_57] : memref<1x5xf32, #tpu.memory_space<vmem>>, vector<1x5xf32>
    %89 = vector.broadcast %88 : vector<1x5xf32> to vector<2x5xf32>
    %90 = arith.addf %87, %89 : vector<2x5xf32>
    %c0_58 = arith.constant 0 : index
    %c0_59 = arith.constant 0 : index
    %91 = vector.load %arg12[%c0_58, %c0_59] : memref<2x5xf32, #tpu.memory_space<vmem>>, vector<2x5xf32>
    tpu.vector_store %arg12[%c0_58, %c0_59], %90 {strides = array<i32>} : memref<2x5xf32, #tpu.memory_space<vmem>>, vector<2x5xf32>,
    return
  }
  func.func @transform_0(%arg0: i32) -> (i32, i32) {
    %c0_i32 = arith.constant 0 : i32
    %c0_i32_0 = arith.constant 0 : i32
    %c0_i32_1 = arith.constant 0 : i32
    return %c0_i32, %c0_i32_0 : i32, i32
  }
  func.func @transform_1(%arg0: i32) -> (i32, i32) {
    %c0_i32 = arith.constant 0 : i32
    %c0_i32_0 = arith.constant 0 : i32
    %c0_i32_1 = arith.constant 0 : i32
    return %c0_i32, %c0_i32_0 : i32, i32
  }
  func.func @transform_2(%arg0: i32) -> (i32, i32) {
    %c0_i32 = arith.constant 0 : i32
    %c0_i32_0 = arith.constant 0 : i32
    %c0_i32_1 = arith.constant 0 : i32
    return %c0_i32, %c0_i32_0 : i32, i32
  }
  func.func @transform_3(%arg0: i32) -> (i32, i32) {
    %c0_i32 = arith.constant 0 : i32
    %c0_i32_0 = arith.constant 0 : i32
    %c0_i32_1 = arith.constant 0 : i32
    return %c0_i32, %c0_i32_0 : i32, i32
  }
  func.func @transform_4(%arg0: i32) -> (i32, i32) {
    %c0_i32 = arith.constant 0 : i32
    %c0_i32_0 = arith.constant 0 : i32
    %c0_i32_1 = arith.constant 0 : i32
    return %c0_i32, %c0_i32_0 : i32, i32
  }
  func.func @transform_5(%arg0: i32) -> (i32, i32) {
    %c0_i32 = arith.constant 0 : i32
    %c0_i32_0 = arith.constant 0 : i32
    %c0_i32_1 = arith.constant 0 : i32
    return %c0_i32, %c0_i32_0 : i32, i32
  }
  func.func @transform_6(%arg0: i32) -> (i32, i32) {
    %c0_i32 = arith.constant 0 : i32
    %c0_i32_0 = arith.constant 0 : i32
    %c0_i32_1 = arith.constant 0 : i32
    return %c0_i32, %c0_i32_0 : i32, i32
  }
  func.func @transform_7(%arg0: i32) -> (i32, i32) {
    %c0_i32 = arith.constant 0 : i32
    %c0_i32_0 = arith.constant 0 : i32
    %c0_i32_1 = arith.constant 0 : i32
    return %c0_i32, %c0_i32_0 : i32, i32
  }
  func.func @transform_8(%arg0: i32) -> (i32, i32) {
    %c0_i32 = arith.constant 0 : i32
    %c0_i32_0 = arith.constant 0 : i32
    %c0_i32_1 = arith.constant 0 : i32
    return %c0_i32, %c0_i32_0 : i32, i32
  }
  func.func @transform_9(%arg0: i32) -> (i32, i32) {
    %c0_i32 = arith.constant 0 : i32
    %c0_i32_0 = arith.constant 0 : i32
    %c0_i32_1 = arith.constant 0 : i32
    return %c0_i32, %c0_i32_0 : i32, i32
  }
  func.func @transform_10(%arg0: i32) -> (i32, i32) {
    %c0_i32 = arith.constant 0 : i32
    %c0_i32_0 = arith.constant 0 : i32
    %c0_i32_1 = arith.constant 0 : i32
    return %c0_i32, %c0_i32_0 : i32, i32
  }
  func.func @transform_11(%arg0: i32) -> (i32, i32) {
    %c0_i32 = arith.constant 0 : i32
    %c0_i32_0 = arith.constant 0 : i32
    %c0_i32_1 = arith.constant 0 : i32
    return %c0_i32, %c0_i32_0 : i32, i32
  }
}

</mosaic_0001>

<llo_original>
// kernel: dqn_forward.1
$region0: #{dqn_forward.1}
  #allocation0 [shape = 'u32[]', space=smem, size = 0x4, offset = 0x4, fixed_abs, tag = 'smem constant byte address 0x4 - core index']
  #allocation1 [shape = 'u32[144,128]{1,0:T(1,128)}', space=vmem, size = 0x12000, scoped, tag = 'internal scratch']
  #allocation2 [shape = 'f32[32,256]{1,0:T(8,128)}', space=vmem, size = 0x8000, scoped, tag = 'scratch operand']
  #allocation3 [shape = 'f32[2,128]{1,0:T(2,128)}', space=vmem, size = 0x400, scoped, tag = 'scratch operand']
  %s0 = inlined_call_operand.vmem [shape: bf16[2048,256], index: 0, kind: input, shape index: {}]
  %s1 = inlined_call_operand.vmem [shape: f32[256,16], index: 1, kind: input, shape index: {}]
  %s2 = inlined_call_operand.vmem [shape: f32[1,16], index: 2, kind: input, shape index: {}]
  %s3 = inlined_call_operand.vmem [shape: f32[256,32], index: 3, kind: input, shape index: {}]
  %s4 = inlined_call_operand.vmem [shape: f32[1,32], index: 4, kind: input, shape index: {}]
  %s5 = inlined_call_operand.vmem [shape: f32[128,512], index: 5, kind: input, shape index: {}]
  %s6 = inlined_call_operand.vmem [shape: f32[1,512], index: 6, kind: input, shape index: {}]
  %s7 = inlined_call_operand.vmem [shape: f32[512,128], index: 7, kind: input, shape index: {}]
  %s8 = inlined_call_operand.vmem [shape: f32[1,128], index: 8, kind: input, shape index: {}]
  %s9 = inlined_call_operand.vmem [shape: f32[128,5], index: 9, kind: input, shape index: {}]
  %s10 = inlined_call_operand.vmem [shape: f32[1,5], index: 10, kind: input, shape index: {}]
  %s11 = inlined_call_operand.hbm [shape: f32[2,5], index: 11, kind: output, shape index: {}]
  %s12 = sld [smem:[#allocation0]]
  $region54: #{dqn_forward.1} parent=0
    _
  %s14 = ssub.s32 1, %s12
  %s15 = scalar_select 0, %s14, %s12
  $region1: #{dqn_forward.1} parent=0
    #allocation4 [shape = 'u8[1024]{0}', space=vmem, size = 0x400, scoped, tag = 'output window, operand 0, single buffered']
    #allocation5 [shape = 's32[1]{0}', space=sflag, size = 0x4, scoped, tag = 'scoped memory for dqn_forward.1']
    %16 = vsyncpa [#allocation5], 0
    // Predicated region
    $region2: #{dqn_forward.1} parent=1 // pred_check
      _
    $region3: #{dqn_forward.1} parent=1 // pred_check_branch
      %18 = sbr.rel (0) target = $region5
    $region4: #{dqn_forward.1} parent=1 // pred_region
      _
    $region5: #{dqn_forward.1} parent=1 // pred_fallthru
      _
    // Predicated region
    $region6: #{dqn_forward.1} parent=1 // pred_check
      _
    $region7: #{dqn_forward.1} parent=1 // pred_check_branch
      %20 = sbr.rel (0) target = $region9
    $region8: #{dqn_forward.1} parent=1 // pred_region
      _
    $region9: #{dqn_forward.1} parent=1 // pred_fallthru
      _
    // Predicated region
    $region10: #{dqn_forward.1} parent=1 // pred_check
      _
    $region11: #{dqn_forward.1} parent=1 // pred_check_branch
      %22 = sbr.rel (0) target = $region13
    $region12: #{dqn_forward.1} parent=1 // pred_region
      _
    $region13: #{dqn_forward.1} parent=1 // pred_fallthru
      _
    // Predicated region
    $region14: #{dqn_forward.1} parent=1 // pred_check
      _
    $region15: #{dqn_forward.1} parent=1 // pred_check_branch
      %24 = sbr.rel (0) target = $region17
    $region16: #{dqn_forward.1} parent=1 // pred_region
      _
    $region17: #{dqn_forward.1} parent=1 // pred_fallthru
      _
    // Predicated region
    $region18: #{dqn_forward.1} parent=1 // pred_check
      _
    $region19: #{dqn_forward.1} parent=1 // pred_check_branch
      %26 = sbr.rel (0) target = $region21
    $region20: #{dqn_forward.1} parent=1 // pred_region
      _
    $region21: #{dqn_forward.1} parent=1 // pred_fallthru
      _
    // Predicated region
    $region22: #{dqn_forward.1} parent=1 // pred_check
      _
    $region23: #{dqn_forward.1} parent=1 // pred_check_branch
      %28 = sbr.rel (0) target = $region25
    $region24: #{dqn_forward.1} parent=1 // pred_region
      _
    $region25: #{dqn_forward.1} parent=1 // pred_fallthru
      _
    // Predicated region
    $region26: #{dqn_forward.1} parent=1 // pred_check
      _
    $region27: #{dqn_forward.1} parent=1 // pred_check_branch
      %30 = sbr.rel (0) target = $region29
    $region28: #{dqn_forward.1} parent=1 // pred_region
      _
    $region29: #{dqn_forward.1} parent=1 // pred_fallthru
      _
    // Predicated region
    $region30: #{dqn_forward.1} parent=1 // pred_check
      _
    $region31: #{dqn_forward.1} parent=1 // pred_check_branch
      %32 = sbr.rel (0) target = $region33
    $region32: #{dqn_forward.1} parent=1 // pred_region
      _
    $region33: #{dqn_forward.1} parent=1 // pred_fallthru
      _
    // Predicated region
    $region34: #{dqn_forward.1} parent=1 // pred_check
      _
    $region35: #{dqn_forward.1} parent=1 // pred_check_branch
      %34 = sbr.rel (0) target = $region37
    $region36: #{dqn_forward.1} parent=1 // pred_region
      _
    $region37: #{dqn_forward.1} parent=1 // pred_fallthru
      _
    // Predicated region
    $region38: #{dqn_forward.1} parent=1 // pred_check
      _
    $region39: #{dqn_forward.1} parent=1 // pred_check_branch
      %36 = sbr.rel (0) target = $region41
    $region40: #{dqn_forward.1} parent=1 // pred_region
      _
    $region41: #{dqn_forward.1} parent=1 // pred_fallthru
      _
    // Predicated region
    $region42: #{dqn_forward.1} parent=1 // pred_check
      _
    $region43: #{dqn_forward.1} parent=1 // pred_check_branch
      %38 = sbr.rel (0) target = $region45
    $region44: #{dqn_forward.1} parent=1 // pred_region
      _
    $region45: #{dqn_forward.1} parent=1 // pred_fallthru
      _
    %v39 = vld [vmem:[%s0] sm:$0xff]
    %v40 = vld [vmem:[%s0 + $0x8] sm:$0xff]
    %v41 = vld [vmem:[%s0 + $0x10] sm:$0xff]
    %v42 = vld [vmem:[%s0 + $0x18] sm:$0xff]
    %v43 = vld [vmem:[%s0 + $0x20] sm:$0xff]
    %v44 = vld [vmem:[%s0 + $0x28] sm:$0xff]
    %v45 = vld [vmem:[%s0 + $0x30] sm:$0xff]
    %v46 = vld [vmem:[%s0 + $0x38] sm:$0xff]
    %v47 = vld [vmem:[%s0 + $0x40] sm:$0xff]
    %v48 = vld [vmem:[%s0 + $0x48] sm:$0xff]
    %v49 = vld [vmem:[%s0 + $0x50] sm:$0xff]
    %v50 = vld [vmem:[%s0 + $0x58] sm:$0xff]
    %v51 = vld [vmem:[%s0 + $0x60] sm:$0xff]
    %v52 = vld [vmem:[%s0 + $0x68] sm:$0xff]
    %v53 = vld [vmem:[%s0 + $0x70] sm:$0xff]
    %v54 = vld [vmem:[%s0 + $0x78] sm:$0xff]
    %v55 = vld [vmem:[%s0 + $0x80] sm:$0xff]
    %v56 = vld [vmem:[%s0 + $0x88] sm:$0xff]
    %v57 = vld [vmem:[%s0 + $0x90] sm:$0xff]
    %v58 = vld [vmem:[%s0 + $0x98] sm:$0xff]
    %v59 = vld [vmem:[%s0 + $0xa0] sm:$0xff]
    %v60 = vld [vmem:[%s0 + $0xa8] sm:$0xff]
    %v61 = vld [vmem:[%s0 + $0xb0] sm:$0xff]
    %v62 = vld [vmem:[%s0 + $0xb8] sm:$0xff]
    %v63 = vld [vmem:[%s0 + $0xc0] sm:$0xff]
    %v64 = vld [vmem:[%s0 + $0xc8] sm:$0xff]
    %v65 = vld [vmem:[%s0 + $0xd0] sm:$0xff]
    %v66 = vld [vmem:[%s0 + $0xd8] sm:$0xff]
    %v67 = vld [vmem:[%s0 + $0xe0] sm:$0xff]
    %v68 = vld [vmem:[%s0 + $0xe8] sm:$0xff]
    %v69 = vld [vmem:[%s0 + $0xf0] sm:$0xff]
    %v70 = vld [vmem:[%s0 + $0xf8] sm:$0xff]
    %v71 = vld [vmem:[%s0 + $0x100] sm:$0xff]
    %v72 = vld [vmem:[%s0 + $0x108] sm:$0xff]
    %v73 = vld [vmem:[%s0 + $0x110] sm:$0xff]
    %v74 = vld [vmem:[%s0 + $0x118] sm:$0xff]
    %v75 = vld [vmem:[%s0 + $0x120] sm:$0xff]
    %v76 = vld [vmem:[%s0 + $0x128] sm:$0xff]
    %v77 = vld [vmem:[%s0 + $0x130] sm:$0xff]
    %v78 = vld [vmem:[%s0 + $0x138] sm:$0xff]
    %v79 = vld [vmem:[%s0 + $0x140] sm:$0xff]
    %v80 = vld [vmem:[%s0 + $0x148] sm:$0xff]
    %v81 = vld [vmem:[%s0 + $0x150] sm:$0xff]
    %v82 = vld [vmem:[%s0 + $0x158] sm:$0xff]
    %v83 = vld [vmem:[%s0 + $0x160] sm:$0xff]
    %v84 = vld [vmem:[%s0 + $0x168] sm:$0xff]
    %v85 = vld [vmem:[%s0 + $0x170] sm:$0xff]
    %v86 = vld [vmem:[%s0 + $0x178] sm:$0xff]
    %v87 = vld [vmem:[%s0 + $0x180] sm:$0xff]
    %v88 = vld [vmem:[%s0 + $0x188] sm:$0xff]
    %v89 = vld [vmem:[%s0 + $0x190] sm:$0xff]
    %v90 = vld [vmem:[%s0 + $0x198] sm:$0xff]
    %v91 = vld [vmem:[%s0 + $0x1a0] sm:$0xff]
    %v92 = vld [vmem:[%s0 + $0x1a8] sm:$0xff]
    %v93 = vld [vmem:[%s0 + $0x1b0] sm:$0xff]
    %v94 = vld [vmem:[%s0 + $0x1b8] sm:$0xff]
    %v95 = vld [vmem:[%s0 + $0x1c0] sm:$0xff]
    %v96 = vld [vmem:[%s0 + $0x1c8] sm:$0xff]
    %v97 = vld [vmem:[%s0 + $0x1d0] sm:$0xff]
    %v98 = vld [vmem:[%s0 + $0x1d8] sm:$0xff]
    %v99 = vld [vmem:[%s0 + $0x1e0] sm:$0xff]
    %v100 = vld [vmem:[%s0 + $0x1e8] sm:$0xff]
    %v101 = vld [vmem:[%s0 + $0x1f0] sm:$0xff]
    %v102 = vld [vmem:[%s0 + $0x1f8] sm:$0xff]
    %v103 = vld [vmem:[%s0 + $0x200] sm:$0xff]
    %v104 = vld [vmem:[%s0 + $0x208] sm:$0xff]
    %v105 = vld [vmem:[%s0 + $0x210] sm:$0xff]
    %v106 = vld [vmem:[%s0 + $0x218] sm:$0xff]
    %v107 = vld [vmem:[%s0 + $0x220] sm:$0xff]
    %v108 = vld [vmem:[%s0 + $0x228] sm:$0xff]
    %v109 = vld [vmem:[%s0 + $0x230] sm:$0xff]
    %v110 = vld [vmem:[%s0 + $0x238] sm:$0xff]
    %v111 = vld [vmem:[%s0 + $0x240] sm:$0xff]
    %v112 = vld [vmem:[%s0 + $0x248] sm:$0xff]
    %v113 = vld [vmem:[%s0 + $0x250] sm:$0xff]
    %v114 = vld [vmem:[%s0 + $0x258] sm:$0xff]
    %v115 = vld [vmem:[%s0 + $0x260] sm:$0xff]
    %v116 = vld [vmem:[%s0 + $0x268] sm:$0xff]
    %v117 = vld [vmem:[%s0 + $0x270] sm:$0xff]
    %v118 = vld [vmem:[%s0 + $0x278] sm:$0xff]
    %v119 = vld [vmem:[%s0 + $0x280] sm:$0xff]
    %v120 = vld [vmem:[%s0 + $0x288] sm:$0xff]
    %v121 = vld [vmem:[%s0 + $0x290] sm:$0xff]
    %v122 = vld [vmem:[%s0 + $0x298] sm:$0xff]
    %v123 = vld [vmem:[%s0 + $0x2a0] sm:$0xff]
    %v124 = vld [vmem:[%s0 + $0x2a8] sm:$0xff]
    %v125 = vld [vmem:[%s0 + $0x2b0] sm:$0xff]
    %v126 = vld [vmem:[%s0 + $0x2b8] sm:$0xff]
    %v127 = vld [vmem:[%s0 + $0x2c0] sm:$0xff]
    %v128 = vld [vmem:[%s0 + $0x2c8] sm:$0xff]
    %v129 = vld [vmem:[%s0 + $0x2d0] sm:$0xff]
    %v130 = vld [vmem:[%s0 + $0x2d8] sm:$0xff]
    %v131 = vld [vmem:[%s0 + $0x2e0] sm:$0xff]
    %v132 = vld [vmem:[%s0 + $0x2e8] sm:$0xff]
    %v133 = vld [vmem:[%s0 + $0x2f0] sm:$0xff]
    %v134 = vld [vmem:[%s0 + $0x2f8] sm:$0xff]
    %v135 = vld [vmem:[%s0 + $0x300] sm:$0xff]
    %v136 = vld [vmem:[%s0 + $0x308] sm:$0xff]
    %v137 = vld [vmem:[%s0 + $0x310] sm:$0xff]
    %v138 = vld [vmem:[%s0 + $0x318] sm:$0xff]
    %v139 = vld [vmem:[%s0 + $0x320] sm:$0xff]
    %v140 = vld [vmem:[%s0 + $0x328] sm:$0xff]
    %v141 = vld [vmem:[%s0 + $0x330] sm:$0xff]
    %v142 = vld [vmem:[%s0 + $0x338] sm:$0xff]
    %v143 = vld [vmem:[%s0 + $0x340] sm:$0xff]
    %v144 = vld [vmem:[%s0 + $0x348] sm:$0xff]
    %v145 = vld [vmem:[%s0 + $0x350] sm:$0xff]
    %v146 = vld [vmem:[%s0 + $0x358] sm:$0xff]
    %v147 = vld [vmem:[%s0 + $0x360] sm:$0xff]
    %v148 = vld [vmem:[%s0 + $0x368] sm:$0xff]
    %v149 = vld [vmem:[%s0 + $0x370] sm:$0xff]
    %v150 = vld [vmem:[%s0 + $0x378] sm:$0xff]
    %v151 = vld [vmem:[%s0 + $0x380] sm:$0xff]
    %v152 = vld [vmem:[%s0 + $0x388] sm:$0xff]
    %v153 = vld [vmem:[%s0 + $0x390] sm:$0xff]
    %v154 = vld [vmem:[%s0 + $0x398] sm:$0xff]
    %v155 = vld [vmem:[%s0 + $0x3a0] sm:$0xff]
    %v156 = vld [vmem:[%s0 + $0x3a8] sm:$0xff]
    %v157 = vld [vmem:[%s0 + $0x3b0] sm:$0xff]
    %v158 = vld [vmem:[%s0 + $0x3b8] sm:$0xff]
    %v159 = vld [vmem:[%s0 + $0x3c0] sm:$0xff]
    %v160 = vld [vmem:[%s0 + $0x3c8] sm:$0xff]
    %v161 = vld [vmem:[%s0 + $0x3d0] sm:$0xff]
    %v162 = vld [vmem:[%s0 + $0x3d8] sm:$0xff]
    %v163 = vld [vmem:[%s0 + $0x3e0] sm:$0xff]
    %v164 = vld [vmem:[%s0 + $0x3e8] sm:$0xff]
    %v165 = vld [vmem:[%s0 + $0x3f0] sm:$0xff]
    %v166 = vld [vmem:[%s0 + $0x3f8] sm:$0xff]
    %v167 = vld [vmem:[%s0 + $0x400] sm:$0xff]
    %v168 = vld [vmem:[%s0 + $0x408] sm:$0xff]
    %v169 = vld [vmem:[%s0 + $0x410] sm:$0xff]
    %v170 = vld [vmem:[%s0 + $0x418] sm:$0xff]
    %v171 = vld [vmem:[%s0 + $0x420] sm:$0xff]
    %v172 = vld [vmem:[%s0 + $0x428] sm:$0xff]
    %v173 = vld [vmem:[%s0 + $0x430] sm:$0xff]
    %v174 = vld [vmem:[%s0 + $0x438] sm:$0xff]
    %v175 = vld [vmem:[%s0 + $0x440] sm:$0xff]
    %v176 = vld [vmem:[%s0 + $0x448] sm:$0xff]
    %v177 = vld [vmem:[%s0 + $0x450] sm:$0xff]
    %v178 = vld [vmem:[%s0 + $0x458] sm:$0xff]
    %v179 = vld [vmem:[%s0 + $0x460] sm:$0xff]
    %v180 = vld [vmem:[%s0 + $0x468] sm:$0xff]
    %v181 = vld [vmem:[%s0 + $0x470] sm:$0xff]
    %v182 = vld [vmem:[%s0 + $0x478] sm:$0xff]
    %v183 = vld [vmem:[%s0 + $0x480] sm:$0xff]
    %v184 = vld [vmem:[%s0 + $0x488] sm:$0xff]
    %v185 = vld [vmem:[%s0 + $0x490] sm:$0xff]
    %v186 = vld [vmem:[%s0 + $0x498] sm:$0xff]
    %v187 = vld [vmem:[%s0 + $0x4a0] sm:$0xff]
    %v188 = vld [vmem:[%s0 + $0x4a8] sm:$0xff]
    %v189 = vld [vmem:[%s0 + $0x4b0] sm:$0xff]
    %v190 = vld [vmem:[%s0 + $0x4b8] sm:$0xff]
    %v191 = vld [vmem:[%s0 + $0x4c0] sm:$0xff]
    %v192 = vld [vmem:[%s0 + $0x4c8] sm:$0xff]
    %v193 = vld [vmem:[%s0 + $0x4d0] sm:$0xff]
    %v194 = vld [vmem:[%s0 + $0x4d8] sm:$0xff]
    %v195 = vld [vmem:[%s0 + $0x4e0] sm:$0xff]
    %v196 = vld [vmem:[%s0 + $0x4e8] sm:$0xff]
    %v197 = vld [vmem:[%s0 + $0x4f0] sm:$0xff]
    %v198 = vld [vmem:[%s0 + $0x4f8] sm:$0xff]
    %v199 = vld [vmem:[%s0 + $0x500] sm:$0xff]
    %v200 = vld [vmem:[%s0 + $0x508] sm:$0xff]
    %v201 = vld [vmem:[%s0 + $0x510] sm:$0xff]
    %v202 = vld [vmem:[%s0 + $0x518] sm:$0xff]
    %v203 = vld [vmem:[%s0 + $0x520] sm:$0xff]
    %v204 = vld [vmem:[%s0 + $0x528] sm:$0xff]
    %v205 = vld [vmem:[%s0 + $0x530] sm:$0xff]
    %v206 = vld [vmem:[%s0 + $0x538] sm:$0xff]
    %v207 = vld [vmem:[%s0 + $0x540] sm:$0xff]
    %v208 = vld [vmem:[%s0 + $0x548] sm:$0xff]
    %v209 = vld [vmem:[%s0 + $0x550] sm:$0xff]
    %v210 = vld [vmem:[%s0 + $0x558] sm:$0xff]
    %v211 = vld [vmem:[%s0 + $0x560] sm:$0xff]
    %v212 = vld [vmem:[%s0 + $0x568] sm:$0xff]
    %v213 = vld [vmem:[%s0 + $0x570] sm:$0xff]
    %v214 = vld [vmem:[%s0 + $0x578] sm:$0xff]
    %v215 = vld [vmem:[%s0 + $0x580] sm:$0xff]
    %v216 = vld [vmem:[%s0 + $0x588] sm:$0xff]
    %v217 = vld [vmem:[%s0 + $0x590] sm:$0xff]
    %v218 = vld [vmem:[%s0 + $0x598] sm:$0xff]
    %v219 = vld [vmem:[%s0 + $0x5a0] sm:$0xff]
    %v220 = vld [vmem:[%s0 + $0x5a8] sm:$0xff]
    %v221 = vld [vmem:[%s0 + $0x5b0] sm:$0xff]
    %v222 = vld [vmem:[%s0 + $0x5b8] sm:$0xff]
    %v223 = vld [vmem:[%s0 + $0x5c0] sm:$0xff]
    %v224 = vld [vmem:[%s0 + $0x5c8] sm:$0xff]
    %v225 = vld [vmem:[%s0 + $0x5d0] sm:$0xff]
    %v226 = vld [vmem:[%s0 + $0x5d8] sm:$0xff]
    %v227 = vld [vmem:[%s0 + $0x5e0] sm:$0xff]
    %v228 = vld [vmem:[%s0 + $0x5e8] sm:$0xff]
    %v229 = vld [vmem:[%s0 + $0x5f0] sm:$0xff]
    %v230 = vld [vmem:[%s0 + $0x5f8] sm:$0xff]
    %v231 = vld [vmem:[%s0 + $0x600] sm:$0xff]
    %v232 = vld [vmem:[%s0 + $0x608] sm:$0xff]
    %v233 = vld [vmem:[%s0 + $0x610] sm:$0xff]
    %v234 = vld [vmem:[%s0 + $0x618] sm:$0xff]
    %v235 = vld [vmem:[%s0 + $0x620] sm:$0xff]
    %v236 = vld [vmem:[%s0 + $0x628] sm:$0xff]
    %v237 = vld [vmem:[%s0 + $0x630] sm:$0xff]
    %v238 = vld [vmem:[%s0 + $0x638] sm:$0xff]
    %v239 = vld [vmem:[%s0 + $0x640] sm:$0xff]
    %v240 = vld [vmem:[%s0 + $0x648] sm:$0xff]
    %v241 = vld [vmem:[%s0 + $0x650] sm:$0xff]
    %v242 = vld [vmem:[%s0 + $0x658] sm:$0xff]
    %v243 = vld [vmem:[%s0 + $0x660] sm:$0xff]
    %v244 = vld [vmem:[%s0 + $0x668] sm:$0xff]
    %v245 = vld [vmem:[%s0 + $0x670] sm:$0xff]
    %v246 = vld [vmem:[%s0 + $0x678] sm:$0xff]
    %v247 = vld [vmem:[%s0 + $0x680] sm:$0xff]
    %v248 = vld [vmem:[%s0 + $0x688] sm:$0xff]
    %v249 = vld [vmem:[%s0 + $0x690] sm:$0xff]
    %v250 = vld [vmem:[%s0 + $0x698] sm:$0xff]
    %v251 = vld [vmem:[%s0 + $0x6a0] sm:$0xff]
    %v252 = vld [vmem:[%s0 + $0x6a8] sm:$0xff]
    %v253 = vld [vmem:[%s0 + $0x6b0] sm:$0xff]
    %v254 = vld [vmem:[%s0 + $0x6b8] sm:$0xff]
    %v255 = vld [vmem:[%s0 + $0x6c0] sm:$0xff]
    %v256 = vld [vmem:[%s0 + $0x6c8] sm:$0xff]
    %v257 = vld [vmem:[%s0 + $0x6d0] sm:$0xff]
    %v258 = vld [vmem:[%s0 + $0x6d8] sm:$0xff]
    %v259 = vld [vmem:[%s0 + $0x6e0] sm:$0xff]
    %v260 = vld [vmem:[%s0 + $0x6e8] sm:$0xff]
    %v261 = vld [vmem:[%s0 + $0x6f0] sm:$0xff]
    %v262 = vld [vmem:[%s0 + $0x6f8] sm:$0xff]
    %v263 = vld [vmem:[%s0 + $0x700] sm:$0xff]
    %v264 = vld [vmem:[%s0 + $0x708] sm:$0xff]
    %v265 = vld [vmem:[%s0 + $0x710] sm:$0xff]
    %v266 = vld [vmem:[%s0 + $0x718] sm:$0xff]
    %v267 = vld [vmem:[%s0 + $0x720] sm:$0xff]
    %v268 = vld [vmem:[%s0 + $0x728] sm:$0xff]
    %v269 = vld [vmem:[%s0 + $0x730] sm:$0xff]
    %v270 = vld [vmem:[%s0 + $0x738] sm:$0xff]
    %v271 = vld [vmem:[%s0 + $0x740] sm:$0xff]
    %v272 = vld [vmem:[%s0 + $0x748] sm:$0xff]
    %v273 = vld [vmem:[%s0 + $0x750] sm:$0xff]
    %v274 = vld [vmem:[%s0 + $0x758] sm:$0xff]
    %v275 = vld [vmem:[%s0 + $0x760] sm:$0xff]
    %v276 = vld [vmem:[%s0 + $0x768] sm:$0xff]
    %v277 = vld [vmem:[%s0 + $0x770] sm:$0xff]
    %v278 = vld [vmem:[%s0 + $0x778] sm:$0xff]
    %v279 = vld [vmem:[%s0 + $0x780] sm:$0xff]
    %v280 = vld [vmem:[%s0 + $0x788] sm:$0xff]
    %v281 = vld [vmem:[%s0 + $0x790] sm:$0xff]
    %v282 = vld [vmem:[%s0 + $0x798] sm:$0xff]
    %v283 = vld [vmem:[%s0 + $0x7a0] sm:$0xff]
    %v284 = vld [vmem:[%s0 + $0x7a8] sm:$0xff]
    %v285 = vld [vmem:[%s0 + $0x7b0] sm:$0xff]
    %v286 = vld [vmem:[%s0 + $0x7b8] sm:$0xff]
    %v287 = vld [vmem:[%s0 + $0x7c0] sm:$0xff]
    %v288 = vld [vmem:[%s0 + $0x7c8] sm:$0xff]
    %v289 = vld [vmem:[%s0 + $0x7d0] sm:$0xff]
    %v290 = vld [vmem:[%s0 + $0x7d8] sm:$0xff]
    %v291 = vld [vmem:[%s0 + $0x7e0] sm:$0xff]
    %v292 = vld [vmem:[%s0 + $0x7e8] sm:$0xff]
    %v293 = vld [vmem:[%s0 + $0x7f0] sm:$0xff]
    %v294 = vld [vmem:[%s0 + $0x7f8] sm:$0xff]
    %v295 = vunpack.c.l.bf16 %v39
    %v296 = vunpack.c.h.bf16 %v39
    %v297 = vunpack.c.l.bf16 %v40
    %v298 = vunpack.c.h.bf16 %v40
    %v299 = vunpack.c.l.bf16 %v41
    %v300 = vunpack.c.h.bf16 %v41
    %v301 = vunpack.c.l.bf16 %v42
    %v302 = vunpack.c.h.bf16 %v42
    %v303 = vunpack.c.l.bf16 %v43
    %v304 = vunpack.c.h.bf16 %v43
    %v305 = vunpack.c.l.bf16 %v44
    %v306 = vunpack.c.h.bf16 %v44
    %v307 = vunpack.c.l.bf16 %v45
    %v308 = vunpack.c.h.bf16 %v45
    %v309 = vunpack.c.l.bf16 %v46
    %v310 = vunpack.c.h.bf16 %v46
    %v311 = vunpack.c.l.bf16 %v47
    %v312 = vunpack.c.h.bf16 %v47
    %v313 = vunpack.c.l.bf16 %v48
    %v314 = vunpack.c.h.bf16 %v48
    %v315 = vunpack.c.l.bf16 %v49
    %v316 = vunpack.c.h.bf16 %v49
    %v317 = vunpack.c.l.bf16 %v50
    %v318 = vunpack.c.h.bf16 %v50
    %v319 = vunpack.c.l.bf16 %v51
    %v320 = vunpack.c.h.bf16 %v51
    %v321 = vunpack.c.l.bf16 %v52
    %v322 = vunpack.c.h.bf16 %v52
    %v323 = vunpack.c.l.bf16 %v53
    %v324 = vunpack.c.h.bf16 %v53
    %v325 = vunpack.c.l.bf16 %v54
    %v326 = vunpack.c.h.bf16 %v54
    %v327 = vunpack.c.l.bf16 %v55
    %v328 = vunpack.c.h.bf16 %v55
    %v329 = vunpack.c.l.bf16 %v56
    %v330 = vunpack.c.h.bf16 %v56
    %v331 = vunpack.c.l.bf16 %v57
    %v332 = vunpack.c.h.bf16 %v57
    %v333 = vunpack.c.l.bf16 %v58
    %v334 = vunpack.c.h.bf16 %v58
    %v335 = vunpack.c.l.bf16 %v59
    %v336 = vunpack.c.h.bf16 %v59
    %v337 = vunpack.c.l.bf16 %v60
    %v338 = vunpack.c.h.bf16 %v60
    %v339 = vunpack.c.l.bf16 %v61
    %v340 = vunpack.c.h.bf16 %v61
    %v341 = vunpack.c.l.bf16 %v62
    %v342 = vunpack.c.h.bf16 %v62
    %v343 = vunpack.c.l.bf16 %v63
    %v344 = vunpack.c.h.bf16 %v63
    %v345 = vunpack.c.l.bf16 %v64
    %v346 = vunpack.c.h.bf16 %v64
    %v347 = vunpack.c.l.bf16 %v65
    %v348 = vunpack.c.h.bf16 %v65
    %v349 = vunpack.c.l.bf16 %v66
    %v350 = vunpack.c.h.bf16 %v66
    %v351 = vunpack.c.l.bf16 %v67
    %v352 = vunpack.c.h.bf16 %v67
    %v353 = vunpack.c.l.bf16 %v68
    %v354 = vunpack.c.h.bf16 %v68
    %v355 = vunpack.c.l.bf16 %v69
    %v356 = vunpack.c.h.bf16 %v69
    %v357 = vunpack.c.l.bf16 %v70
    %v358 = vunpack.c.h.bf16 %v70
    %v359 = vunpack.c.l.bf16 %v71
    %v360 = vunpack.c.h.bf16 %v71
    %v361 = vunpack.c.l.bf16 %v72
    %v362 = vunpack.c.h.bf16 %v72
    %v363 = vunpack.c.l.bf16 %v73
    %v364 = vunpack.c.h.bf16 %v73
    %v365 = vunpack.c.l.bf16 %v74
    %v366 = vunpack.c.h.bf16 %v74
    %v367 = vunpack.c.l.bf16 %v75
    %v368 = vunpack.c.h.bf16 %v75
    %v369 = vunpack.c.l.bf16 %v76
    %v370 = vunpack.c.h.bf16 %v76
    %v371 = vunpack.c.l.bf16 %v77
    %v372 = vunpack.c.h.bf16 %v77
    %v373 = vunpack.c.l.bf16 %v78
    %v374 = vunpack.c.h.bf16 %v78
    %v375 = vunpack.c.l.bf16 %v79
    %v376 = vunpack.c.h.bf16 %v79
    %v377 = vunpack.c.l.bf16 %v80
    %v378 = vunpack.c.h.bf16 %v80
    %v379 = vunpack.c.l.bf16 %v81
    %v380 = vunpack.c.h.bf16 %v81
    %v381 = vunpack.c.l.bf16 %v82
    %v382 = vunpack.c.h.bf16 %v82
    %v383 = vunpack.c.l.bf16 %v83
    %v384 = vunpack.c.h.bf16 %v83
    %v385 = vunpack.c.l.bf16 %v84
    %v386 = vunpack.c.h.bf16 %v84
    %v387 = vunpack.c.l.bf16 %v85
    %v388 = vunpack.c.h.bf16 %v85
    %v389 = vunpack.c.l.bf16 %v86
    %v390 = vunpack.c.h.bf16 %v86
    %v391 = vunpack.c.l.bf16 %v87
    %v392 = vunpack.c.h.bf16 %v87
    %v393 = vunpack.c.l.bf16 %v88
    %v394 = vunpack.c.h.bf16 %v88
    %v395 = vunpack.c.l.bf16 %v89
    %v396 = vunpack.c.h.bf16 %v89
    %v397 = vunpack.c.l.bf16 %v90
    %v398 = vunpack.c.h.bf16 %v90
    %v399 = vunpack.c.l.bf16 %v91
    %v400 = vunpack.c.h.bf16 %v91
    %v401 = vunpack.c.l.bf16 %v92
    %v402 = vunpack.c.h.bf16 %v92
    %v403 = vunpack.c.l.bf16 %v93
    %v404 = vunpack.c.h.bf16 %v93
    %v405 = vunpack.c.l.bf16 %v94
    %v406 = vunpack.c.h.bf16 %v94
    %v407 = vunpack.c.l.bf16 %v95
    %v408 = vunpack.c.h.bf16 %v95
    %v409 = vunpack.c.l.bf16 %v96
    %v410 = vunpack.c.h.bf16 %v96
    %v411 = vunpack.c.l.bf16 %v97
    %v412 = vunpack.c.h.bf16 %v97
    %v413 = vunpack.c.l.bf16 %v98
    %v414 = vunpack.c.h.bf16 %v98
    %v415 = vunpack.c.l.bf16 %v99
    %v416 = vunpack.c.h.bf16 %v99
    %v417 = vunpack.c.l.bf16 %v100
    %v418 = vunpack.c.h.bf16 %v100
    %v419 = vunpack.c.l.bf16 %v101
    %v420 = vunpack.c.h.bf16 %v101
    %v421 = vunpack.c.l.bf16 %v102
    %v422 = vunpack.c.h.bf16 %v102
    %v423 = vunpack.c.l.bf16 %v103
    %v424 = vunpack.c.h.bf16 %v103
    %v425 = vunpack.c.l.bf16 %v104
    %v426 = vunpack.c.h.bf16 %v104
    %v427 = vunpack.c.l.bf16 %v105
    %v428 = vunpack.c.h.bf16 %v105
    %v429 = vunpack.c.l.bf16 %v106
    %v430 = vunpack.c.h.bf16 %v106
    %v431 = vunpack.c.l.bf16 %v107
    %v432 = vunpack.c.h.bf16 %v107
    %v433 = vunpack.c.l.bf16 %v108
    %v434 = vunpack.c.h.bf16 %v108
    %v435 = vunpack.c.l.bf16 %v109
    %v436 = vunpack.c.h.bf16 %v109
    %v437 = vunpack.c.l.bf16 %v110
    %v438 = vunpack.c.h.bf16 %v110
    %v439 = vunpack.c.l.bf16 %v111
    %v440 = vunpack.c.h.bf16 %v111
    %v441 = vunpack.c.l.bf16 %v112
    %v442 = vunpack.c.h.bf16 %v112
    %v443 = vunpack.c.l.bf16 %v113
    %v444 = vunpack.c.h.bf16 %v113
    %v445 = vunpack.c.l.bf16 %v114
    %v446 = vunpack.c.h.bf16 %v114
    %v447 = vunpack.c.l.bf16 %v115
    %v448 = vunpack.c.h.bf16 %v115
    %v449 = vunpack.c.l.bf16 %v116
    %v450 = vunpack.c.h.bf16 %v116
    %v451 = vunpack.c.l.bf16 %v117
    %v452 = vunpack.c.h.bf16 %v117
    %v453 = vunpack.c.l.bf16 %v118
    %v454 = vunpack.c.h.bf16 %v118
    %v455 = vunpack.c.l.bf16 %v119
    %v456 = vunpack.c.h.bf16 %v119
    %v457 = vunpack.c.l.bf16 %v120
    %v458 = vunpack.c.h.bf16 %v120
    %v459 = vunpack.c.l.bf16 %v121
    %v460 = vunpack.c.h.bf16 %v121
    %v461 = vunpack.c.l.bf16 %v122
    %v462 = vunpack.c.h.bf16 %v122
    %v463 = vunpack.c.l.bf16 %v123
    %v464 = vunpack.c.h.bf16 %v123
    %v465 = vunpack.c.l.bf16 %v124
    %v466 = vunpack.c.h.bf16 %v124
    %v467 = vunpack.c.l.bf16 %v125
    %v468 = vunpack.c.h.bf16 %v125
    %v469 = vunpack.c.l.bf16 %v126
    %v470 = vunpack.c.h.bf16 %v126
    %v471 = vunpack.c.l.bf16 %v127
    %v472 = vunpack.c.h.bf16 %v127
    %v473 = vunpack.c.l.bf16 %v128
    %v474 = vunpack.c.h.bf16 %v128
    %v475 = vunpack.c.l.bf16 %v129
    %v476 = vunpack.c.h.bf16 %v129
    %v477 = vunpack.c.l.bf16 %v130
    %v478 = vunpack.c.h.bf16 %v130
    %v479 = vunpack.c.l.bf16 %v131
    %v480 = vunpack.c.h.bf16 %v131
    %v481 = vunpack.c.l.bf16 %v132
    %v482 = vunpack.c.h.bf16 %v132
    %v483 = vunpack.c.l.bf16 %v133
    %v484 = vunpack.c.h.bf16 %v133
    %v485 = vunpack.c.l.bf16 %v134
    %v486 = vunpack.c.h.bf16 %v134
    %v487 = vunpack.c.l.bf16 %v135
    %v488 = vunpack.c.h.bf16 %v135
    %v489 = vunpack.c.l.bf16 %v136
    %v490 = vunpack.c.h.bf16 %v136
    %v491 = vunpack.c.l.bf16 %v137
    %v492 = vunpack.c.h.bf16 %v137
    %v493 = vunpack.c.l.bf16 %v138
    %v494 = vunpack.c.h.bf16 %v138
    %v495 = vunpack.c.l.bf16 %v139
    %v496 = vunpack.c.h.bf16 %v139
    %v497 = vunpack.c.l.bf16 %v140
    %v498 = vunpack.c.h.bf16 %v140
    %v499 = vunpack.c.l.bf16 %v141
    %v500 = vunpack.c.h.bf16 %v141
    %v501 = vunpack.c.l.bf16 %v142
    %v502 = vunpack.c.h.bf16 %v142
    %v503 = vunpack.c.l.bf16 %v143
    %v504 = vunpack.c.h.bf16 %v143
    %v505 = vunpack.c.l.bf16 %v144
    %v506 = vunpack.c.h.bf16 %v144
    %v507 = vunpack.c.l.bf16 %v145
    %v508 = vunpack.c.h.bf16 %v145
    %v509 = vunpack.c.l.bf16 %v146
    %v510 = vunpack.c.h.bf16 %v146
    %v511 = vunpack.c.l.bf16 %v147
    %v512 = vunpack.c.h.bf16 %v147
    %v513 = vunpack.c.l.bf16 %v148
    %v514 = vunpack.c.h.bf16 %v148
    %v515 = vunpack.c.l.bf16 %v149
    %v516 = vunpack.c.h.bf16 %v149
    %v517 = vunpack.c.l.bf16 %v150
    %v518 = vunpack.c.h.bf16 %v150
    %v519 = vunpack.c.l.bf16 %v151
    %v520 = vunpack.c.h.bf16 %v151
    %v521 = vunpack.c.l.bf16 %v152
    %v522 = vunpack.c.h.bf16 %v152
    %v523 = vunpack.c.l.bf16 %v153
    %v524 = vunpack.c.h.bf16 %v153
    %v525 = vunpack.c.l.bf16 %v154
    %v526 = vunpack.c.h.bf16 %v154
    %v527 = vunpack.c.l.bf16 %v155
    %v528 = vunpack.c.h.bf16 %v155
    %v529 = vunpack.c.l.bf16 %v156
    %v530 = vunpack.c.h.bf16 %v156
    %v531 = vunpack.c.l.bf16 %v157
    %v532 = vunpack.c.h.bf16 %v157
    %v533 = vunpack.c.l.bf16 %v158
    %v534 = vunpack.c.h.bf16 %v158
    %v535 = vunpack.c.l.bf16 %v159
    %v536 = vunpack.c.h.bf16 %v159
    %v537 = vunpack.c.l.bf16 %v160
    %v538 = vunpack.c.h.bf16 %v160
    %v539 = vunpack.c.l.bf16 %v161
    %v540 = vunpack.c.h.bf16 %v161
    %v541 = vunpack.c.l.bf16 %v162
    %v542 = vunpack.c.h.bf16 %v162
    %v543 = vunpack.c.l.bf16 %v163
    %v544 = vunpack.c.h.bf16 %v163
    %v545 = vunpack.c.l.bf16 %v164
    %v546 = vunpack.c.h.bf16 %v164
    %v547 = vunpack.c.l.bf16 %v165
    %v548 = vunpack.c.h.bf16 %v165
    %v549 = vunpack.c.l.bf16 %v166
    %v550 = vunpack.c.h.bf16 %v166
    %v551 = vunpack.c.l.bf16 %v167
    %v552 = vunpack.c.h.bf16 %v167
    %v553 = vunpack.c.l.bf16 %v168
    %v554 = vunpack.c.h.bf16 %v168
    %v555 = vunpack.c.l.bf16 %v169
    %v556 = vunpack.c.h.bf16 %v169
    %v557 = vunpack.c.l.bf16 %v170
    %v558 = vunpack.c.h.bf16 %v170
    %v559 = vunpack.c.l.bf16 %v171
    %v560 = vunpack.c.h.bf16 %v171
    %v561 = vunpack.c.l.bf16 %v172
    %v562 = vunpack.c.h.bf16 %v172
    %v563 = vunpack.c.l.bf16 %v173
    %v564 = vunpack.c.h.bf16 %v173
    %v565 = vunpack.c.l.bf16 %v174
    %v566 = vunpack.c.h.bf16 %v174
    %v567 = vunpack.c.l.bf16 %v175
    %v568 = vunpack.c.h.bf16 %v175
    %v569 = vunpack.c.l.bf16 %v176
    %v570 = vunpack.c.h.bf16 %v176
    %v571 = vunpack.c.l.bf16 %v177
    %v572 = vunpack.c.h.bf16 %v177
    %v573 = vunpack.c.l.bf16 %v178
    %v574 = vunpack.c.h.bf16 %v178
    %v575 = vunpack.c.l.bf16 %v179
    %v576 = vunpack.c.h.bf16 %v179
    %v577 = vunpack.c.l.bf16 %v180
    %v578 = vunpack.c.h.bf16 %v180
    %v579 = vunpack.c.l.bf16 %v181
    %v580 = vunpack.c.h.bf16 %v181
    %v581 = vunpack.c.l.bf16 %v182
    %v582 = vunpack.c.h.bf16 %v182
    %v583 = vunpack.c.l.bf16 %v183
    %v584 = vunpack.c.h.bf16 %v183
    %v585 = vunpack.c.l.bf16 %v184
    %v586 = vunpack.c.h.bf16 %v184
    %v587 = vunpack.c.l.bf16 %v185
    %v588 = vunpack.c.h.bf16 %v185
    %v589 = vunpack.c.l.bf16 %v186
    %v590 = vunpack.c.h.bf16 %v186
    %v591 = vunpack.c.l.bf16 %v187
    %v592 = vunpack.c.h.bf16 %v187
    %v593 = vunpack.c.l.bf16 %v188
    %v594 = vunpack.c.h.bf16 %v188
    %v595 = vunpack.c.l.bf16 %v189
    %v596 = vunpack.c.h.bf16 %v189
    %v597 = vunpack.c.l.bf16 %v190
    %v598 = vunpack.c.h.bf16 %v190
    %v599 = vunpack.c.l.bf16 %v191
    %v600 = vunpack.c.h.bf16 %v191
    %v601 = vunpack.c.l.bf16 %v192
    %v602 = vunpack.c.h.bf16 %v192
    %v603 = vunpack.c.l.bf16 %v193
    %v604 = vunpack.c.h.bf16 %v193
    %v605 = vunpack.c.l.bf16 %v194
    %v606 = vunpack.c.h.bf16 %v194
    %v607 = vunpack.c.l.bf16 %v195
    %v608 = vunpack.c.h.bf16 %v195
    %v609 = vunpack.c.l.bf16 %v196
    %v610 = vunpack.c.h.bf16 %v196
    %v611 = vunpack.c.l.bf16 %v197
    %v612 = vunpack.c.h.bf16 %v197
    %v613 = vunpack.c.l.bf16 %v198
    %v614 = vunpack.c.h.bf16 %v198
    %v615 = vunpack.c.l.bf16 %v199
    %v616 = vunpack.c.h.bf16 %v199
    %v617 = vunpack.c.l.bf16 %v200
    %v618 = vunpack.c.h.bf16 %v200
    %v619 = vunpack.c.l.bf16 %v201
    %v620 = vunpack.c.h.bf16 %v201
    %v621 = vunpack.c.l.bf16 %v202
    %v622 = vunpack.c.h.bf16 %v202
    %v623 = vunpack.c.l.bf16 %v203
    %v624 = vunpack.c.h.bf16 %v203
    %v625 = vunpack.c.l.bf16 %v204
    %v626 = vunpack.c.h.bf16 %v204
    %v627 = vunpack.c.l.bf16 %v205
    %v628 = vunpack.c.h.bf16 %v205
    %v629 = vunpack.c.l.bf16 %v206
    %v630 = vunpack.c.h.bf16 %v206
    %v631 = vunpack.c.l.bf16 %v207
    %v632 = vunpack.c.h.bf16 %v207
    %v633 = vunpack.c.l.bf16 %v208
    %v634 = vunpack.c.h.bf16 %v208
    %v635 = vunpack.c.l.bf16 %v209
    %v636 = vunpack.c.h.bf16 %v209
    %v637 = vunpack.c.l.bf16 %v210
    %v638 = vunpack.c.h.bf16 %v210
    %v639 = vunpack.c.l.bf16 %v211
    %v640 = vunpack.c.h.bf16 %v211
    %v641 = vunpack.c.l.bf16 %v212
    %v642 = vunpack.c.h.bf16 %v212
    %v643 = vunpack.c.l.bf16 %v213
    %v644 = vunpack.c.h.bf16 %v213
    %v645 = vunpack.c.l.bf16 %v214
    %v646 = vunpack.c.h.bf16 %v214
    %v647 = vunpack.c.l.bf16 %v215
    %v648 = vunpack.c.h.bf16 %v215
    %v649 = vunpack.c.l.bf16 %v216
    %v650 = vunpack.c.h.bf16 %v216
    %v651 = vunpack.c.l.bf16 %v217
    %v652 = vunpack.c.h.bf16 %v217
    %v653 = vunpack.c.l.bf16 %v218
    %v654 = vunpack.c.h.bf16 %v218
    %v655 = vunpack.c.l.bf16 %v219
    %v656 = vunpack.c.h.bf16 %v219
    %v657 = vunpack.c.l.bf16 %v220
    %v658 = vunpack.c.h.bf16 %v220
    %v659 = vunpack.c.l.bf16 %v221
    %v660 = vunpack.c.h.bf16 %v221
    %v661 = vunpack.c.l.bf16 %v222
    %v662 = vunpack.c.h.bf16 %v222
    %v663 = vunpack.c.l.bf16 %v223
    %v664 = vunpack.c.h.bf16 %v223
    %v665 = vunpack.c.l.bf16 %v224
    %v666 = vunpack.c.h.bf16 %v224
    %v667 = vunpack.c.l.bf16 %v225
    %v668 = vunpack.c.h.bf16 %v225
    %v669 = vunpack.c.l.bf16 %v226
    %v670 = vunpack.c.h.bf16 %v226
    %v671 = vunpack.c.l.bf16 %v227
    %v672 = vunpack.c.h.bf16 %v227
    %v673 = vunpack.c.l.bf16 %v228
    %v674 = vunpack.c.h.bf16 %v228
    %v675 = vunpack.c.l.bf16 %v229
    %v676 = vunpack.c.h.bf16 %v229
    %v677 = vunpack.c.l.bf16 %v230
    %v678 = vunpack.c.h.bf16 %v230
    %v679 = vunpack.c.l.bf16 %v231
    %v680 = vunpack.c.h.bf16 %v231
    %v681 = vunpack.c.l.bf16 %v232
    %v682 = vunpack.c.h.bf16 %v232
    %v683 = vunpack.c.l.bf16 %v233
    %v684 = vunpack.c.h.bf16 %v233
    %v685 = vunpack.c.l.bf16 %v234
    %v686 = vunpack.c.h.bf16 %v234
    %v687 = vunpack.c.l.bf16 %v235
    %v688 = vunpack.c.h.bf16 %v235
    %v689 = vunpack.c.l.bf16 %v236
    %v690 = vunpack.c.h.bf16 %v236
    %v691 = vunpack.c.l.bf16 %v237
    %v692 = vunpack.c.h.bf16 %v237
    %v693 = vunpack.c.l.bf16 %v238
    %v694 = vunpack.c.h.bf16 %v238
    %v695 = vunpack.c.l.bf16 %v239
    %v696 = vunpack.c.h.bf16 %v239
    %v697 = vunpack.c.l.bf16 %v240
    %v698 = vunpack.c.h.bf16 %v240
    %v699 = vunpack.c.l.bf16 %v241
    %v700 = vunpack.c.h.bf16 %v241
    %v701 = vunpack.c.l.bf16 %v242
    %v702 = vunpack.c.h.bf16 %v242
    %v703 = vunpack.c.l.bf16 %v243
    %v704 = vunpack.c.h.bf16 %v243
    %v705 = vunpack.c.l.bf16 %v244
    %v706 = vunpack.c.h.bf16 %v244
    %v707 = vunpack.c.l.bf16 %v245
    %v708 = vunpack.c.h.bf16 %v245
    %v709 = vunpack.c.l.bf16 %v246
    %v710 = vunpack.c.h.bf16 %v246
    %v711 = vunpack.c.l.bf16 %v247
    %v712 = vunpack.c.h.bf16 %v247
    %v713 = vunpack.c.l.bf16 %v248
    %v714 = vunpack.c.h.bf16 %v248
    %v715 = vunpack.c.l.bf16 %v249
    %v716 = vunpack.c.h.bf16 %v249
    %v717 = vunpack.c.l.bf16 %v250
    %v718 = vunpack.c.h.bf16 %v250
    %v719 = vunpack.c.l.bf16 %v251
    %v720 = vunpack.c.h.bf16 %v251
    %v721 = vunpack.c.l.bf16 %v252
    %v722 = vunpack.c.h.bf16 %v252
    %v723 = vunpack.c.l.bf16 %v253
    %v724 = vunpack.c.h.bf16 %v253
    %v725 = vunpack.c.l.bf16 %v254
    %v726 = vunpack.c.h.bf16 %v254
    %v727 = vunpack.c.l.bf16 %v255
    %v728 = vunpack.c.h.bf16 %v255
    %v729 = vunpack.c.l.bf16 %v256
    %v730 = vunpack.c.h.bf16 %v256
    %v731 = vunpack.c.l.bf16 %v257
    %v732 = vunpack.c.h.bf16 %v257
    %v733 = vunpack.c.l.bf16 %v258
    %v734 = vunpack.c.h.bf16 %v258
    %v735 = vunpack.c.l.bf16 %v259
    %v736 = vunpack.c.h.bf16 %v259
    %v737 = vunpack.c.l.bf16 %v260
    %v738 = vunpack.c.h.bf16 %v260
    %v739 = vunpack.c.l.bf16 %v261
    %v740 = vunpack.c.h.bf16 %v261
    %v741 = vunpack.c.l.bf16 %v262
    %v742 = vunpack.c.h.bf16 %v262
    %v743 = vunpack.c.l.bf16 %v263
    %v744 = vunpack.c.h.bf16 %v263
    %v745 = vunpack.c.l.bf16 %v264
    %v746 = vunpack.c.h.bf16 %v264
    %v747 = vunpack.c.l.bf16 %v265
    %v748 = vunpack.c.h.bf16 %v265
    %v749 = vunpack.c.l.bf16 %v266
    %v750 = vunpack.c.h.bf16 %v266
    %v751 = vunpack.c.l.bf16 %v267
    %v752 = vunpack.c.h.bf16 %v267
    %v753 = vunpack.c.l.bf16 %v268
    %v754 = vunpack.c.h.bf16 %v268
    %v755 = vunpack.c.l.bf16 %v269
    %v756 = vunpack.c.h.bf16 %v269
    %v757 = vunpack.c.l.bf16 %v270
    %v758 = vunpack.c.h.bf16 %v270
    %v759 = vunpack.c.l.bf16 %v271
    %v760 = vunpack.c.h.bf16 %v271
    %v761 = vunpack.c.l.bf16 %v272
    %v762 = vunpack.c.h.bf16 %v272
    %v763 = vunpack.c.l.bf16 %v273
    %v764 = vunpack.c.h.bf16 %v273
    %v765 = vunpack.c.l.bf16 %v274
    %v766 = vunpack.c.h.bf16 %v274
    %v767 = vunpack.c.l.bf16 %v275
    %v768 = vunpack.c.h.bf16 %v275
    %v769 = vunpack.c.l.bf16 %v276
    %v770 = vunpack.c.h.bf16 %v276
    %v771 = vunpack.c.l.bf16 %v277
    %v772 = vunpack.c.h.bf16 %v277
    %v773 = vunpack.c.l.bf16 %v278
    %v774 = vunpack.c.h.bf16 %v278
    %v775 = vunpack.c.l.bf16 %v279
    %v776 = vunpack.c.h.bf16 %v279
    %v777 = vunpack.c.l.bf16 %v280
    %v778 = vunpack.c.h.bf16 %v280
    %v779 = vunpack.c.l.bf16 %v281
    %v780 = vunpack.c.h.bf16 %v281
    %v781 = vunpack.c.l.bf16 %v282
    %v782 = vunpack.c.h.bf16 %v282
    %v783 = vunpack.c.l.bf16 %v283
    %v784 = vunpack.c.h.bf16 %v283
    %v785 = vunpack.c.l.bf16 %v284
    %v786 = vunpack.c.h.bf16 %v284
    %v787 = vunpack.c.l.bf16 %v285
    %v788 = vunpack.c.h.bf16 %v285
    %v789 = vunpack.c.l.bf16 %v286
    %v790 = vunpack.c.h.bf16 %v286
    %v791 = vunpack.c.l.bf16 %v287
    %v792 = vunpack.c.h.bf16 %v287
    %v793 = vunpack.c.l.bf16 %v288
    %v794 = vunpack.c.h.bf16 %v288
    %v795 = vunpack.c.l.bf16 %v289
    %v796 = vunpack.c.h.bf16 %v289
    %v797 = vunpack.c.l.bf16 %v290
    %v798 = vunpack.c.h.bf16 %v290
    %v799 = vunpack.c.l.bf16 %v291
    %v800 = vunpack.c.h.bf16 %v291
    %v801 = vunpack.c.l.bf16 %v292
    %v802 = vunpack.c.h.bf16 %v292
    %v803 = vunpack.c.l.bf16 %v293
    %v804 = vunpack.c.h.bf16 %v293
    %v805 = vunpack.c.l.bf16 %v294
    %v806 = vunpack.c.h.bf16 %v294
    %v807 = vld [vmem:[%s1] sm:$0xff]
    %v808 = vld [vmem:[%s1 + $0x8] sm:$0xff]
    %v809 = vld [vmem:[%s1 + $0x10] sm:$0xff]
    %v810 = vld [vmem:[%s1 + $0x18] sm:$0xff]
    %v811 = vld [vmem:[%s1 + $0x20] sm:$0xff]
    %v812 = vld [vmem:[%s1 + $0x28] sm:$0xff]
    %v813 = vld [vmem:[%s1 + $0x30] sm:$0xff]
    %v814 = vld [vmem:[%s1 + $0x38] sm:$0xff]
    %v815 = vld [vmem:[%s1 + $0x40] sm:$0xff]
    %v816 = vld [vmem:[%s1 + $0x48] sm:$0xff]
    %v817 = vld [vmem:[%s1 + $0x50] sm:$0xff]
    %v818 = vld [vmem:[%s1 + $0x58] sm:$0xff]
    %v819 = vld [vmem:[%s1 + $0x60] sm:$0xff]
    %v820 = vld [vmem:[%s1 + $0x68] sm:$0xff]
    %v821 = vld [vmem:[%s1 + $0x70] sm:$0xff]
    %v822 = vld [vmem:[%s1 + $0x78] sm:$0xff]
    %v823 = vld [vmem:[%s1 + $0x80] sm:$0xff]
    %v824 = vld [vmem:[%s1 + $0x88] sm:$0xff]
    %v825 = vld [vmem:[%s1 + $0x90] sm:$0xff]
    %v826 = vld [vmem:[%s1 + $0x98] sm:$0xff]
    %v827 = vld [vmem:[%s1 + $0xa0] sm:$0xff]
    %v828 = vld [vmem:[%s1 + $0xa8] sm:$0xff]
    %v829 = vld [vmem:[%s1 + $0xb0] sm:$0xff]
    %v830 = vld [vmem:[%s1 + $0xb8] sm:$0xff]
    %v831 = vld [vmem:[%s1 + $0xc0] sm:$0xff]
    %v832 = vld [vmem:[%s1 + $0xc8] sm:$0xff]
    %v833 = vld [vmem:[%s1 + $0xd0] sm:$0xff]
    %v834 = vld [vmem:[%s1 + $0xd8] sm:$0xff]
    %v835 = vld [vmem:[%s1 + $0xe0] sm:$0xff]
    %v836 = vld [vmem:[%s1 + $0xe8] sm:$0xff]
    %v837 = vld [vmem:[%s1 + $0xf0] sm:$0xff]
    %v838 = vld [vmem:[%s1 + $0xf8] sm:$0xff]
    %839 = vmatprep.subr.mxu0 0.0
    %840 = vmatpush1.msra.mxu0 %v822
    %841 = vmatprep.subr.mxu0 0.0
    %842 = vmatpush1.msra.mxu0 %v821
    %843 = vmatprep.subr.mxu0 0.0
    %844 = vmatpush1.msra.mxu0 %v820
    %845 = vmatprep.subr.mxu0 0.0
    %846 = vmatpush1.msra.mxu0 %v819
    %847 = vmatprep.subr.mxu0 0.0
    %848 = vmatpush1.msra.mxu0 %v818
    %849 = vmatprep.subr.mxu0 0.0
    %850 = vmatpush1.msra.mxu0 %v817
    %851 = vmatprep.subr.mxu0 0.0
    %852 = vmatpush1.msra.mxu0 %v816
    %853 = vmatprep.subr.mxu0 0.0
    %854 = vmatpush1.msra.mxu0 %v815
    %855 = vmatprep.subr.mxu0 0.0
    %856 = vmatpush1.msra.mxu0 %v814
    %857 = vmatprep.subr.mxu0 0.0
    %858 = vmatpush1.msra.mxu0 %v813
    %859 = vmatprep.subr.mxu0 0.0
    %860 = vmatpush1.msra.mxu0 %v812
    %861 = vmatprep.subr.mxu0 0.0
    %862 = vmatpush1.msra.mxu0 %v811
    %863 = vmatprep.subr.mxu0 0.0
    %864 = vmatpush1.msra.mxu0 %v810
    %865 = vmatprep.subr.mxu0 0.0
    %866 = vmatpush1.msra.mxu0 %v809
    %867 = vmatprep.subr.mxu0 0.0
    %868 = vmatpush1.msra.mxu0 %v808
    %869 = vmatprep.subr.mxu0 0.0
    %870 = vmatpush1.msra.mxu0 %v807
    %871 = vmatprep.subr.mxu0 0.0
    %872 = vmatpush2.msra.mxu0 %v838
    %873 = vmatprep.subr.mxu0 0.0
    %874 = vmatpush2.msra.mxu0 %v837
    %875 = vmatprep.subr.mxu0 0.0
    %876 = vmatpush2.msra.mxu0 %v836
    %877 = vmatprep.subr.mxu0 0.0
    %878 = vmatpush2.msra.mxu0 %v835
    %879 = vmatprep.subr.mxu0 0.0
    %880 = vmatpush2.msra.mxu0 %v834
    %881 = vmatprep.subr.mxu0 0.0
    %882 = vmatpush2.msra.mxu0 %v833
    %883 = vmatprep.subr.mxu0 0.0
    %884 = vmatpush2.msra.mxu0 %v832
    %885 = vmatprep.subr.mxu0 0.0
    %886 = vmatpush2.msra.mxu0 %v831
    %887 = vmatprep.subr.mxu0 0.0
    %888 = vmatpush2.msra.mxu0 %v830
    %889 = vmatprep.subr.mxu0 0.0
    %890 = vmatpush2.msra.mxu0 %v829
    %891 = vmatprep.subr.mxu0 0.0
    %892 = vmatpush2.msra.mxu0 %v828
    %893 = vmatprep.subr.mxu0 0.0
    %894 = vmatpush2.msra.mxu0 %v827
    %895 = vmatprep.subr.mxu0 0.0
    %896 = vmatpush2.msra.mxu0 %v826
    %897 = vmatprep.subr.mxu0 0.0
    %898 = vmatpush2.msra.mxu0 %v825
    %899 = vmatprep.subr.mxu0 0.0
    %900 = vmatpush2.msra.mxu0 %v824
    %901 = vmatprep.subr.mxu0 0.0
    %902 = vmatpush2.msra.mxu0 %v823
    %903 = vmatprep.mubr.f32.mxu0 %v296
    %904 = vmatmul.mubr.f32.gmra.mxu0 %v295
    %v905 = vpop.f32.mrf.mxu0
    %v906 = vadd.f32 0.0, %v905
    %v907 = vpop.f32.mrf.mxu0
    %908 = vmatprep.mubr.f32.mxu0 %v298
    %909 = vmatmul.mubr.f32.gmra.mxu0 %v297
    %v910 = vpop.f32.mrf.mxu0
    %v911 = vadd.f32 0.0, %v910
    %v912 = vpop.f32.mrf.mxu0
    %913 = vmatprep.mubr.f32.mxu0 %v300
    %914 = vmatmul.mubr.f32.gmra.mxu0 %v299
    %v915 = vpop.f32.mrf.mxu0
    %v916 = vadd.f32 0.0, %v915
    %v917 = vpop.f32.mrf.mxu0
    %918 = vmatprep.mubr.f32.mxu0 %v302
    %919 = vmatmul.mubr.f32.gmra.mxu0 %v301
    %v920 = vpop.f32.mrf.mxu0
    %v921 = vadd.f32 0.0, %v920
    %v922 = vpop.f32.mrf.mxu0
    %923 = vmatprep.mubr.f32.mxu0 %v304
    %924 = vmatmul.mubr.f32.gmra.mxu0 %v303
    %v925 = vpop.f32.mrf.mxu0
    %v926 = vadd.f32 0.0, %v925
    %v927 = vpop.f32.mrf.mxu0
    %928 = vmatprep.mubr.f32.mxu0 %v306
    %929 = vmatmul.mubr.f32.gmra.mxu0 %v305
    %v930 = vpop.f32.mrf.mxu0
    %v931 = vadd.f32 0.0, %v930
    %v932 = vpop.f32.mrf.mxu0
    %933 = vmatprep.mubr.f32.mxu0 %v308
    %934 = vmatmul.mubr.f32.gmra.mxu0 %v307
    %v935 = vpop.f32.mrf.mxu0
    %v936 = vadd.f32 0.0, %v935
    %v937 = vpop.f32.mrf.mxu0
    %938 = vmatprep.mubr.f32.mxu0 %v310
    %939 = vmatmul.mubr.f32.gmra.mxu0 %v309
    %v940 = vpop.f32.mrf.mxu0
    %v941 = vadd.f32 0.0, %v940
    %v942 = vpop.f32.mrf.mxu0
    %943 = vmatprep.mubr.f32.mxu0 %v312
    %944 = vmatmul.mubr.f32.gmra.mxu0 %v311
    %v945 = vpop.f32.mrf.mxu0
    %v946 = vadd.f32 0.0, %v945
    %v947 = vpop.f32.mrf.mxu0
    %948 = vmatprep.mubr.f32.mxu0 %v314
    %949 = vmatmul.mubr.f32.gmra.mxu0 %v313
    %v950 = vpop.f32.mrf.mxu0
    %v951 = vadd.f32 0.0, %v950
    %v952 = vpop.f32.mrf.mxu0
    %953 = vmatprep.mubr.f32.mxu0 %v316
    %954 = vmatmul.mubr.f32.gmra.mxu0 %v315
    %v955 = vpop.f32.mrf.mxu0
    %v956 = vadd.f32 0.0, %v955
    %v957 = vpop.f32.mrf.mxu0
    %958 = vmatprep.mubr.f32.mxu0 %v318
    %959 = vmatmul.mubr.f32.gmra.mxu0 %v317
    %v960 = vpop.f32.mrf.mxu0
    %v961 = vadd.f32 0.0, %v960
    %v962 = vpop.f32.mrf.mxu0
    %963 = vmatprep.mubr.f32.mxu0 %v320
    %964 = vmatmul.mubr.f32.gmra.mxu0 %v319
    %v965 = vpop.f32.mrf.mxu0
    %v966 = vadd.f32 0.0, %v965
    %v967 = vpop.f32.mrf.mxu0
    %968 = vmatprep.mubr.f32.mxu0 %v322
    %969 = vmatmul.mubr.f32.gmra.mxu0 %v321
    %v970 = vpop.f32.mrf.mxu0
    %v971 = vadd.f32 0.0, %v970
    %v972 = vpop.f32.mrf.mxu0
    %973 = vmatprep.mubr.f32.mxu0 %v324
    %974 = vmatmul.mubr.f32.gmra.mxu0 %v323
    %v975 = vpop.f32.mrf.mxu0
    %v976 = vadd.f32 0.0, %v975
    %v977 = vpop.f32.mrf.mxu0
    %978 = vmatprep.mubr.f32.mxu0 %v326
    %979 = vmatmul.mubr.f32.gmra.mxu0 %v325
    %v980 = vpop.f32.mrf.mxu0
    %v981 = vadd.f32 0.0, %v980
    %v982 = vpop.f32.mrf.mxu0
    %983 = vmatprep.mubr.f32.mxu0 %v328
    %984 = vmatmul.mubr.f32.gmra.mxu0 %v327
    %v985 = vpop.f32.mrf.mxu0
    %v986 = vadd.f32 0.0, %v985
    %v987 = vpop.f32.mrf.mxu0
    %988 = vmatprep.mubr.f32.mxu0 %v330
    %989 = vmatmul.mubr.f32.gmra.mxu0 %v329
    %v990 = vpop.f32.mrf.mxu0
    %v991 = vadd.f32 0.0, %v990
    %v992 = vpop.f32.mrf.mxu0
    %993 = vmatprep.mubr.f32.mxu0 %v332
    %994 = vmatmul.mubr.f32.gmra.mxu0 %v331
    %v995 = vpop.f32.mrf.mxu0
    %v996 = vadd.f32 0.0, %v995
    %v997 = vpop.f32.mrf.mxu0
    %998 = vmatprep.mubr.f32.mxu0 %v334
    %999 = vmatmul.mubr.f32.gmra.mxu0 %v333
    %v1000 = vpop.f32.mrf.mxu0
    %v1001 = vadd.f32 0.0, %v1000
    %v1002 = vpop.f32.mrf.mxu0
    %1003 = vmatprep.mubr.f32.mxu0 %v336
    %1004 = vmatmul.mubr.f32.gmra.mxu0 %v335
    %v1005 = vpop.f32.mrf.mxu0
    %v1006 = vadd.f32 0.0, %v1005
    %v1007 = vpop.f32.mrf.mxu0
    %1008 = vmatprep.mubr.f32.mxu0 %v338
    %1009 = vmatmul.mubr.f32.gmra.mxu0 %v337
    %v1010 = vpop.f32.mrf.mxu0
    %v1011 = vadd.f32 0.0, %v1010
    %v1012 = vpop.f32.mrf.mxu0
    %1013 = vmatprep.mubr.f32.mxu0 %v340
    %1014 = vmatmul.mubr.f32.gmra.mxu0 %v339
    %v1015 = vpop.f32.mrf.mxu0
    %v1016 = vadd.f32 0.0, %v1015
    %v1017 = vpop.f32.mrf.mxu0
    %1018 = vmatprep.mubr.f32.mxu0 %v342
    %1019 = vmatmul.mubr.f32.gmra.mxu0 %v341
    %v1020 = vpop.f32.mrf.mxu0
    %v1021 = vadd.f32 0.0, %v1020
    %v1022 = vpop.f32.mrf.mxu0
    %1023 = vmatprep.mubr.f32.mxu0 %v344
    %1024 = vmatmul.mubr.f32.gmra.mxu0 %v343
    %v1025 = vpop.f32.mrf.mxu0
    %v1026 = vadd.f32 0.0, %v1025
    %v1027 = vpop.f32.mrf.mxu0
    %1028 = vmatprep.mubr.f32.mxu0 %v346
    %1029 = vmatmul.mubr.f32.gmra.mxu0 %v345
    %v1030 = vpop.f32.mrf.mxu0
    %v1031 = vadd.f32 0.0, %v1030
    %v1032 = vpop.f32.mrf.mxu0
    %1033 = vmatprep.mubr.f32.mxu0 %v348
    %1034 = vmatmul.mubr.f32.gmra.mxu0 %v347
    %v1035 = vpop.f32.mrf.mxu0
    %v1036 = vadd.f32 0.0, %v1035
    %v1037 = vpop.f32.mrf.mxu0
    %1038 = vmatprep.mubr.f32.mxu0 %v350
    %1039 = vmatmul.mubr.f32.gmra.mxu0 %v349
    %v1040 = vpop.f32.mrf.mxu0
    %v1041 = vadd.f32 0.0, %v1040
    %v1042 = vpop.f32.mrf.mxu0
    %1043 = vmatprep.mubr.f32.mxu0 %v352
    %1044 = vmatmul.mubr.f32.gmra.mxu0 %v351
    %v1045 = vpop.f32.mrf.mxu0
    %v1046 = vadd.f32 0.0, %v1045
    %v1047 = vpop.f32.mrf.mxu0
    %1048 = vmatprep.mubr.f32.mxu0 %v354
    %1049 = vmatmul.mubr.f32.gmra.mxu0 %v353
    %v1050 = vpop.f32.mrf.mxu0
    %v1051 = vadd.f32 0.0, %v1050
    %v1052 = vpop.f32.mrf.mxu0
    %1053 = vmatprep.mubr.f32.mxu0 %v356
    %1054 = vmatmul.mubr.f32.gmra.mxu0 %v355
    %v1055 = vpop.f32.mrf.mxu0
    %v1056 = vadd.f32 0.0, %v1055
    %v1057 = vpop.f32.mrf.mxu0
    %1058 = vmatprep.mubr.f32.mxu0 %v358
    %1059 = vmatmul.mubr.f32.gmra.mxu0 %v357
    %v1060 = vpop.f32.mrf.mxu0
    %v1061 = vadd.f32 0.0, %v1060
    %v1062 = vpop.f32.mrf.mxu0
    %1063 = vmatprep.mubr.f32.mxu0 %v360
    %1064 = vmatmul.mubr.f32.gmra.mxu0 %v359
    %v1065 = vpop.f32.mrf.mxu0
    %v1066 = vadd.f32 0.0, %v1065
    %v1067 = vpop.f32.mrf.mxu0
    %1068 = vmatprep.mubr.f32.mxu0 %v362
    %1069 = vmatmul.mubr.f32.gmra.mxu0 %v361
    %v1070 = vpop.f32.mrf.mxu0
    %v1071 = vadd.f32 0.0, %v1070
    %v1072 = vpop.f32.mrf.mxu0
    %1073 = vmatprep.mubr.f32.mxu0 %v364
    %1074 = vmatmul.mubr.f32.gmra.mxu0 %v363
    %v1075 = vpop.f32.mrf.mxu0
    %v1076 = vadd.f32 0.0, %v1075
    %v1077 = vpop.f32.mrf.mxu0
    %1078 = vmatprep.mubr.f32.mxu0 %v366
    %1079 = vmatmul.mubr.f32.gmra.mxu0 %v365
    %v1080 = vpop.f32.mrf.mxu0
    %v1081 = vadd.f32 0.0, %v1080
    %v1082 = vpop.f32.mrf.mxu0
    %1083 = vmatprep.mubr.f32.mxu0 %v368
    %1084 = vmatmul.mubr.f32.gmra.mxu0 %v367
    %v1085 = vpop.f32.mrf.mxu0
    %v1086 = vadd.f32 0.0, %v1085
    %v1087 = vpop.f32.mrf.mxu0
    %1088 = vmatprep.mubr.f32.mxu0 %v370
    %1089 = vmatmul.mubr.f32.gmra.mxu0 %v369
    %v1090 = vpop.f32.mrf.mxu0
    %v1091 = vadd.f32 0.0, %v1090
    %v1092 = vpop.f32.mrf.mxu0
    %1093 = vmatprep.mubr.f32.mxu0 %v372
    %1094 = vmatmul.mubr.f32.gmra.mxu0 %v371
    %v1095 = vpop.f32.mrf.mxu0
    %v1096 = vadd.f32 0.0, %v1095
    %v1097 = vpop.f32.mrf.mxu0
    %1098 = vmatprep.mubr.f32.mxu0 %v374
    %1099 = vmatmul.mubr.f32.gmra.mxu0 %v373
    %v1100 = vpop.f32.mrf.mxu0
    %v1101 = vadd.f32 0.0, %v1100
    %v1102 = vpop.f32.mrf.mxu0
    %1103 = vmatprep.mubr.f32.mxu0 %v376
    %1104 = vmatmul.mubr.f32.gmra.mxu0 %v375
    %v1105 = vpop.f32.mrf.mxu0
    %v1106 = vadd.f32 0.0, %v1105
    %v1107 = vpop.f32.mrf.mxu0
    %1108 = vmatprep.mubr.f32.mxu0 %v378
    %1109 = vmatmul.mubr.f32.gmra.mxu0 %v377
    %v1110 = vpop.f32.mrf.mxu0
    %v1111 = vadd.f32 0.0, %v1110
    %v1112 = vpop.f32.mrf.mxu0
    %1113 = vmatprep.mubr.f32.mxu0 %v380
    %1114 = vmatmul.mubr.f32.gmra.mxu0 %v379
    %v1115 = vpop.f32.mrf.mxu0
    %v1116 = vadd.f32 0.0, %v1115
    %v1117 = vpop.f32.mrf.mxu0
    %1118 = vmatprep.mubr.f32.mxu0 %v382
    %1119 = vmatmul.mubr.f32.gmra.mxu0 %v381
    %v1120 = vpop.f32.mrf.mxu0
    %v1121 = vadd.f32 0.0, %v1120
    %v1122 = vpop.f32.mrf.mxu0
    %1123 = vmatprep.mubr.f32.mxu0 %v384
    %1124 = vmatmul.mubr.f32.gmra.mxu0 %v383
    %v1125 = vpop.f32.mrf.mxu0
    %v1126 = vadd.f32 0.0, %v1125
    %v1127 = vpop.f32.mrf.mxu0
    %1128 = vmatprep.mubr.f32.mxu0 %v386
    %1129 = vmatmul.mubr.f32.gmra.mxu0 %v385
    %v1130 = vpop.f32.mrf.mxu0
    %v1131 = vadd.f32 0.0, %v1130
    %v1132 = vpop.f32.mrf.mxu0
    %1133 = vmatprep.mubr.f32.mxu0 %v388
    %1134 = vmatmul.mubr.f32.gmra.mxu0 %v387
    %v1135 = vpop.f32.mrf.mxu0
    %v1136 = vadd.f32 0.0, %v1135
    %v1137 = vpop.f32.mrf.mxu0
    %1138 = vmatprep.mubr.f32.mxu0 %v390
    %1139 = vmatmul.mubr.f32.gmra.mxu0 %v389
    %v1140 = vpop.f32.mrf.mxu0
    %v1141 = vadd.f32 0.0, %v1140
    %v1142 = vpop.f32.mrf.mxu0
    %1143 = vmatprep.mubr.f32.mxu0 %v392
    %1144 = vmatmul.mubr.f32.gmra.mxu0 %v391
    %v1145 = vpop.f32.mrf.mxu0
    %v1146 = vadd.f32 0.0, %v1145
    %v1147 = vpop.f32.mrf.mxu0
    %1148 = vmatprep.mubr.f32.mxu0 %v394
    %1149 = vmatmul.mubr.f32.gmra.mxu0 %v393
    %v1150 = vpop.f32.mrf.mxu0
    %v1151 = vadd.f32 0.0, %v1150
    %v1152 = vpop.f32.mrf.mxu0
    %1153 = vmatprep.mubr.f32.mxu0 %v396
    %1154 = vmatmul.mubr.f32.gmra.mxu0 %v395
    %v1155 = vpop.f32.mrf.mxu0
    %v1156 = vadd.f32 0.0, %v1155
    %v1157 = vpop.f32.mrf.mxu0
    %1158 = vmatprep.mubr.f32.mxu0 %v398
    %1159 = vmatmul.mubr.f32.gmra.mxu0 %v397
    %v1160 = vpop.f32.mrf.mxu0
    %v1161 = vadd.f32 0.0, %v1160
    %v1162 = vpop.f32.mrf.mxu0
    %1163 = vmatprep.mubr.f32.mxu0 %v400
    %1164 = vmatmul.mubr.f32.gmra.mxu0 %v399
    %v1165 = vpop.f32.mrf.mxu0
    %v1166 = vadd.f32 0.0, %v1165
    %v1167 = vpop.f32.mrf.mxu0
    %1168 = vmatprep.mubr.f32.mxu0 %v402
    %1169 = vmatmul.mubr.f32.gmra.mxu0 %v401
    %v1170 = vpop.f32.mrf.mxu0
    %v1171 = vadd.f32 0.0, %v1170
    %v1172 = vpop.f32.mrf.mxu0
    %1173 = vmatprep.mubr.f32.mxu0 %v404
    %1174 = vmatmul.mubr.f32.gmra.mxu0 %v403
    %v1175 = vpop.f32.mrf.mxu0
    %v1176 = vadd.f32 0.0, %v1175
    %v1177 = vpop.f32.mrf.mxu0
    %1178 = vmatprep.mubr.f32.mxu0 %v406
    %1179 = vmatmul.mubr.f32.gmra.mxu0 %v405
    %v1180 = vpop.f32.mrf.mxu0
    %v1181 = vadd.f32 0.0, %v1180
    %v1182 = vpop.f32.mrf.mxu0
    %1183 = vmatprep.mubr.f32.mxu0 %v408
    %1184 = vmatmul.mubr.f32.gmra.mxu0 %v407
    %v1185 = vpop.f32.mrf.mxu0
    %v1186 = vadd.f32 0.0, %v1185
    %v1187 = vpop.f32.mrf.mxu0
    %1188 = vmatprep.mubr.f32.mxu0 %v410
    %1189 = vmatmul.mubr.f32.gmra.mxu0 %v409
    %v1190 = vpop.f32.mrf.mxu0
    %v1191 = vadd.f32 0.0, %v1190
    %v1192 = vpop.f32.mrf.mxu0
    %1193 = vmatprep.mubr.f32.mxu0 %v412
    %1194 = vmatmul.mubr.f32.gmra.mxu0 %v411
    %v1195 = vpop.f32.mrf.mxu0
    %v1196 = vadd.f32 0.0, %v1195
    %v1197 = vpop.f32.mrf.mxu0
    %1198 = vmatprep.mubr.f32.mxu0 %v414
    %1199 = vmatmul.mubr.f32.gmra.mxu0 %v413
    %v1200 = vpop.f32.mrf.mxu0
    %v1201 = vadd.f32 0.0, %v1200
    %v1202 = vpop.f32.mrf.mxu0
    %1203 = vmatprep.mubr.f32.mxu0 %v416
    %1204 = vmatmul.mubr.f32.gmra.mxu0 %v415
    %v1205 = vpop.f32.mrf.mxu0
    %v1206 = vadd.f32 0.0, %v1205
    %v1207 = vpop.f32.mrf.mxu0
    %1208 = vmatprep.mubr.f32.mxu0 %v418
    %1209 = vmatmul.mubr.f32.gmra.mxu0 %v417
    %v1210 = vpop.f32.mrf.mxu0
    %v1211 = vadd.f32 0.0, %v1210
    %v1212 = vpop.f32.mrf.mxu0
    %1213 = vmatprep.mubr.f32.mxu0 %v420
    %1214 = vmatmul.mubr.f32.gmra.mxu0 %v419
    %v1215 = vpop.f32.mrf.mxu0
    %v1216 = vadd.f32 0.0, %v1215
    %v1217 = vpop.f32.mrf.mxu0
    %1218 = vmatprep.mubr.f32.mxu0 %v422
    %1219 = vmatmul.mubr.f32.gmra.mxu0 %v421
    %v1220 = vpop.f32.mrf.mxu0
    %v1221 = vadd.f32 0.0, %v1220
    %v1222 = vpop.f32.mrf.mxu0
    %1223 = vmatprep.mubr.f32.mxu0 %v424
    %1224 = vmatmul.mubr.f32.gmra.mxu0 %v423
    %v1225 = vpop.f32.mrf.mxu0
    %v1226 = vadd.f32 0.0, %v1225
    %v1227 = vpop.f32.mrf.mxu0
    %1228 = vmatprep.mubr.f32.mxu0 %v426
    %1229 = vmatmul.mubr.f32.gmra.mxu0 %v425
    %v1230 = vpop.f32.mrf.mxu0
    %v1231 = vadd.f32 0.0, %v1230
    %v1232 = vpop.f32.mrf.mxu0
    %1233 = vmatprep.mubr.f32.mxu0 %v428
    %1234 = vmatmul.mubr.f32.gmra.mxu0 %v427
    %v1235 = vpop.f32.mrf.mxu0
    %v1236 = vadd.f32 0.0, %v1235
    %v1237 = vpop.f32.mrf.mxu0
    %1238 = vmatprep.mubr.f32.mxu0 %v430
    %1239 = vmatmul.mubr.f32.gmra.mxu0 %v429
    %v1240 = vpop.f32.mrf.mxu0
    %v1241 = vadd.f32 0.0, %v1240
    %v1242 = vpop.f32.mrf.mxu0
    %1243 = vmatprep.mubr.f32.mxu0 %v432
    %1244 = vmatmul.mubr.f32.gmra.mxu0 %v431
    %v1245 = vpop.f32.mrf.mxu0
    %v1246 = vadd.f32 0.0, %v1245
    %v1247 = vpop.f32.mrf.mxu0
    %1248 = vmatprep.mubr.f32.mxu0 %v434
    %1249 = vmatmul.mubr.f32.gmra.mxu0 %v433
    %v1250 = vpop.f32.mrf.mxu0
    %v1251 = vadd.f32 0.0, %v1250
    %v1252 = vpop.f32.mrf.mxu0
    %1253 = vmatprep.mubr.f32.mxu0 %v436
    %1254 = vmatmul.mubr.f32.gmra.mxu0 %v435
    %v1255 = vpop.f32.mrf.mxu0
    %v1256 = vadd.f32 0.0, %v1255
    %v1257 = vpop.f32.mrf.mxu0
    %1258 = vmatprep.mubr.f32.mxu0 %v438
    %1259 = vmatmul.mubr.f32.gmra.mxu0 %v437
    %v1260 = vpop.f32.mrf.mxu0
    %v1261 = vadd.f32 0.0, %v1260
    %v1262 = vpop.f32.mrf.mxu0
    %1263 = vmatprep.mubr.f32.mxu0 %v440
    %1264 = vmatmul.mubr.f32.gmra.mxu0 %v439
    %v1265 = vpop.f32.mrf.mxu0
    %v1266 = vadd.f32 0.0, %v1265
    %v1267 = vpop.f32.mrf.mxu0
    %1268 = vmatprep.mubr.f32.mxu0 %v442
    %1269 = vmatmul.mubr.f32.gmra.mxu0 %v441
    %v1270 = vpop.f32.mrf.mxu0
    %v1271 = vadd.f32 0.0, %v1270
    %v1272 = vpop.f32.mrf.mxu0
    %1273 = vmatprep.mubr.f32.mxu0 %v444
    %1274 = vmatmul.mubr.f32.gmra.mxu0 %v443
    %v1275 = vpop.f32.mrf.mxu0
    %v1276 = vadd.f32 0.0, %v1275
    %v1277 = vpop.f32.mrf.mxu0
    %1278 = vmatprep.mubr.f32.mxu0 %v446
    %1279 = vmatmul.mubr.f32.gmra.mxu0 %v445
    %v1280 = vpop.f32.mrf.mxu0
    %v1281 = vadd.f32 0.0, %v1280
    %v1282 = vpop.f32.mrf.mxu0
    %1283 = vmatprep.mubr.f32.mxu0 %v448
    %1284 = vmatmul.mubr.f32.gmra.mxu0 %v447
    %v1285 = vpop.f32.mrf.mxu0
    %v1286 = vadd.f32 0.0, %v1285
    %v1287 = vpop.f32.mrf.mxu0
    %1288 = vmatprep.mubr.f32.mxu0 %v450
    %1289 = vmatmul.mubr.f32.gmra.mxu0 %v449
    %v1290 = vpop.f32.mrf.mxu0
    %v1291 = vadd.f32 0.0, %v1290
    %v1292 = vpop.f32.mrf.mxu0
    %1293 = vmatprep.mubr.f32.mxu0 %v452
    %1294 = vmatmul.mubr.f32.gmra.mxu0 %v451
    %v1295 = vpop.f32.mrf.mxu0
    %v1296 = vadd.f32 0.0, %v1295
    %v1297 = vpop.f32.mrf.mxu0
    %1298 = vmatprep.mubr.f32.mxu0 %v454
    %1299 = vmatmul.mubr.f32.gmra.mxu0 %v453
    %v1300 = vpop.f32.mrf.mxu0
    %v1301 = vadd.f32 0.0, %v1300
    %v1302 = vpop.f32.mrf.mxu0
    %1303 = vmatprep.mubr.f32.mxu0 %v456
    %1304 = vmatmul.mubr.f32.gmra.mxu0 %v455
    %v1305 = vpop.f32.mrf.mxu0
    %v1306 = vadd.f32 0.0, %v1305
    %v1307 = vpop.f32.mrf.mxu0
    %1308 = vmatprep.mubr.f32.mxu0 %v458
    %1309 = vmatmul.mubr.f32.gmra.mxu0 %v457
    %v1310 = vpop.f32.mrf.mxu0
    %v1311 = vadd.f32 0.0, %v1310
    %v1312 = vpop.f32.mrf.mxu0
    %1313 = vmatprep.mubr.f32.mxu0 %v460
    %1314 = vmatmul.mubr.f32.gmra.mxu0 %v459
    %v1315 = vpop.f32.mrf.mxu0
    %v1316 = vadd.f32 0.0, %v1315
    %v1317 = vpop.f32.mrf.mxu0
    %1318 = vmatprep.mubr.f32.mxu0 %v462
    %1319 = vmatmul.mubr.f32.gmra.mxu0 %v461
    %v1320 = vpop.f32.mrf.mxu0
    %v1321 = vadd.f32 0.0, %v1320
    %v1322 = vpop.f32.mrf.mxu0
    %1323 = vmatprep.mubr.f32.mxu0 %v464
    %1324 = vmatmul.mubr.f32.gmra.mxu0 %v463
    %v1325 = vpop.f32.mrf.mxu0
    %v1326 = vadd.f32 0.0, %v1325
    %v1327 = vpop.f32.mrf.mxu0
    %1328 = vmatprep.mubr.f32.mxu0 %v466
    %1329 = vmatmul.mubr.f32.gmra.mxu0 %v465
    %v1330 = vpop.f32.mrf.mxu0
    %v1331 = vadd.f32 0.0, %v1330
    %v1332 = vpop.f32.mrf.mxu0
    %1333 = vmatprep.mubr.f32.mxu0 %v468
    %1334 = vmatmul.mubr.f32.gmra.mxu0 %v467
    %v1335 = vpop.f32.mrf.mxu0
    %v1336 = vadd.f32 0.0, %v1335
    %v1337 = vpop.f32.mrf.mxu0
    %1338 = vmatprep.mubr.f32.mxu0 %v470
    %1339 = vmatmul.mubr.f32.gmra.mxu0 %v469
    %v1340 = vpop.f32.mrf.mxu0
    %v1341 = vadd.f32 0.0, %v1340
    %v1342 = vpop.f32.mrf.mxu0
    %1343 = vmatprep.mubr.f32.mxu0 %v472
    %1344 = vmatmul.mubr.f32.gmra.mxu0 %v471
    %v1345 = vpop.f32.mrf.mxu0
    %v1346 = vadd.f32 0.0, %v1345
    %v1347 = vpop.f32.mrf.mxu0
    %1348 = vmatprep.mubr.f32.mxu0 %v474
    %1349 = vmatmul.mubr.f32.gmra.mxu0 %v473
    %v1350 = vpop.f32.mrf.mxu0
    %v1351 = vadd.f32 0.0, %v1350
    %v1352 = vpop.f32.mrf.mxu0
    %1353 = vmatprep.mubr.f32.mxu0 %v476
    %1354 = vmatmul.mubr.f32.gmra.mxu0 %v475
    %v1355 = vpop.f32.mrf.mxu0
    %v1356 = vadd.f32 0.0, %v1355
    %v1357 = vpop.f32.mrf.mxu0
    %1358 = vmatprep.mubr.f32.mxu0 %v478
    %1359 = vmatmul.mubr.f32.gmra.mxu0 %v477
    %v1360 = vpop.f32.mrf.mxu0
    %v1361 = vadd.f32 0.0, %v1360
    %v1362 = vpop.f32.mrf.mxu0
    %1363 = vmatprep.mubr.f32.mxu0 %v480
    %1364 = vmatmul.mubr.f32.gmra.mxu0 %v479
    %v1365 = vpop.f32.mrf.mxu0
    %v1366 = vadd.f32 0.0, %v1365
    %v1367 = vpop.f32.mrf.mxu0
    %1368 = vmatprep.mubr.f32.mxu0 %v482
    %1369 = vmatmul.mubr.f32.gmra.mxu0 %v481
    %v1370 = vpop.f32.mrf.mxu0
    %v1371 = vadd.f32 0.0, %v1370
    %v1372 = vpop.f32.mrf.mxu0
    %1373 = vmatprep.mubr.f32.mxu0 %v484
    %1374 = vmatmul.mubr.f32.gmra.mxu0 %v483
    %v1375 = vpop.f32.mrf.mxu0
    %v1376 = vadd.f32 0.0, %v1375
    %v1377 = vpop.f32.mrf.mxu0
    %1378 = vmatprep.mubr.f32.mxu0 %v486
    %1379 = vmatmul.mubr.f32.gmra.mxu0 %v485
    %v1380 = vpop.f32.mrf.mxu0
    %v1381 = vadd.f32 0.0, %v1380
    %v1382 = vpop.f32.mrf.mxu0
    %1383 = vmatprep.mubr.f32.mxu0 %v488
    %1384 = vmatmul.mubr.f32.gmra.mxu0 %v487
    %v1385 = vpop.f32.mrf.mxu0
    %v1386 = vadd.f32 0.0, %v1385
    %v1387 = vpop.f32.mrf.mxu0
    %1388 = vmatprep.mubr.f32.mxu0 %v490
    %1389 = vmatmul.mubr.f32.gmra.mxu0 %v489
    %v1390 = vpop.f32.mrf.mxu0
    %v1391 = vadd.f32 0.0, %v1390
    %v1392 = vpop.f32.mrf.mxu0
    %1393 = vmatprep.mubr.f32.mxu0 %v492
    %1394 = vmatmul.mubr.f32.gmra.mxu0 %v491
    %v1395 = vpop.f32.mrf.mxu0
    %v1396 = vadd.f32 0.0, %v1395
    %v1397 = vpop.f32.mrf.mxu0
    %1398 = vmatprep.mubr.f32.mxu0 %v494
    %1399 = vmatmul.mubr.f32.gmra.mxu0 %v493
    %v1400 = vpop.f32.mrf.mxu0
    %v1401 = vadd.f32 0.0, %v1400
    %v1402 = vpop.f32.mrf.mxu0
    %1403 = vmatprep.mubr.f32.mxu0 %v496
    %1404 = vmatmul.mubr.f32.gmra.mxu0 %v495
    %v1405 = vpop.f32.mrf.mxu0
    %v1406 = vadd.f32 0.0, %v1405
    %v1407 = vpop.f32.mrf.mxu0
    %1408 = vmatprep.mubr.f32.mxu0 %v498
    %1409 = vmatmul.mubr.f32.gmra.mxu0 %v497
    %v1410 = vpop.f32.mrf.mxu0
    %v1411 = vadd.f32 0.0, %v1410
    %v1412 = vpop.f32.mrf.mxu0
    %1413 = vmatprep.mubr.f32.mxu0 %v500
    %1414 = vmatmul.mubr.f32.gmra.mxu0 %v499
    %v1415 = vpop.f32.mrf.mxu0
    %v1416 = vadd.f32 0.0, %v1415
    %v1417 = vpop.f32.mrf.mxu0
    %1418 = vmatprep.mubr.f32.mxu0 %v502
    %1419 = vmatmul.mubr.f32.gmra.mxu0 %v501
    %v1420 = vpop.f32.mrf.mxu0
    %v1421 = vadd.f32 0.0, %v1420
    %v1422 = vpop.f32.mrf.mxu0
    %1423 = vmatprep.mubr.f32.mxu0 %v504
    %1424 = vmatmul.mubr.f32.gmra.mxu0 %v503
    %v1425 = vpop.f32.mrf.mxu0
    %v1426 = vadd.f32 0.0, %v1425
    %v1427 = vpop.f32.mrf.mxu0
    %1428 = vmatprep.mubr.f32.mxu0 %v506
    %1429 = vmatmul.mubr.f32.gmra.mxu0 %v505
    %v1430 = vpop.f32.mrf.mxu0
    %v1431 = vadd.f32 0.0, %v1430
    %v1432 = vpop.f32.mrf.mxu0
    %1433 = vmatprep.mubr.f32.mxu0 %v508
    %1434 = vmatmul.mubr.f32.gmra.mxu0 %v507
    %v1435 = vpop.f32.mrf.mxu0
    %v1436 = vadd.f32 0.0, %v1435
    %v1437 = vpop.f32.mrf.mxu0
    %1438 = vmatprep.mubr.f32.mxu0 %v510
    %1439 = vmatmul.mubr.f32.gmra.mxu0 %v509
    %v1440 = vpop.f32.mrf.mxu0
    %v1441 = vadd.f32 0.0, %v1440
    %v1442 = vpop.f32.mrf.mxu0
    %1443 = vmatprep.mubr.f32.mxu0 %v512
    %1444 = vmatmul.mubr.f32.gmra.mxu0 %v511
    %v1445 = vpop.f32.mrf.mxu0
    %v1446 = vadd.f32 0.0, %v1445
    %v1447 = vpop.f32.mrf.mxu0
    %1448 = vmatprep.mubr.f32.mxu0 %v514
    %1449 = vmatmul.mubr.f32.gmra.mxu0 %v513
    %v1450 = vpop.f32.mrf.mxu0
    %v1451 = vadd.f32 0.0, %v1450
    %v1452 = vpop.f32.mrf.mxu0
    %1453 = vmatprep.mubr.f32.mxu0 %v516
    %1454 = vmatmul.mubr.f32.gmra.mxu0 %v515
    %v1455 = vpop.f32.mrf.mxu0
    %v1456 = vadd.f32 0.0, %v1455
    %v1457 = vpop.f32.mrf.mxu0
    %1458 = vmatprep.mubr.f32.mxu0 %v518
    %1459 = vmatmul.mubr.f32.gmra.mxu0 %v517
    %v1460 = vpop.f32.mrf.mxu0
    %v1461 = vadd.f32 0.0, %v1460
    %v1462 = vpop.f32.mrf.mxu0
    %1463 = vmatprep.mubr.f32.mxu0 %v520
    %1464 = vmatmul.mubr.f32.gmra.mxu0 %v519
    %v1465 = vpop.f32.mrf.mxu0
    %v1466 = vadd.f32 0.0, %v1465
    %v1467 = vpop.f32.mrf.mxu0
    %1468 = vmatprep.mubr.f32.mxu0 %v522
    %1469 = vmatmul.mubr.f32.gmra.mxu0 %v521
    %v1470 = vpop.f32.mrf.mxu0
    %v1471 = vadd.f32 0.0, %v1470
    %v1472 = vpop.f32.mrf.mxu0
    %1473 = vmatprep.mubr.f32.mxu0 %v524
    %1474 = vmatmul.mubr.f32.gmra.mxu0 %v523
    %v1475 = vpop.f32.mrf.mxu0
    %v1476 = vadd.f32 0.0, %v1475
    %v1477 = vpop.f32.mrf.mxu0
    %1478 = vmatprep.mubr.f32.mxu0 %v526
    %1479 = vmatmul.mubr.f32.gmra.mxu0 %v525
    %v1480 = vpop.f32.mrf.mxu0
    %v1481 = vadd.f32 0.0, %v1480
    %v1482 = vpop.f32.mrf.mxu0
    %1483 = vmatprep.mubr.f32.mxu0 %v528
    %1484 = vmatmul.mubr.f32.gmra.mxu0 %v527
    %v1485 = vpop.f32.mrf.mxu0
    %v1486 = vadd.f32 0.0, %v1485
    %v1487 = vpop.f32.mrf.mxu0
    %1488 = vmatprep.mubr.f32.mxu0 %v530
    %1489 = vmatmul.mubr.f32.gmra.mxu0 %v529
    %v1490 = vpop.f32.mrf.mxu0
    %v1491 = vadd.f32 0.0, %v1490
    %v1492 = vpop.f32.mrf.mxu0
    %1493 = vmatprep.mubr.f32.mxu0 %v532
    %1494 = vmatmul.mubr.f32.gmra.mxu0 %v531
    %v1495 = vpop.f32.mrf.mxu0
    %v1496 = vadd.f32 0.0, %v1495
    %v1497 = vpop.f32.mrf.mxu0
    %1498 = vmatprep.mubr.f32.mxu0 %v534
    %1499 = vmatmul.mubr.f32.gmra.mxu0 %v533
    %v1500 = vpop.f32.mrf.mxu0
    %v1501 = vadd.f32 0.0, %v1500
    %v1502 = vpop.f32.mrf.mxu0
    %1503 = vmatprep.mubr.f32.mxu0 %v536
    %1504 = vmatmul.mubr.f32.gmra.mxu0 %v535
    %v1505 = vpop.f32.mrf.mxu0
    %v1506 = vadd.f32 0.0, %v1505
    %v1507 = vpop.f32.mrf.mxu0
    %1508 = vmatprep.mubr.f32.mxu0 %v538
    %1509 = vmatmul.mubr.f32.gmra.mxu0 %v537
    %v1510 = vpop.f32.mrf.mxu0
    %v1511 = vadd.f32 0.0, %v1510
    %v1512 = vpop.f32.mrf.mxu0
    %1513 = vmatprep.mubr.f32.mxu0 %v540
    %1514 = vmatmul.mubr.f32.gmra.mxu0 %v539
    %v1515 = vpop.f32.mrf.mxu0
    %v1516 = vadd.f32 0.0, %v1515
    %v1517 = vpop.f32.mrf.mxu0
    %1518 = vmatprep.mubr.f32.mxu0 %v542
    %1519 = vmatmul.mubr.f32.gmra.mxu0 %v541
    %v1520 = vpop.f32.mrf.mxu0
    %v1521 = vadd.f32 0.0, %v1520
    %v1522 = vpop.f32.mrf.mxu0
    %1523 = vmatprep.mubr.f32.mxu0 %v544
    %1524 = vmatmul.mubr.f32.gmra.mxu0 %v543
    %v1525 = vpop.f32.mrf.mxu0
    %v1526 = vadd.f32 0.0, %v1525
    %v1527 = vpop.f32.mrf.mxu0
    %1528 = vmatprep.mubr.f32.mxu0 %v546
    %1529 = vmatmul.mubr.f32.gmra.mxu0 %v545
    %v1530 = vpop.f32.mrf.mxu0
    %v1531 = vadd.f32 0.0, %v1530
    %v1532 = vpop.f32.mrf.mxu0
    %1533 = vmatprep.mubr.f32.mxu0 %v548
    %1534 = vmatmul.mubr.f32.gmra.mxu0 %v547
    %v1535 = vpop.f32.mrf.mxu0
    %v1536 = vadd.f32 0.0, %v1535
    %v1537 = vpop.f32.mrf.mxu0
    %1538 = vmatprep.mubr.f32.mxu0 %v550
    %1539 = vmatmul.mubr.f32.gmra.mxu0 %v549
    %v1540 = vpop.f32.mrf.mxu0
    %v1541 = vadd.f32 0.0, %v1540
    %v1542 = vpop.f32.mrf.mxu0
    %1543 = vmatprep.mubr.f32.mxu0 %v552
    %1544 = vmatmul.mubr.f32.gmra.mxu0 %v551
    %v1545 = vpop.f32.mrf.mxu0
    %v1546 = vadd.f32 0.0, %v1545
    %v1547 = vpop.f32.mrf.mxu0
    %1548 = vmatprep.mubr.f32.mxu0 %v554
    %1549 = vmatmul.mubr.f32.gmra.mxu0 %v553
    %v1550 = vpop.f32.mrf.mxu0
    %v1551 = vadd.f32 0.0, %v1550
    %v1552 = vpop.f32.mrf.mxu0
    %1553 = vmatprep.mubr.f32.mxu0 %v556
    %1554 = vmatmul.mubr.f32.gmra.mxu0 %v555
    %v1555 = vpop.f32.mrf.mxu0
    %v1556 = vadd.f32 0.0, %v1555
    %v1557 = vpop.f32.mrf.mxu0
    %1558 = vmatprep.mubr.f32.mxu0 %v558
    %1559 = vmatmul.mubr.f32.gmra.mxu0 %v557
    %v1560 = vpop.f32.mrf.mxu0
    %v1561 = vadd.f32 0.0, %v1560
    %v1562 = vpop.f32.mrf.mxu0
    %1563 = vmatprep.mubr.f32.mxu0 %v560
    %1564 = vmatmul.mubr.f32.gmra.mxu0 %v559
    %v1565 = vpop.f32.mrf.mxu0
    %v1566 = vadd.f32 0.0, %v1565
    %v1567 = vpop.f32.mrf.mxu0
    %1568 = vmatprep.mubr.f32.mxu0 %v562
    %1569 = vmatmul.mubr.f32.gmra.mxu0 %v561
    %v1570 = vpop.f32.mrf.mxu0
    %v1571 = vadd.f32 0.0, %v1570
    %v1572 = vpop.f32.mrf.mxu0
    %1573 = vmatprep.mubr.f32.mxu0 %v564
    %1574 = vmatmul.mubr.f32.gmra.mxu0 %v563
    %v1575 = vpop.f32.mrf.mxu0
    %v1576 = vadd.f32 0.0, %v1575
    %v1577 = vpop.f32.mrf.mxu0
    %1578 = vmatprep.mubr.f32.mxu0 %v566
    %1579 = vmatmul.mubr.f32.gmra.mxu0 %v565
    %v1580 = vpop.f32.mrf.mxu0
    %v1581 = vadd.f32 0.0, %v1580
    %v1582 = vpop.f32.mrf.mxu0
    %1583 = vmatprep.mubr.f32.mxu0 %v568
    %1584 = vmatmul.mubr.f32.gmra.mxu0 %v567
    %v1585 = vpop.f32.mrf.mxu0
    %v1586 = vadd.f32 0.0, %v1585
    %v1587 = vpop.f32.mrf.mxu0
    %1588 = vmatprep.mubr.f32.mxu0 %v570
    %1589 = vmatmul.mubr.f32.gmra.mxu0 %v569
    %v1590 = vpop.f32.mrf.mxu0
    %v1591 = vadd.f32 0.0, %v1590
    %v1592 = vpop.f32.mrf.mxu0
    %1593 = vmatprep.mubr.f32.mxu0 %v572
    %1594 = vmatmul.mubr.f32.gmra.mxu0 %v571
    %v1595 = vpop.f32.mrf.mxu0
    %v1596 = vadd.f32 0.0, %v1595
    %v1597 = vpop.f32.mrf.mxu0
    %1598 = vmatprep.mubr.f32.mxu0 %v574
    %1599 = vmatmul.mubr.f32.gmra.mxu0 %v573
    %v1600 = vpop.f32.mrf.mxu0
    %v1601 = vadd.f32 0.0, %v1600
    %v1602 = vpop.f32.mrf.mxu0
    %1603 = vmatprep.mubr.f32.mxu0 %v576
    %1604 = vmatmul.mubr.f32.gmra.mxu0 %v575
    %v1605 = vpop.f32.mrf.mxu0
    %v1606 = vadd.f32 0.0, %v1605
    %v1607 = vpop.f32.mrf.mxu0
    %1608 = vmatprep.mubr.f32.mxu0 %v578
    %1609 = vmatmul.mubr.f32.gmra.mxu0 %v577
    %v1610 = vpop.f32.mrf.mxu0
    %v1611 = vadd.f32 0.0, %v1610
    %v1612 = vpop.f32.mrf.mxu0
    %1613 = vmatprep.mubr.f32.mxu0 %v580
    %1614 = vmatmul.mubr.f32.gmra.mxu0 %v579
    %v1615 = vpop.f32.mrf.mxu0
    %v1616 = vadd.f32 0.0, %v1615
    %v1617 = vpop.f32.mrf.mxu0
    %1618 = vmatprep.mubr.f32.mxu0 %v582
    %1619 = vmatmul.mubr.f32.gmra.mxu0 %v581
    %v1620 = vpop.f32.mrf.mxu0
    %v1621 = vadd.f32 0.0, %v1620
    %v1622 = vpop.f32.mrf.mxu0
    %1623 = vmatprep.mubr.f32.mxu0 %v584
    %1624 = vmatmul.mubr.f32.gmra.mxu0 %v583
    %v1625 = vpop.f32.mrf.mxu0
    %v1626 = vadd.f32 0.0, %v1625
    %v1627 = vpop.f32.mrf.mxu0
    %1628 = vmatprep.mubr.f32.mxu0 %v586
    %1629 = vmatmul.mubr.f32.gmra.mxu0 %v585
    %v1630 = vpop.f32.mrf.mxu0
    %v1631 = vadd.f32 0.0, %v1630
    %v1632 = vpop.f32.mrf.mxu0
    %1633 = vmatprep.mubr.f32.mxu0 %v588
    %1634 = vmatmul.mubr.f32.gmra.mxu0 %v587
    %v1635 = vpop.f32.mrf.mxu0
    %v1636 = vadd.f32 0.0, %v1635
    %v1637 = vpop.f32.mrf.mxu0
    %1638 = vmatprep.mubr.f32.mxu0 %v590
    %1639 = vmatmul.mubr.f32.gmra.mxu0 %v589
    %v1640 = vpop.f32.mrf.mxu0
    %v1641 = vadd.f32 0.0, %v1640
    %v1642 = vpop.f32.mrf.mxu0
    %1643 = vmatprep.mubr.f32.mxu0 %v592
    %1644 = vmatmul.mubr.f32.gmra.mxu0 %v591
    %v1645 = vpop.f32.mrf.mxu0
    %v1646 = vadd.f32 0.0, %v1645
    %v1647 = vpop.f32.mrf.mxu0
    %1648 = vmatprep.mubr.f32.mxu0 %v594
    %1649 = vmatmul.mubr.f32.gmra.mxu0 %v593
    %v1650 = vpop.f32.mrf.mxu0
    %v1651 = vadd.f32 0.0, %v1650
    %v1652 = vpop.f32.mrf.mxu0
    %1653 = vmatprep.mubr.f32.mxu0 %v596
    %1654 = vmatmul.mubr.f32.gmra.mxu0 %v595
    %v1655 = vpop.f32.mrf.mxu0
    %v1656 = vadd.f32 0.0, %v1655
    %v1657 = vpop.f32.mrf.mxu0
    %1658 = vmatprep.mubr.f32.mxu0 %v598
    %1659 = vmatmul.mubr.f32.gmra.mxu0 %v597
    %v1660 = vpop.f32.mrf.mxu0
    %v1661 = vadd.f32 0.0, %v1660
    %v1662 = vpop.f32.mrf.mxu0
    %1663 = vmatprep.mubr.f32.mxu0 %v600
    %1664 = vmatmul.mubr.f32.gmra.mxu0 %v599
    %v1665 = vpop.f32.mrf.mxu0
    %v1666 = vadd.f32 0.0, %v1665
    %v1667 = vpop.f32.mrf.mxu0
    %1668 = vmatprep.mubr.f32.mxu0 %v602
    %1669 = vmatmul.mubr.f32.gmra.mxu0 %v601
    %v1670 = vpop.f32.mrf.mxu0
    %v1671 = vadd.f32 0.0, %v1670
    %v1672 = vpop.f32.mrf.mxu0
    %1673 = vmatprep.mubr.f32.mxu0 %v604
    %1674 = vmatmul.mubr.f32.gmra.mxu0 %v603
    %v1675 = vpop.f32.mrf.mxu0
    %v1676 = vadd.f32 0.0, %v1675
    %v1677 = vpop.f32.mrf.mxu0
    %1678 = vmatprep.mubr.f32.mxu0 %v606
    %1679 = vmatmul.mubr.f32.gmra.mxu0 %v605
    %v1680 = vpop.f32.mrf.mxu0
    %v1681 = vadd.f32 0.0, %v1680
    %v1682 = vpop.f32.mrf.mxu0
    %1683 = vmatprep.mubr.f32.mxu0 %v608
    %1684 = vmatmul.mubr.f32.gmra.mxu0 %v607
    %v1685 = vpop.f32.mrf.mxu0
    %v1686 = vadd.f32 0.0, %v1685
    %v1687 = vpop.f32.mrf.mxu0
    %1688 = vmatprep.mubr.f32.mxu0 %v610
    %1689 = vmatmul.mubr.f32.gmra.mxu0 %v609
    %v1690 = vpop.f32.mrf.mxu0
    %v1691 = vadd.f32 0.0, %v1690
    %v1692 = vpop.f32.mrf.mxu0
    %1693 = vmatprep.mubr.f32.mxu0 %v612
    %1694 = vmatmul.mubr.f32.gmra.mxu0 %v611
    %v1695 = vpop.f32.mrf.mxu0
    %v1696 = vadd.f32 0.0, %v1695
    %v1697 = vpop.f32.mrf.mxu0
    %1698 = vmatprep.mubr.f32.mxu0 %v614
    %1699 = vmatmul.mubr.f32.gmra.mxu0 %v613
    %v1700 = vpop.f32.mrf.mxu0
    %v1701 = vadd.f32 0.0, %v1700
    %v1702 = vpop.f32.mrf.mxu0
    %1703 = vmatprep.mubr.f32.mxu0 %v616
    %1704 = vmatmul.mubr.f32.gmra.mxu0 %v615
    %v1705 = vpop.f32.mrf.mxu0
    %v1706 = vadd.f32 0.0, %v1705
    %v1707 = vpop.f32.mrf.mxu0
    %1708 = vmatprep.mubr.f32.mxu0 %v618
    %1709 = vmatmul.mubr.f32.gmra.mxu0 %v617
    %v1710 = vpop.f32.mrf.mxu0
    %v1711 = vadd.f32 0.0, %v1710
    %v1712 = vpop.f32.mrf.mxu0
    %1713 = vmatprep.mubr.f32.mxu0 %v620
    %1714 = vmatmul.mubr.f32.gmra.mxu0 %v619
    %v1715 = vpop.f32.mrf.mxu0
    %v1716 = vadd.f32 0.0, %v1715
    %v1717 = vpop.f32.mrf.mxu0
    %1718 = vmatprep.mubr.f32.mxu0 %v622
    %1719 = vmatmul.mubr.f32.gmra.mxu0 %v621
    %v1720 = vpop.f32.mrf.mxu0
    %v1721 = vadd.f32 0.0, %v1720
    %v1722 = vpop.f32.mrf.mxu0
    %1723 = vmatprep.mubr.f32.mxu0 %v624
    %1724 = vmatmul.mubr.f32.gmra.mxu0 %v623
    %v1725 = vpop.f32.mrf.mxu0
    %v1726 = vadd.f32 0.0, %v1725
    %v1727 = vpop.f32.mrf.mxu0
    %1728 = vmatprep.mubr.f32.mxu0 %v626
    %1729 = vmatmul.mubr.f32.gmra.mxu0 %v625
    %v1730 = vpop.f32.mrf.mxu0
    %v1731 = vadd.f32 0.0, %v1730
    %v1732 = vpop.f32.mrf.mxu0
    %1733 = vmatprep.mubr.f32.mxu0 %v628
    %1734 = vmatmul.mubr.f32.gmra.mxu0 %v627
    %v1735 = vpop.f32.mrf.mxu0
    %v1736 = vadd.f32 0.0, %v1735
    %v1737 = vpop.f32.mrf.mxu0
    %1738 = vmatprep.mubr.f32.mxu0 %v630
    %1739 = vmatmul.mubr.f32.gmra.mxu0 %v629
    %v1740 = vpop.f32.mrf.mxu0
    %v1741 = vadd.f32 0.0, %v1740
    %v1742 = vpop.f32.mrf.mxu0
    %1743 = vmatprep.mubr.f32.mxu0 %v632
    %1744 = vmatmul.mubr.f32.gmra.mxu0 %v631
    %v1745 = vpop.f32.mrf.mxu0
    %v1746 = vadd.f32 0.0, %v1745
    %v1747 = vpop.f32.mrf.mxu0
    %1748 = vmatprep.mubr.f32.mxu0 %v634
    %1749 = vmatmul.mubr.f32.gmra.mxu0 %v633
    %v1750 = vpop.f32.mrf.mxu0
    %v1751 = vadd.f32 0.0, %v1750
    %v1752 = vpop.f32.mrf.mxu0
    %1753 = vmatprep.mubr.f32.mxu0 %v636
    %1754 = vmatmul.mubr.f32.gmra.mxu0 %v635
    %v1755 = vpop.f32.mrf.mxu0
    %v1756 = vadd.f32 0.0, %v1755
    %v1757 = vpop.f32.mrf.mxu0
    %1758 = vmatprep.mubr.f32.mxu0 %v638
    %1759 = vmatmul.mubr.f32.gmra.mxu0 %v637
    %v1760 = vpop.f32.mrf.mxu0
    %v1761 = vadd.f32 0.0, %v1760
    %v1762 = vpop.f32.mrf.mxu0
    %1763 = vmatprep.mubr.f32.mxu0 %v640
    %1764 = vmatmul.mubr.f32.gmra.mxu0 %v639
    %v1765 = vpop.f32.mrf.mxu0
    %v1766 = vadd.f32 0.0, %v1765
    %v1767 = vpop.f32.mrf.mxu0
    %1768 = vmatprep.mubr.f32.mxu0 %v642
    %1769 = vmatmul.mubr.f32.gmra.mxu0 %v641
    %v1770 = vpop.f32.mrf.mxu0
    %v1771 = vadd.f32 0.0, %v1770
    %v1772 = vpop.f32.mrf.mxu0
    %1773 = vmatprep.mubr.f32.mxu0 %v644
    %1774 = vmatmul.mubr.f32.gmra.mxu0 %v643
    %v1775 = vpop.f32.mrf.mxu0
    %v1776 = vadd.f32 0.0, %v1775
    %v1777 = vpop.f32.mrf.mxu0
    %1778 = vmatprep.mubr.f32.mxu0 %v646
    %1779 = vmatmul.mubr.f32.gmra.mxu0 %v645
    %v1780 = vpop.f32.mrf.mxu0
    %v1781 = vadd.f32 0.0, %v1780
    %v1782 = vpop.f32.mrf.mxu0
    %1783 = vmatprep.mubr.f32.mxu0 %v648
    %1784 = vmatmul.mubr.f32.gmra.mxu0 %v647
    %v1785 = vpop.f32.mrf.mxu0
    %v1786 = vadd.f32 0.0, %v1785
    %v1787 = vpop.f32.mrf.mxu0
    %1788 = vmatprep.mubr.f32.mxu0 %v650
    %1789 = vmatmul.mubr.f32.gmra.mxu0 %v649
    %v1790 = vpop.f32.mrf.mxu0
    %v1791 = vadd.f32 0.0, %v1790
    %v1792 = vpop.f32.mrf.mxu0
    %1793 = vmatprep.mubr.f32.mxu0 %v652
    %1794 = vmatmul.mubr.f32.gmra.mxu0 %v651
    %v1795 = vpop.f32.mrf.mxu0
    %v1796 = vadd.f32 0.0, %v1795
    %v1797 = vpop.f32.mrf.mxu0
    %1798 = vmatprep.mubr.f32.mxu0 %v654
    %1799 = vmatmul.mubr.f32.gmra.mxu0 %v653
    %v1800 = vpop.f32.mrf.mxu0
    %v1801 = vadd.f32 0.0, %v1800
    %v1802 = vpop.f32.mrf.mxu0
    %1803 = vmatprep.mubr.f32.mxu0 %v656
    %1804 = vmatmul.mubr.f32.gmra.mxu0 %v655
    %v1805 = vpop.f32.mrf.mxu0
    %v1806 = vadd.f32 0.0, %v1805
    %v1807 = vpop.f32.mrf.mxu0
    %1808 = vmatprep.mubr.f32.mxu0 %v658
    %1809 = vmatmul.mubr.f32.gmra.mxu0 %v657
    %v1810 = vpop.f32.mrf.mxu0
    %v1811 = vadd.f32 0.0, %v1810
    %v1812 = vpop.f32.mrf.mxu0
    %1813 = vmatprep.mubr.f32.mxu0 %v660
    %1814 = vmatmul.mubr.f32.gmra.mxu0 %v659
    %v1815 = vpop.f32.mrf.mxu0
    %v1816 = vadd.f32 0.0, %v1815
    %v1817 = vpop.f32.mrf.mxu0
    %1818 = vmatprep.mubr.f32.mxu0 %v662
    %1819 = vmatmul.mubr.f32.gmra.mxu0 %v661
    %v1820 = vpop.f32.mrf.mxu0
    %v1821 = vadd.f32 0.0, %v1820
    %v1822 = vpop.f32.mrf.mxu0
    %1823 = vmatprep.mubr.f32.mxu0 %v664
    %1824 = vmatmul.mubr.f32.gmra.mxu0 %v663
    %v1825 = vpop.f32.mrf.mxu0
    %v1826 = vadd.f32 0.0, %v1825
    %v1827 = vpop.f32.mrf.mxu0
    %1828 = vmatprep.mubr.f32.mxu0 %v666
    %1829 = vmatmul.mubr.f32.gmra.mxu0 %v665
    %v1830 = vpop.f32.mrf.mxu0
    %v1831 = vadd.f32 0.0, %v1830
    %v1832 = vpop.f32.mrf.mxu0
    %1833 = vmatprep.mubr.f32.mxu0 %v668
    %1834 = vmatmul.mubr.f32.gmra.mxu0 %v667
    %v1835 = vpop.f32.mrf.mxu0
    %v1836 = vadd.f32 0.0, %v1835
    %v1837 = vpop.f32.mrf.mxu0
    %1838 = vmatprep.mubr.f32.mxu0 %v670
    %1839 = vmatmul.mubr.f32.gmra.mxu0 %v669
    %v1840 = vpop.f32.mrf.mxu0
    %v1841 = vadd.f32 0.0, %v1840
    %v1842 = vpop.f32.mrf.mxu0
    %1843 = vmatprep.mubr.f32.mxu0 %v672
    %1844 = vmatmul.mubr.f32.gmra.mxu0 %v671
    %v1845 = vpop.f32.mrf.mxu0
    %v1846 = vadd.f32 0.0, %v1845
    %v1847 = vpop.f32.mrf.mxu0
    %1848 = vmatprep.mubr.f32.mxu0 %v674
    %1849 = vmatmul.mubr.f32.gmra.mxu0 %v673
    %v1850 = vpop.f32.mrf.mxu0
    %v1851 = vadd.f32 0.0, %v1850
    %v1852 = vpop.f32.mrf.mxu0
    %1853 = vmatprep.mubr.f32.mxu0 %v676
    %1854 = vmatmul.mubr.f32.gmra.mxu0 %v675
    %v1855 = vpop.f32.mrf.mxu0
    %v1856 = vadd.f32 0.0, %v1855
    %v1857 = vpop.f32.mrf.mxu0
    %1858 = vmatprep.mubr.f32.mxu0 %v678
    %1859 = vmatmul.mubr.f32.gmra.mxu0 %v677
    %v1860 = vpop.f32.mrf.mxu0
    %v1861 = vadd.f32 0.0, %v1860
    %v1862 = vpop.f32.mrf.mxu0
    %1863 = vmatprep.mubr.f32.mxu0 %v680
    %1864 = vmatmul.mubr.f32.gmra.mxu0 %v679
    %v1865 = vpop.f32.mrf.mxu0
    %v1866 = vadd.f32 0.0, %v1865
    %v1867 = vpop.f32.mrf.mxu0
    %1868 = vmatprep.mubr.f32.mxu0 %v682
    %1869 = vmatmul.mubr.f32.gmra.mxu0 %v681
    %v1870 = vpop.f32.mrf.mxu0
    %v1871 = vadd.f32 0.0, %v1870
    %v1872 = vpop.f32.mrf.mxu0
    %1873 = vmatprep.mubr.f32.mxu0 %v684
    %1874 = vmatmul.mubr.f32.gmra.mxu0 %v683
    %v1875 = vpop.f32.mrf.mxu0
    %v1876 = vadd.f32 0.0, %v1875
    %v1877 = vpop.f32.mrf.mxu0
    %1878 = vmatprep.mubr.f32.mxu0 %v686
    %1879 = vmatmul.mubr.f32.gmra.mxu0 %v685
    %v1880 = vpop.f32.mrf.mxu0
    %v1881 = vadd.f32 0.0, %v1880
    %v1882 = vpop.f32.mrf.mxu0
    %1883 = vmatprep.mubr.f32.mxu0 %v688
    %1884 = vmatmul.mubr.f32.gmra.mxu0 %v687
    %v1885 = vpop.f32.mrf.mxu0
    %v1886 = vadd.f32 0.0, %v1885
    %v1887 = vpop.f32.mrf.mxu0
    %1888 = vmatprep.mubr.f32.mxu0 %v690
    %1889 = vmatmul.mubr.f32.gmra.mxu0 %v689
    %v1890 = vpop.f32.mrf.mxu0
    %v1891 = vadd.f32 0.0, %v1890
    %v1892 = vpop.f32.mrf.mxu0
    %1893 = vmatprep.mubr.f32.mxu0 %v692
    %1894 = vmatmul.mubr.f32.gmra.mxu0 %v691
    %v1895 = vpop.f32.mrf.mxu0
    %v1896 = vadd.f32 0.0, %v1895
    %v1897 = vpop.f32.mrf.mxu0
    %1898 = vmatprep.mubr.f32.mxu0 %v694
    %1899 = vmatmul.mubr.f32.gmra.mxu0 %v693
    %v1900 = vpop.f32.mrf.mxu0
    %v1901 = vadd.f32 0.0, %v1900
    %v1902 = vpop.f32.mrf.mxu0
    %1903 = vmatprep.mubr.f32.mxu0 %v696
    %1904 = vmatmul.mubr.f32.gmra.mxu0 %v695
    %v1905 = vpop.f32.mrf.mxu0
    %v1906 = vadd.f32 0.0, %v1905
    %v1907 = vpop.f32.mrf.mxu0
    %1908 = vmatprep.mubr.f32.mxu0 %v698
    %1909 = vmatmul.mubr.f32.gmra.mxu0 %v697
    %v1910 = vpop.f32.mrf.mxu0
    %v1911 = vadd.f32 0.0, %v1910
    %v1912 = vpop.f32.mrf.mxu0
    %1913 = vmatprep.mubr.f32.mxu0 %v700
    %1914 = vmatmul.mubr.f32.gmra.mxu0 %v699
    %v1915 = vpop.f32.mrf.mxu0
    %v1916 = vadd.f32 0.0, %v1915
    %v1917 = vpop.f32.mrf.mxu0
    %1918 = vmatprep.mubr.f32.mxu0 %v702
    %1919 = vmatmul.mubr.f32.gmra.mxu0 %v701
    %v1920 = vpop.f32.mrf.mxu0
    %v1921 = vadd.f32 0.0, %v1920
    %v1922 = vpop.f32.mrf.mxu0
    %1923 = vmatprep.mubr.f32.mxu0 %v704
    %1924 = vmatmul.mubr.f32.gmra.mxu0 %v703
    %v1925 = vpop.f32.mrf.mxu0
    %v1926 = vadd.f32 0.0, %v1925
    %v1927 = vpop.f32.mrf.mxu0
    %1928 = vmatprep.mubr.f32.mxu0 %v706
    %1929 = vmatmul.mubr.f32.gmra.mxu0 %v705
    %v1930 = vpop.f32.mrf.mxu0
    %v1931 = vadd.f32 0.0, %v1930
    %v1932 = vpop.f32.mrf.mxu0
    %1933 = vmatprep.mubr.f32.mxu0 %v708
    %1934 = vmatmul.mubr.f32.gmra.mxu0 %v707
    %v1935 = vpop.f32.mrf.mxu0
    %v1936 = vadd.f32 0.0, %v1935
    %v1937 = vpop.f32.mrf.mxu0
    %1938 = vmatprep.mubr.f32.mxu0 %v710
    %1939 = vmatmul.mubr.f32.gmra.mxu0 %v709
    %v1940 = vpop.f32.mrf.mxu0
    %v1941 = vadd.f32 0.0, %v1940
    %v1942 = vpop.f32.mrf.mxu0
    %1943 = vmatprep.mubr.f32.mxu0 %v712
    %1944 = vmatmul.mubr.f32.gmra.mxu0 %v711
    %v1945 = vpop.f32.mrf.mxu0
    %v1946 = vadd.f32 0.0, %v1945
    %v1947 = vpop.f32.mrf.mxu0
    %1948 = vmatprep.mubr.f32.mxu0 %v714
    %1949 = vmatmul.mubr.f32.gmra.mxu0 %v713
    %v1950 = vpop.f32.mrf.mxu0
    %v1951 = vadd.f32 0.0, %v1950
    %v1952 = vpop.f32.mrf.mxu0
    %1953 = vmatprep.mubr.f32.mxu0 %v716
    %1954 = vmatmul.mubr.f32.gmra.mxu0 %v715
    %v1955 = vpop.f32.mrf.mxu0
    %v1956 = vadd.f32 0.0, %v1955
    %v1957 = vpop.f32.mrf.mxu0
    %1958 = vmatprep.mubr.f32.mxu0 %v718
    %1959 = vmatmul.mubr.f32.gmra.mxu0 %v717
    %v1960 = vpop.f32.mrf.mxu0
    %v1961 = vadd.f32 0.0, %v1960
    %v1962 = vpop.f32.mrf.mxu0
    %1963 = vmatprep.mubr.f32.mxu0 %v720
    %1964 = vmatmul.mubr.f32.gmra.mxu0 %v719
    %v1965 = vpop.f32.mrf.mxu0
    %v1966 = vadd.f32 0.0, %v1965
    %v1967 = vpop.f32.mrf.mxu0
    %1968 = vmatprep.mubr.f32.mxu0 %v722
    %1969 = vmatmul.mubr.f32.gmra.mxu0 %v721
    %v1970 = vpop.f32.mrf.mxu0
    %v1971 = vadd.f32 0.0, %v1970
    %v1972 = vpop.f32.mrf.mxu0
    %1973 = vmatprep.mubr.f32.mxu0 %v724
    %1974 = vmatmul.mubr.f32.gmra.mxu0 %v723
    %v1975 = vpop.f32.mrf.mxu0
    %v1976 = vadd.f32 0.0, %v1975
    %v1977 = vpop.f32.mrf.mxu0
    %1978 = vmatprep.mubr.f32.mxu0 %v726
    %1979 = vmatmul.mubr.f32.gmra.mxu0 %v725
    %v1980 = vpop.f32.mrf.mxu0
    %v1981 = vadd.f32 0.0, %v1980
    %v1982 = vpop.f32.mrf.mxu0
    %1983 = vmatprep.mubr.f32.mxu0 %v728
    %1984 = vmatmul.mubr.f32.gmra.mxu0 %v727
    %v1985 = vpop.f32.mrf.mxu0
    %v1986 = vadd.f32 0.0, %v1985
    %v1987 = vpop.f32.mrf.mxu0
    %1988 = vmatprep.mubr.f32.mxu0 %v730
    %1989 = vmatmul.mubr.f32.gmra.mxu0 %v729
    %v1990 = vpop.f32.mrf.mxu0
    %v1991 = vadd.f32 0.0, %v1990
    %v1992 = vpop.f32.mrf.mxu0
    %1993 = vmatprep.mubr.f32.mxu0 %v732
    %1994 = vmatmul.mubr.f32.gmra.mxu0 %v731
    %v1995 = vpop.f32.mrf.mxu0
    %v1996 = vadd.f32 0.0, %v1995
    %v1997 = vpop.f32.mrf.mxu0
    %1998 = vmatprep.mubr.f32.mxu0 %v734
    %1999 = vmatmul.mubr.f32.gmra.mxu0 %v733
    %v2000 = vpop.f32.mrf.mxu0
    %v2001 = vadd.f32 0.0, %v2000
    %v2002 = vpop.f32.mrf.mxu0
    %2003 = vmatprep.mubr.f32.mxu0 %v736
    %2004 = vmatmul.mubr.f32.gmra.mxu0 %v735
    %v2005 = vpop.f32.mrf.mxu0
    %v2006 = vadd.f32 0.0, %v2005
    %v2007 = vpop.f32.mrf.mxu0
    %2008 = vmatprep.mubr.f32.mxu0 %v738
    %2009 = vmatmul.mubr.f32.gmra.mxu0 %v737
    %v2010 = vpop.f32.mrf.mxu0
    %v2011 = vadd.f32 0.0, %v2010
    %v2012 = vpop.f32.mrf.mxu0
    %2013 = vmatprep.mubr.f32.mxu0 %v740
    %2014 = vmatmul.mubr.f32.gmra.mxu0 %v739
    %v2015 = vpop.f32.mrf.mxu0
    %v2016 = vadd.f32 0.0, %v2015
    %v2017 = vpop.f32.mrf.mxu0
    %2018 = vmatprep.mubr.f32.mxu0 %v742
    %2019 = vmatmul.mubr.f32.gmra.mxu0 %v741
    %v2020 = vpop.f32.mrf.mxu0
    %v2021 = vadd.f32 0.0, %v2020
    %v2022 = vpop.f32.mrf.mxu0
    %2023 = vmatprep.mubr.f32.mxu0 %v744
    %2024 = vmatmul.mubr.f32.gmra.mxu0 %v743
    %v2025 = vpop.f32.mrf.mxu0
    %v2026 = vadd.f32 0.0, %v2025
    %v2027 = vpop.f32.mrf.mxu0
    %2028 = vmatprep.mubr.f32.mxu0 %v746
    %2029 = vmatmul.mubr.f32.gmra.mxu0 %v745
    %v2030 = vpop.f32.mrf.mxu0
    %v2031 = vadd.f32 0.0, %v2030
    %v2032 = vpop.f32.mrf.mxu0
    %2033 = vmatprep.mubr.f32.mxu0 %v748
    %2034 = vmatmul.mubr.f32.gmra.mxu0 %v747
    %v2035 = vpop.f32.mrf.mxu0
    %v2036 = vadd.f32 0.0, %v2035
    %v2037 = vpop.f32.mrf.mxu0
    %2038 = vmatprep.mubr.f32.mxu0 %v750
    %2039 = vmatmul.mubr.f32.gmra.mxu0 %v749
    %v2040 = vpop.f32.mrf.mxu0
    %v2041 = vadd.f32 0.0, %v2040
    %v2042 = vpop.f32.mrf.mxu0
    %2043 = vmatprep.mubr.f32.mxu0 %v752
    %2044 = vmatmul.mubr.f32.gmra.mxu0 %v751
    %v2045 = vpop.f32.mrf.mxu0
    %v2046 = vadd.f32 0.0, %v2045
    %v2047 = vpop.f32.mrf.mxu0
    %2048 = vmatprep.mubr.f32.mxu0 %v754
    %2049 = vmatmul.mubr.f32.gmra.mxu0 %v753
    %v2050 = vpop.f32.mrf.mxu0
    %v2051 = vadd.f32 0.0, %v2050
    %v2052 = vpop.f32.mrf.mxu0
    %2053 = vmatprep.mubr.f32.mxu0 %v756
    %2054 = vmatmul.mubr.f32.gmra.mxu0 %v755
    %v2055 = vpop.f32.mrf.mxu0
    %v2056 = vadd.f32 0.0, %v2055
    %v2057 = vpop.f32.mrf.mxu0
    %2058 = vmatprep.mubr.f32.mxu0 %v758
    %2059 = vmatmul.mubr.f32.gmra.mxu0 %v757
    %v2060 = vpop.f32.mrf.mxu0
    %v2061 = vadd.f32 0.0, %v2060
    %v2062 = vpop.f32.mrf.mxu0
    %2063 = vmatprep.mubr.f32.mxu0 %v760
    %2064 = vmatmul.mubr.f32.gmra.mxu0 %v759
    %v2065 = vpop.f32.mrf.mxu0
    %v2066 = vadd.f32 0.0, %v2065
    %v2067 = vpop.f32.mrf.mxu0
    %2068 = vmatprep.mubr.f32.mxu0 %v762
    %2069 = vmatmul.mubr.f32.gmra.mxu0 %v761
    %v2070 = vpop.f32.mrf.mxu0
    %v2071 = vadd.f32 0.0, %v2070
    %v2072 = vpop.f32.mrf.mxu0
    %2073 = vmatprep.mubr.f32.mxu0 %v764
    %2074 = vmatmul.mubr.f32.gmra.mxu0 %v763
    %v2075 = vpop.f32.mrf.mxu0
    %v2076 = vadd.f32 0.0, %v2075
    %v2077 = vpop.f32.mrf.mxu0
    %2078 = vmatprep.mubr.f32.mxu0 %v766
    %2079 = vmatmul.mubr.f32.gmra.mxu0 %v765
    %v2080 = vpop.f32.mrf.mxu0
    %v2081 = vadd.f32 0.0, %v2080
    %v2082 = vpop.f32.mrf.mxu0
    %2083 = vmatprep.mubr.f32.mxu0 %v768
    %2084 = vmatmul.mubr.f32.gmra.mxu0 %v767
    %v2085 = vpop.f32.mrf.mxu0
    %v2086 = vadd.f32 0.0, %v2085
    %v2087 = vpop.f32.mrf.mxu0
    %2088 = vmatprep.mubr.f32.mxu0 %v770
    %2089 = vmatmul.mubr.f32.gmra.mxu0 %v769
    %v2090 = vpop.f32.mrf.mxu0
    %v2091 = vadd.f32 0.0, %v2090
    %v2092 = vpop.f32.mrf.mxu0
    %2093 = vmatprep.mubr.f32.mxu0 %v772
    %2094 = vmatmul.mubr.f32.gmra.mxu0 %v771
    %v2095 = vpop.f32.mrf.mxu0
    %v2096 = vadd.f32 0.0, %v2095
    %v2097 = vpop.f32.mrf.mxu0
    %2098 = vmatprep.mubr.f32.mxu0 %v774
    %2099 = vmatmul.mubr.f32.gmra.mxu0 %v773
    %v2100 = vpop.f32.mrf.mxu0
    %v2101 = vadd.f32 0.0, %v2100
    %v2102 = vpop.f32.mrf.mxu0
    %2103 = vmatprep.mubr.f32.mxu0 %v776
    %2104 = vmatmul.mubr.f32.gmra.mxu0 %v775
    %v2105 = vpop.f32.mrf.mxu0
    %v2106 = vadd.f32 0.0, %v2105
    %v2107 = vpop.f32.mrf.mxu0
    %2108 = vmatprep.mubr.f32.mxu0 %v778
    %2109 = vmatmul.mubr.f32.gmra.mxu0 %v777
    %v2110 = vpop.f32.mrf.mxu0
    %v2111 = vadd.f32 0.0, %v2110
    %v2112 = vpop.f32.mrf.mxu0
    %2113 = vmatprep.mubr.f32.mxu0 %v780
    %2114 = vmatmul.mubr.f32.gmra.mxu0 %v779
    %v2115 = vpop.f32.mrf.mxu0
    %v2116 = vadd.f32 0.0, %v2115
    %v2117 = vpop.f32.mrf.mxu0
    %2118 = vmatprep.mubr.f32.mxu0 %v782
    %2119 = vmatmul.mubr.f32.gmra.mxu0 %v781
    %v2120 = vpop.f32.mrf.mxu0
    %v2121 = vadd.f32 0.0, %v2120
    %v2122 = vpop.f32.mrf.mxu0
    %2123 = vmatprep.mubr.f32.mxu0 %v784
    %2124 = vmatmul.mubr.f32.gmra.mxu0 %v783
    %v2125 = vpop.f32.mrf.mxu0
    %v2126 = vadd.f32 0.0, %v2125
    %v2127 = vpop.f32.mrf.mxu0
    %2128 = vmatprep.mubr.f32.mxu0 %v786
    %2129 = vmatmul.mubr.f32.gmra.mxu0 %v785
    %v2130 = vpop.f32.mrf.mxu0
    %v2131 = vadd.f32 0.0, %v2130
    %v2132 = vpop.f32.mrf.mxu0
    %2133 = vmatprep.mubr.f32.mxu0 %v788
    %2134 = vmatmul.mubr.f32.gmra.mxu0 %v787
    %v2135 = vpop.f32.mrf.mxu0
    %v2136 = vadd.f32 0.0, %v2135
    %v2137 = vpop.f32.mrf.mxu0
    %2138 = vmatprep.mubr.f32.mxu0 %v790
    %2139 = vmatmul.mubr.f32.gmra.mxu0 %v789
    %v2140 = vpop.f32.mrf.mxu0
    %v2141 = vadd.f32 0.0, %v2140
    %v2142 = vpop.f32.mrf.mxu0
    %2143 = vmatprep.mubr.f32.mxu0 %v792
    %2144 = vmatmul.mubr.f32.gmra.mxu0 %v791
    %v2145 = vpop.f32.mrf.mxu0
    %v2146 = vadd.f32 0.0, %v2145
    %v2147 = vpop.f32.mrf.mxu0
    %2148 = vmatprep.mubr.f32.mxu0 %v794
    %2149 = vmatmul.mubr.f32.gmra.mxu0 %v793
    %v2150 = vpop.f32.mrf.mxu0
    %v2151 = vadd.f32 0.0, %v2150
    %v2152 = vpop.f32.mrf.mxu0
    %2153 = vmatprep.mubr.f32.mxu0 %v796
    %2154 = vmatmul.mubr.f32.gmra.mxu0 %v795
    %v2155 = vpop.f32.mrf.mxu0
    %v2156 = vadd.f32 0.0, %v2155
    %v2157 = vpop.f32.mrf.mxu0
    %2158 = vmatprep.mubr.f32.mxu0 %v798
    %2159 = vmatmul.mubr.f32.gmra.mxu0 %v797
    %v2160 = vpop.f32.mrf.mxu0
    %v2161 = vadd.f32 0.0, %v2160
    %v2162 = vpop.f32.mrf.mxu0
    %2163 = vmatprep.mubr.f32.mxu0 %v800
    %2164 = vmatmul.mubr.f32.gmra.mxu0 %v799
    %v2165 = vpop.f32.mrf.mxu0
    %v2166 = vadd.f32 0.0, %v2165
    %v2167 = vpop.f32.mrf.mxu0
    %2168 = vmatprep.mubr.f32.mxu0 %v802
    %2169 = vmatmul.mubr.f32.gmra.mxu0 %v801
    %v2170 = vpop.f32.mrf.mxu0
    %v2171 = vadd.f32 0.0, %v2170
    %v2172 = vpop.f32.mrf.mxu0
    %2173 = vmatprep.mubr.f32.mxu0 %v804
    %2174 = vmatmul.mubr.f32.gmra.mxu0 %v803
    %v2175 = vpop.f32.mrf.mxu0
    %v2176 = vadd.f32 0.0, %v2175
    %v2177 = vpop.f32.mrf.mxu0
    %2178 = vmatprep.mubr.f32.mxu0 %v806
    %2179 = vmatmul.mubr.f32.gmra.mxu0 %v805
    %v2180 = vpop.f32.mrf.mxu0
    %v2181 = vadd.f32 0.0, %v2180
    %v2182 = vpop.f32.mrf.mxu0
    %2183 = vdwg.mxu0
    %v2184 = vmax.f32 %v906, %v1226
    %v2185 = vmax.f32 %v911, %v1231
    %v2186 = vmax.f32 %v916, %v1236
    %v2187 = vmax.f32 %v921, %v1241
    %v2188 = vmax.f32 %v926, %v1246
    %v2189 = vmax.f32 %v931, %v1251
    %v2190 = vmax.f32 %v936, %v1256
    %v2191 = vmax.f32 %v941, %v1261
    %v2192 = vmax.f32 %v946, %v1266
    %v2193 = vmax.f32 %v951, %v1271
    %v2194 = vmax.f32 %v956, %v1276
    %v2195 = vmax.f32 %v961, %v1281
    %v2196 = vmax.f32 %v966, %v1286
    %v2197 = vmax.f32 %v971, %v1291
    %v2198 = vmax.f32 %v976, %v1296
    %v2199 = vmax.f32 %v981, %v1301
    %v2200 = vmax.f32 %v986, %v1306
    %v2201 = vmax.f32 %v991, %v1311
    %v2202 = vmax.f32 %v996, %v1316
    %v2203 = vmax.f32 %v1001, %v1321
    %v2204 = vmax.f32 %v1006, %v1326
    %v2205 = vmax.f32 %v1011, %v1331
    %v2206 = vmax.f32 %v1016, %v1336
    %v2207 = vmax.f32 %v1021, %v1341
    %v2208 = vmax.f32 %v1026, %v1346
    %v2209 = vmax.f32 %v1031, %v1351
    %v2210 = vmax.f32 %v1036, %v1356
    %v2211 = vmax.f32 %v1041, %v1361
    %v2212 = vmax.f32 %v1046, %v1366
    %v2213 = vmax.f32 %v1051, %v1371
    %v2214 = vmax.f32 %v1056, %v1376
    %v2215 = vmax.f32 %v1061, %v1381
    %v2216 = vmax.f32 %v1066, %v1386
    %v2217 = vmax.f32 %v1071, %v1391
    %v2218 = vmax.f32 %v1076, %v1396
    %v2219 = vmax.f32 %v1081, %v1401
    %v2220 = vmax.f32 %v1086, %v1406
    %v2221 = vmax.f32 %v1091, %v1411
    %v2222 = vmax.f32 %v1096, %v1416
    %v2223 = vmax.f32 %v1101, %v1421
    %v2224 = vmax.f32 %v1106, %v1426
    %v2225 = vmax.f32 %v1111, %v1431
    %v2226 = vmax.f32 %v1116, %v1436
    %v2227 = vmax.f32 %v1121, %v1441
    %v2228 = vmax.f32 %v1126, %v1446
    %v2229 = vmax.f32 %v1131, %v1451
    %v2230 = vmax.f32 %v1136, %v1456
    %v2231 = vmax.f32 %v1141, %v1461
    %v2232 = vmax.f32 %v1146, %v1466
    %v2233 = vmax.f32 %v1151, %v1471
    %v2234 = vmax.f32 %v1156, %v1476
    %v2235 = vmax.f32 %v1161, %v1481
    %v2236 = vmax.f32 %v1166, %v1486
    %v2237 = vmax.f32 %v1171, %v1491
    %v2238 = vmax.f32 %v1176, %v1496
    %v2239 = vmax.f32 %v1181, %v1501
    %v2240 = vmax.f32 %v1186, %v1506
    %v2241 = vmax.f32 %v1191, %v1511
    %v2242 = vmax.f32 %v1196, %v1516
    %v2243 = vmax.f32 %v1201, %v1521
    %v2244 = vmax.f32 %v1206, %v1526
    %v2245 = vmax.f32 %v1211, %v1531
    %v2246 = vmax.f32 %v1216, %v1536
    %v2247 = vmax.f32 %v1221, %v1541
    %v2248 = vmax.f32 %v1546, %v1866
    %v2249 = vmax.f32 %v1551, %v1871
    %v2250 = vmax.f32 %v1556, %v1876
    %v2251 = vmax.f32 %v1561, %v1881
    %v2252 = vmax.f32 %v1566, %v1886
    %v2253 = vmax.f32 %v1571, %v1891
    %v2254 = vmax.f32 %v1576, %v1896
    %v2255 = vmax.f32 %v1581, %v1901
    %v2256 = vmax.f32 %v1586, %v1906
    %v2257 = vmax.f32 %v1591, %v1911
    %v2258 = vmax.f32 %v1596, %v1916
    %v2259 = vmax.f32 %v1601, %v1921
    %v2260 = vmax.f32 %v1606, %v1926
    %v2261 = vmax.f32 %v1611, %v1931
    %v2262 = vmax.f32 %v1616, %v1936
    %v2263 = vmax.f32 %v1621, %v1941
    %v2264 = vmax.f32 %v1626, %v1946
    %v2265 = vmax.f32 %v1631, %v1951
    %v2266 = vmax.f32 %v1636, %v1956
    %v2267 = vmax.f32 %v1641, %v1961
    %v2268 = vmax.f32 %v1646, %v1966
    %v2269 = vmax.f32 %v1651, %v1971
    %v2270 = vmax.f32 %v1656, %v1976
    %v2271 = vmax.f32 %v1661, %v1981
    %v2272 = vmax.f32 %v1666, %v1986
    %v2273 = vmax.f32 %v1671, %v1991
    %v2274 = vmax.f32 %v1676, %v1996
    %v2275 = vmax.f32 %v1681, %v2001
    %v2276 = vmax.f32 %v1686, %v2006
    %v2277 = vmax.f32 %v1691, %v2011
    %v2278 = vmax.f32 %v1696, %v2016
    %v2279 = vmax.f32 %v1701, %v2021
    %v2280 = vmax.f32 %v1706, %v2026
    %v2281 = vmax.f32 %v1711, %v2031
    %v2282 = vmax.f32 %v1716, %v2036
    %v2283 = vmax.f32 %v1721, %v2041
    %v2284 = vmax.f32 %v1726, %v2046
    %v2285 = vmax.f32 %v1731, %v2051
    %v2286 = vmax.f32 %v1736, %v2056
    %v2287 = vmax.f32 %v1741, %v2061
    %v2288 = vmax.f32 %v1746, %v2066
    %v2289 = vmax.f32 %v1751, %v2071
    %v2290 = vmax.f32 %v1756, %v2076
    %v2291 = vmax.f32 %v1761, %v2081
    %v2292 = vmax.f32 %v1766, %v2086
    %v2293 = vmax.f32 %v1771, %v2091
    %v2294 = vmax.f32 %v1776, %v2096
    %v2295 = vmax.f32 %v1781, %v2101
    %v2296 = vmax.f32 %v1786, %v2106
    %v2297 = vmax.f32 %v1791, %v2111
    %v2298 = vmax.f32 %v1796, %v2116
    %v2299 = vmax.f32 %v1801, %v2121
    %v2300 = vmax.f32 %v1806, %v2126
    %v2301 = vmax.f32 %v1811, %v2131
    %v2302 = vmax.f32 %v1816, %v2136
    %v2303 = vmax.f32 %v1821, %v2141
    %v2304 = vmax.f32 %v1826, %v2146
    %v2305 = vmax.f32 %v1831, %v2151
    %v2306 = vmax.f32 %v1836, %v2156
    %v2307 = vmax.f32 %v1841, %v2161
    %v2308 = vmax.f32 %v1846, %v2166
    %v2309 = vmax.f32 %v1851, %v2171
    %v2310 = vmax.f32 %v1856, %v2176
    %v2311 = vmax.f32 %v1861, %v2181
    %v2312 = vmax.f32 %v2184, %v2248
    %v2313 = vmax.f32 %v2185, %v2249
    %v2314 = vmax.f32 %v2186, %v2250
    %v2315 = vmax.f32 %v2187, %v2251
    %v2316 = vmax.f32 %v2188, %v2252
    %v2317 = vmax.f32 %v2189, %v2253
    %v2318 = vmax.f32 %v2190, %v2254
    %v2319 = vmax.f32 %v2191, %v2255
    %v2320 = vmax.f32 %v2192, %v2256
    %v2321 = vmax.f32 %v2193, %v2257
    %v2322 = vmax.f32 %v2194, %v2258
    %v2323 = vmax.f32 %v2195, %v2259
    %v2324 = vmax.f32 %v2196, %v2260
    %v2325 = vmax.f32 %v2197, %v2261
    %v2326 = vmax.f32 %v2198, %v2262
    %v2327 = vmax.f32 %v2199, %v2263
    %v2328 = vmax.f32 %v2200, %v2264
    %v2329 = vmax.f32 %v2201, %v2265
    %v2330 = vmax.f32 %v2202, %v2266
    %v2331 = vmax.f32 %v2203, %v2267
    %v2332 = vmax.f32 %v2204, %v2268
    %v2333 = vmax.f32 %v2205, %v2269
    %v2334 = vmax.f32 %v2206, %v2270
    %v2335 = vmax.f32 %v2207, %v2271
    %v2336 = vmax.f32 %v2208, %v2272
    %v2337 = vmax.f32 %v2209, %v2273
    %v2338 = vmax.f32 %v2210, %v2274
    %v2339 = vmax.f32 %v2211, %v2275
    %v2340 = vmax.f32 %v2212, %v2276
    %v2341 = vmax.f32 %v2213, %v2277
    %v2342 = vmax.f32 %v2214, %v2278
    %v2343 = vmax.f32 %v2215, %v2279
    %v2344 = vmax.f32 %v2216, %v2280
    %v2345 = vmax.f32 %v2217, %v2281
    %v2346 = vmax.f32 %v2218, %v2282
    %v2347 = vmax.f32 %v2219, %v2283
    %v2348 = vmax.f32 %v2220, %v2284
    %v2349 = vmax.f32 %v2221, %v2285
    %v2350 = vmax.f32 %v2222, %v2286
    %v2351 = vmax.f32 %v2223, %v2287
    %v2352 = vmax.f32 %v2224, %v2288
    %v2353 = vmax.f32 %v2225, %v2289
    %v2354 = vmax.f32 %v2226, %v2290
    %v2355 = vmax.f32 %v2227, %v2291
    %v2356 = vmax.f32 %v2228, %v2292
    %v2357 = vmax.f32 %v2229, %v2293
    %v2358 = vmax.f32 %v2230, %v2294
    %v2359 = vmax.f32 %v2231, %v2295
    %v2360 = vmax.f32 %v2232, %v2296
    %v2361 = vmax.f32 %v2233, %v2297
    %v2362 = vmax.f32 %v2234, %v2298
    %v2363 = vmax.f32 %v2235, %v2299
    %v2364 = vmax.f32 %v2236, %v2300
    %v2365 = vmax.f32 %v2237, %v2301
    %v2366 = vmax.f32 %v2238, %v2302
    %v2367 = vmax.f32 %v2239, %v2303
    %v2368 = vmax.f32 %v2240, %v2304
    %v2369 = vmax.f32 %v2241, %v2305
    %v2370 = vmax.f32 %v2242, %v2306
    %v2371 = vmax.f32 %v2243, %v2307
    %v2372 = vmax.f32 %v2244, %v2308
    %v2373 = vmax.f32 %v2245, %v2309
    %v2374 = vmax.f32 %v2246, %v2310
    %v2375 = vmax.f32 %v2247, %v2311
    %v2376 = vld [vmem:[%s2] sm:$0x1]
    %v2378 = vlaneseq
    %v2379 = vshrl.u32 %v2378, 7
    %v2380 = vsub.s32 0, %v2379
    %v2381 = vrot.slane %v2376, %v2380
    %v2383 = vadd.f32 %v2312, %v2381
    %v2384 = vadd.f32 %v2313, %v2381
    %v2385 = vadd.f32 %v2314, %v2381
    %v2386 = vadd.f32 %v2315, %v2381
    %v2387 = vadd.f32 %v2316, %v2381
    %v2388 = vadd.f32 %v2317, %v2381
    %v2389 = vadd.f32 %v2318, %v2381
    %v2390 = vadd.f32 %v2319, %v2381
    %v2391 = vadd.f32 %v2320, %v2381
    %v2392 = vadd.f32 %v2321, %v2381
    %v2393 = vadd.f32 %v2322, %v2381
    %v2394 = vadd.f32 %v2323, %v2381
    %v2395 = vadd.f32 %v2324, %v2381
    %v2396 = vadd.f32 %v2325, %v2381
    %v2397 = vadd.f32 %v2326, %v2381
    %v2398 = vadd.f32 %v2327, %v2381
    %v2399 = vadd.f32 %v2328, %v2381
    %v2400 = vadd.f32 %v2329, %v2381
    %v2401 = vadd.f32 %v2330, %v2381
    %v2402 = vadd.f32 %v2331, %v2381
    %v2403 = vadd.f32 %v2332, %v2381
    %v2404 = vadd.f32 %v2333, %v2381
    %v2405 = vadd.f32 %v2334, %v2381
    %v2406 = vadd.f32 %v2335, %v2381
    %v2407 = vadd.f32 %v2336, %v2381
    %v2408 = vadd.f32 %v2337, %v2381
    %v2409 = vadd.f32 %v2338, %v2381
    %v2410 = vadd.f32 %v2339, %v2381
    %v2411 = vadd.f32 %v2340, %v2381
    %v2412 = vadd.f32 %v2341, %v2381
    %v2413 = vadd.f32 %v2342, %v2381
    %v2414 = vadd.f32 %v2343, %v2381
    %v2415 = vadd.f32 %v2344, %v2381
    %v2416 = vadd.f32 %v2345, %v2381
    %v2417 = vadd.f32 %v2346, %v2381
    %v2418 = vadd.f32 %v2347, %v2381
    %v2419 = vadd.f32 %v2348, %v2381
    %v2420 = vadd.f32 %v2349, %v2381
    %v2421 = vadd.f32 %v2350, %v2381
    %v2422 = vadd.f32 %v2351, %v2381
    %v2423 = vadd.f32 %v2352, %v2381
    %v2424 = vadd.f32 %v2353, %v2381
    %v2425 = vadd.f32 %v2354, %v2381
    %v2426 = vadd.f32 %v2355, %v2381
    %v2427 = vadd.f32 %v2356, %v2381
    %v2428 = vadd.f32 %v2357, %v2381
    %v2429 = vadd.f32 %v2358, %v2381
    %v2430 = vadd.f32 %v2359, %v2381
    %v2431 = vadd.f32 %v2360, %v2381
    %v2432 = vadd.f32 %v2361, %v2381
    %v2433 = vadd.f32 %v2362, %v2381
    %v2434 = vadd.f32 %v2363, %v2381
    %v2435 = vadd.f32 %v2364, %v2381
    %v2436 = vadd.f32 %v2365, %v2381
    %v2437 = vadd.f32 %v2366, %v2381
    %v2438 = vadd.f32 %v2367, %v2381
    %v2439 = vadd.f32 %v2368, %v2381
    %v2440 = vadd.f32 %v2369, %v2381
    %v2441 = vadd.f32 %v2370, %v2381
    %v2442 = vadd.f32 %v2371, %v2381
    %v2443 = vadd.f32 %v2372, %v2381
    %v2444 = vadd.f32 %v2373, %v2381
    %v2445 = vadd.f32 %v2374, %v2381
    %v2446 = vadd.f32 %v2375, %v2381
    %v2447 = vmax.f32 %v2383, 0.0
    %v2448 = vmax.f32 %v2384, 0.0
    %v2449 = vmax.f32 %v2385, 0.0
    %v2450 = vmax.f32 %v2386, 0.0
    %v2451 = vmax.f32 %v2387, 0.0
    %v2452 = vmax.f32 %v2388, 0.0
    %v2453 = vmax.f32 %v2389, 0.0
    %v2454 = vmax.f32 %v2390, 0.0
    %v2455 = vmax.f32 %v2391, 0.0
    %v2456 = vmax.f32 %v2392, 0.0
    %v2457 = vmax.f32 %v2393, 0.0
    %v2458 = vmax.f32 %v2394, 0.0
    %v2459 = vmax.f32 %v2395, 0.0
    %v2460 = vmax.f32 %v2396, 0.0
    %v2461 = vmax.f32 %v2397, 0.0
    %v2462 = vmax.f32 %v2398, 0.0
    %v2463 = vmax.f32 %v2399, 0.0
    %v2464 = vmax.f32 %v2400, 0.0
    %v2465 = vmax.f32 %v2401, 0.0
    %v2466 = vmax.f32 %v2402, 0.0
    %v2467 = vmax.f32 %v2403, 0.0
    %v2468 = vmax.f32 %v2404, 0.0
    %v2469 = vmax.f32 %v2405, 0.0
    %v2470 = vmax.f32 %v2406, 0.0
    %v2471 = vmax.f32 %v2407, 0.0
    %v2472 = vmax.f32 %v2408, 0.0
    %v2473 = vmax.f32 %v2409, 0.0
    %v2474 = vmax.f32 %v2410, 0.0
    %v2475 = vmax.f32 %v2411, 0.0
    %v2476 = vmax.f32 %v2412, 0.0
    %v2477 = vmax.f32 %v2413, 0.0
    %v2478 = vmax.f32 %v2414, 0.0
    %v2479 = vmax.f32 %v2415, 0.0
    %v2480 = vmax.f32 %v2416, 0.0
    %v2481 = vmax.f32 %v2417, 0.0
    %v2482 = vmax.f32 %v2418, 0.0
    %v2483 = vmax.f32 %v2419, 0.0
    %v2484 = vmax.f32 %v2420, 0.0
    %v2485 = vmax.f32 %v2421, 0.0
    %v2486 = vmax.f32 %v2422, 0.0
    %v2487 = vmax.f32 %v2423, 0.0
    %v2488 = vmax.f32 %v2424, 0.0
    %v2489 = vmax.f32 %v2425, 0.0
    %v2490 = vmax.f32 %v2426, 0.0
    %v2491 = vmax.f32 %v2427, 0.0
    %v2492 = vmax.f32 %v2428, 0.0
    %v2493 = vmax.f32 %v2429, 0.0
    %v2494 = vmax.f32 %v2430, 0.0
    %v2495 = vmax.f32 %v2431, 0.0
    %v2496 = vmax.f32 %v2432, 0.0
    %v2497 = vmax.f32 %v2433, 0.0
    %v2498 = vmax.f32 %v2434, 0.0
    %v2499 = vmax.f32 %v2435, 0.0
    %v2500 = vmax.f32 %v2436, 0.0
    %v2501 = vmax.f32 %v2437, 0.0
    %v2502 = vmax.f32 %v2438, 0.0
    %v2503 = vmax.f32 %v2439, 0.0
    %v2504 = vmax.f32 %v2440, 0.0
    %v2505 = vmax.f32 %v2441, 0.0
    %v2506 = vmax.f32 %v2442, 0.0
    %v2507 = vmax.f32 %v2443, 0.0
    %v2508 = vmax.f32 %v2444, 0.0
    %v2509 = vmax.f32 %v2445, 0.0
    %v2510 = vmax.f32 %v2446, 0.0
    %vm2511 = vcmask 130048
    %2512 = vst.msk [vmem:[#allocation2] sm:$0xff] %vm2511, %v2447
    %2513 = vst.msk [vmem:[#allocation2 + $0x10] sm:$0xff] %vm2511, %v2448
    %2514 = vst.msk [vmem:[#allocation2 + $0x20] sm:$0xff] %vm2511, %v2449
    %2515 = vst.msk [vmem:[#allocation2 + $0x30] sm:$0xff] %vm2511, %v2450
    %2520 = vrot.lane.b32.xlu0 %v2451, 16
    %v2521 = vpop.permute.xlu0 %2520
    %2522 = vrot.lane.b32.xlu0 %v2452, 16
    %v2523 = vpop.permute.xlu0 %2522
    %2524 = vrot.lane.b32.xlu0 %v2453, 16
    %v2525 = vpop.permute.xlu0 %2524
    %2526 = vrot.lane.b32.xlu0 %v2454, 16
    %v2527 = vpop.permute.xlu0 %2526
    %vm2532 = vcmask 261248
    %2533 = vst.msk [vmem:[#allocation2] sm:$0xff] %vm2532, %v2521
    %2534 = vst.msk [vmem:[#allocation2 + $0x10] sm:$0xff] %vm2532, %v2523
    %2535 = vst.msk [vmem:[#allocation2 + $0x20] sm:$0xff] %vm2532, %v2525
    %2536 = vst.msk [vmem:[#allocation2 + $0x30] sm:$0xff] %vm2532, %v2527
    %2541 = vrot.lane.b32.xlu0 %v2455, 32
    %v2542 = vpop.permute.xlu0 %2541
    %2543 = vrot.lane.b32.xlu0 %v2456, 32
    %v2544 = vpop.permute.xlu0 %2543
    %2545 = vrot.lane.b32.xlu0 %v2457, 32
    %v2546 = vpop.permute.xlu0 %2545
    %2547 = vrot.lane.b32.xlu0 %v2458, 32
    %v2548 = vpop.permute.xlu0 %2547
    %vm2553 = vcmask 392448
    %2554 = vst.msk [vmem:[#allocation2] sm:$0xff] %vm2553, %v2542
    %2555 = vst.msk [vmem:[#allocation2 + $0x10] sm:$0xff] %vm2553, %v2544
    %2556 = vst.msk [vmem:[#allocation2 + $0x20] sm:$0xff] %vm2553, %v2546
    %2557 = vst.msk [vmem:[#allocation2 + $0x30] sm:$0xff] %vm2553, %v2548
    %2562 = vrot.lane.b32.xlu0 %v2459, 48
    %v2563 = vpop.permute.xlu0 %2562
    %2564 = vrot.lane.b32.xlu0 %v2460, 48
    %v2565 = vpop.permute.xlu0 %2564
    %2566 = vrot.lane.b32.xlu0 %v2461, 48
    %v2567 = vpop.permute.xlu0 %2566
    %2568 = vrot.lane.b32.xlu0 %v2462, 48
    %v2569 = vpop.permute.xlu0 %2568
    %vm2574 = vcmask 523648
    %2575 = vst.msk [vmem:[#allocation2] sm:$0xff] %vm2574, %v2563
    %2576 = vst.msk [vmem:[#allocation2 + $0x10] sm:$0xff] %vm2574, %v2565
    %2577 = vst.msk [vmem:[#allocation2 + $0x20] sm:$0xff] %vm2574, %v2567
    %2578 = vst.msk [vmem:[#allocation2 + $0x30] sm:$0xff] %vm2574, %v2569
    %2583 = vrot.lane.b32.xlu0 %v2463, 64
    %v2584 = vpop.permute.xlu0 %2583
    %2585 = vrot.lane.b32.xlu0 %v2464, 64
    %v2586 = vpop.permute.xlu0 %2585
    %2587 = vrot.lane.b32.xlu0 %v2465, 64
    %v2588 = vpop.permute.xlu0 %2587
    %2589 = vrot.lane.b32.xlu0 %v2466, 64
    %v2590 = vpop.permute.xlu0 %2589
    %vm2595 = vcmask 654848
    %2596 = vst.msk [vmem:[#allocation2] sm:$0xff] %vm2595, %v2584
    %2597 = vst.msk [vmem:[#allocation2 + $0x10] sm:$0xff] %vm2595, %v2586
    %2598 = vst.msk [vmem:[#allocation2 + $0x20] sm:$0xff] %vm2595, %v2588
    %2599 = vst.msk [vmem:[#allocation2 + $0x30] sm:$0xff] %vm2595, %v2590
    %2604 = vrot.lane.b32.xlu0 %v2467, 80
    %v2605 = vpop.permute.xlu0 %2604
    %2606 = vrot.lane.b32.xlu0 %v2468, 80
    %v2607 = vpop.permute.xlu0 %2606
    %2608 = vrot.lane.b32.xlu0 %v2469, 80
    %v2609 = vpop.permute.xlu0 %2608
    %2610 = vrot.lane.b32.xlu0 %v2470, 80
    %v2611 = vpop.permute.xlu0 %2610
    %vm2616 = vcmask 786048
    %2617 = vst.msk [vmem:[#allocation2] sm:$0xff] %vm2616, %v2605
    %2618 = vst.msk [vmem:[#allocation2 + $0x10] sm:$0xff] %vm2616, %v2607
    %2619 = vst.msk [vmem:[#allocation2 + $0x20] sm:$0xff] %vm2616, %v2609
    %2620 = vst.msk [vmem:[#allocation2 + $0x30] sm:$0xff] %vm2616, %v2611
    %2625 = vrot.lane.b32.xlu0 %v2471, 96
    %v2626 = vpop.permute.xlu0 %2625
    %2627 = vrot.lane.b32.xlu0 %v2472, 96
    %v2628 = vpop.permute.xlu0 %2627
    %2629 = vrot.lane.b32.xlu0 %v2473, 96
    %v2630 = vpop.permute.xlu0 %2629
    %2631 = vrot.lane.b32.xlu0 %v2474, 96
    %v2632 = vpop.permute.xlu0 %2631
    %vm2637 = vcmask 917248
    %2638 = vst.msk [vmem:[#allocation2] sm:$0xff] %vm2637, %v2626
    %2639 = vst.msk [vmem:[#allocation2 + $0x10] sm:$0xff] %vm2637, %v2628
    %2640 = vst.msk [vmem:[#allocation2 + $0x20] sm:$0xff] %vm2637, %v2630
    %2641 = vst.msk [vmem:[#allocation2 + $0x30] sm:$0xff] %vm2637, %v2632
    %2646 = vrot.lane.b32.xlu0 %v2475, 112
    %v2647 = vpop.permute.xlu0 %2646
    %2648 = vrot.lane.b32.xlu0 %v2476, 112
    %v2649 = vpop.permute.xlu0 %2648
    %2650 = vrot.lane.b32.xlu0 %v2477, 112
    %v2651 = vpop.permute.xlu0 %2650
    %2652 = vrot.lane.b32.xlu0 %v2478, 112
    %v2653 = vpop.permute.xlu0 %2652
    %vm2658 = vcmask 1048448
    %2659 = vst.msk [vmem:[#allocation2] sm:$0xff] %vm2658, %v2647
    %2660 = vst.msk [vmem:[#allocation2 + $0x10] sm:$0xff] %vm2658, %v2649
    %2661 = vst.msk [vmem:[#allocation2 + $0x20] sm:$0xff] %vm2658, %v2651
    %2662 = vst.msk [vmem:[#allocation2 + $0x30] sm:$0xff] %vm2658, %v2653
    %2663 = vst.msk [vmem:[#allocation2 + $0x8] sm:$0xff] %vm2511, %v2479
    %2664 = vst.msk [vmem:[#allocation2 + $0x18] sm:$0xff] %vm2511, %v2480
    %2665 = vst.msk [vmem:[#allocation2 + $0x28] sm:$0xff] %vm2511, %v2481
    %2666 = vst.msk [vmem:[#allocation2 + $0x38] sm:$0xff] %vm2511, %v2482
    %2671 = vrot.lane.b32.xlu0 %v2483, 16
    %v2672 = vpop.permute.xlu0 %2671
    %2673 = vrot.lane.b32.xlu0 %v2484, 16
    %v2674 = vpop.permute.xlu0 %2673
    %2675 = vrot.lane.b32.xlu0 %v2485, 16
    %v2676 = vpop.permute.xlu0 %2675
    %2677 = vrot.lane.b32.xlu0 %v2486, 16
    %v2678 = vpop.permute.xlu0 %2677
    %2683 = vst.msk [vmem:[#allocation2 + $0x8] sm:$0xff] %vm2532, %v2672
    %2684 = vst.msk [vmem:[#allocation2 + $0x18] sm:$0xff] %vm2532, %v2674
    %2685 = vst.msk [vmem:[#allocation2 + $0x28] sm:$0xff] %vm2532, %v2676
    %2686 = vst.msk [vmem:[#allocation2 + $0x38] sm:$0xff] %vm2532, %v2678
    %2691 = vrot.lane.b32.xlu0 %v2487, 32
    %v2692 = vpop.permute.xlu0 %2691
    %2693 = vrot.lane.b32.xlu0 %v2488, 32
    %v2694 = vpop.permute.xlu0 %2693
    %2695 = vrot.lane.b32.xlu0 %v2489, 32
    %v2696 = vpop.permute.xlu0 %2695
    %2697 = vrot.lane.b32.xlu0 %v2490, 32
    %v2698 = vpop.permute.xlu0 %2697
    %2703 = vst.msk [vmem:[#allocation2 + $0x8] sm:$0xff] %vm2553, %v2692
    %2704 = vst.msk [vmem:[#allocation2 + $0x18] sm:$0xff] %vm2553, %v2694
    %2705 = vst.msk [vmem:[#allocation2 + $0x28] sm:$0xff] %vm2553, %v2696
    %2706 = vst.msk [vmem:[#allocation2 + $0x38] sm:$0xff] %vm2553, %v2698
    %2711 = vrot.lane.b32.xlu0 %v2491, 48
    %v2712 = vpop.permute.xlu0 %2711
    %2713 = vrot.lane.b32.xlu0 %v2492, 48
    %v2714 = vpop.permute.xlu0 %2713
    %2715 = vrot.lane.b32.xlu0 %v2493, 48
    %v2716 = vpop.permute.xlu0 %2715
    %2717 = vrot.lane.b32.xlu0 %v2494, 48
    %v2718 = vpop.permute.xlu0 %2717
    %2723 = vst.msk [vmem:[#allocation2 + $0x8] sm:$0xff] %vm2574, %v2712
    %2724 = vst.msk [vmem:[#allocation2 + $0x18] sm:$0xff] %vm2574, %v2714
    %2725 = vst.msk [vmem:[#allocation2 + $0x28] sm:$0xff] %vm2574, %v2716
    %2726 = vst.msk [vmem:[#allocation2 + $0x38] sm:$0xff] %vm2574, %v2718
    %2731 = vrot.lane.b32.xlu0 %v2495, 64
    %v2732 = vpop.permute.xlu0 %2731
    %2733 = vrot.lane.b32.xlu0 %v2496, 64
    %v2734 = vpop.permute.xlu0 %2733
    %2735 = vrot.lane.b32.xlu0 %v2497, 64
    %v2736 = vpop.permute.xlu0 %2735
    %2737 = vrot.lane.b32.xlu0 %v2498, 64
    %v2738 = vpop.permute.xlu0 %2737
    %2743 = vst.msk [vmem:[#allocation2 + $0x8] sm:$0xff] %vm2595, %v2732
    %2744 = vst.msk [vmem:[#allocation2 + $0x18] sm:$0xff] %vm2595, %v2734
    %2745 = vst.msk [vmem:[#allocation2 + $0x28] sm:$0xff] %vm2595, %v2736
    %2746 = vst.msk [vmem:[#allocation2 + $0x38] sm:$0xff] %vm2595, %v2738
    %2751 = vrot.lane.b32.xlu0 %v2499, 80
    %v2752 = vpop.permute.xlu0 %2751
    %2753 = vrot.lane.b32.xlu0 %v2500, 80
    %v2754 = vpop.permute.xlu0 %2753
    %2755 = vrot.lane.b32.xlu0 %v2501, 80
    %v2756 = vpop.permute.xlu0 %2755
    %2757 = vrot.lane.b32.xlu0 %v2502, 80
    %v2758 = vpop.permute.xlu0 %2757
    %2763 = vst.msk [vmem:[#allocation2 + $0x8] sm:$0xff] %vm2616, %v2752
    %2764 = vst.msk [vmem:[#allocation2 + $0x18] sm:$0xff] %vm2616, %v2754
    %2765 = vst.msk [vmem:[#allocation2 + $0x28] sm:$0xff] %vm2616, %v2756
    %2766 = vst.msk [vmem:[#allocation2 + $0x38] sm:$0xff] %vm2616, %v2758
    %2771 = vrot.lane.b32.xlu0 %v2503, 96
    %v2772 = vpop.permute.xlu0 %2771
    %2773 = vrot.lane.b32.xlu0 %v2504, 96
    %v2774 = vpop.permute.xlu0 %2773
    %2775 = vrot.lane.b32.xlu0 %v2505, 96
    %v2776 = vpop.permute.xlu0 %2775
    %2777 = vrot.lane.b32.xlu0 %v2506, 96
    %v2778 = vpop.permute.xlu0 %2777
    %2783 = vst.msk [vmem:[#allocation2 + $0x8] sm:$0xff] %vm2637, %v2772
    %2784 = vst.msk [vmem:[#allocation2 + $0x18] sm:$0xff] %vm2637, %v2774
    %2785 = vst.msk [vmem:[#allocation2 + $0x28] sm:$0xff] %vm2637, %v2776
    %2786 = vst.msk [vmem:[#allocation2 + $0x38] sm:$0xff] %vm2637, %v2778
    %2791 = vrot.lane.b32.xlu0 %v2507, 112
    %v2792 = vpop.permute.xlu0 %2791
    %2793 = vrot.lane.b32.xlu0 %v2508, 112
    %v2794 = vpop.permute.xlu0 %2793
    %2795 = vrot.lane.b32.xlu0 %v2509, 112
    %v2796 = vpop.permute.xlu0 %2795
    %2797 = vrot.lane.b32.xlu0 %v2510, 112
    %v2798 = vpop.permute.xlu0 %2797
    %2803 = vst.msk [vmem:[#allocation2 + $0x8] sm:$0xff] %vm2658, %v2792
    %2804 = vst.msk [vmem:[#allocation2 + $0x18] sm:$0xff] %vm2658, %v2794
    %2805 = vst.msk [vmem:[#allocation2 + $0x28] sm:$0xff] %vm2658, %v2796
    %2806 = vst.msk [vmem:[#allocation2 + $0x38] sm:$0xff] %vm2658, %v2798
    %v2807 = vld [vmem:[#allocation2] sm:$0xff]
    %v2808 = vld [vmem:[#allocation2 + $0x8] sm:$0xff]
    %v2809 = vld [vmem:[#allocation2 + $0x10] sm:$0xff]
    %v2810 = vld [vmem:[#allocation2 + $0x18] sm:$0xff]
    %v2811 = vld [vmem:[#allocation2 + $0x20] sm:$0xff]
    %v2812 = vld [vmem:[#allocation2 + $0x28] sm:$0xff]
    %v2813 = vld [vmem:[#allocation2 + $0x30] sm:$0xff]
    %v2814 = vld [vmem:[#allocation2 + $0x38] sm:$0xff]
    %v2815 = vld [vmem:[%s3] sm:$0xff]
    %v2816 = vld [vmem:[%s3 + $0x8] sm:$0xff]
    %v2817 = vld [vmem:[%s3 + $0x10] sm:$0xff]
    %v2818 = vld [vmem:[%s3 + $0x18] sm:$0xff]
    %v2819 = vld [vmem:[%s3 + $0x20] sm:$0xff]
    %v2820 = vld [vmem:[%s3 + $0x28] sm:$0xff]
    %v2821 = vld [vmem:[%s3 + $0x30] sm:$0xff]
    %v2822 = vld [vmem:[%s3 + $0x38] sm:$0xff]
    %v2823 = vld [vmem:[%s3 + $0x40] sm:$0xff]
    %v2824 = vld [vmem:[%s3 + $0x48] sm:$0xff]
    %v2825 = vld [vmem:[%s3 + $0x50] sm:$0xff]
    %v2826 = vld [vmem:[%s3 + $0x58] sm:$0xff]
    %v2827 = vld [vmem:[%s3 + $0x60] sm:$0xff]
    %v2828 = vld [vmem:[%s3 + $0x68] sm:$0xff]
    %v2829 = vld [vmem:[%s3 + $0x70] sm:$0xff]
    %v2830 = vld [vmem:[%s3 + $0x78] sm:$0xff]
    %v2831 = vld [vmem:[%s3 + $0x80] sm:$0xff]
    %v2832 = vld [vmem:[%s3 + $0x88] sm:$0xff]
    %v2833 = vld [vmem:[%s3 + $0x90] sm:$0xff]
    %v2834 = vld [vmem:[%s3 + $0x98] sm:$0xff]
    %v2835 = vld [vmem:[%s3 + $0xa0] sm:$0xff]
    %v2836 = vld [vmem:[%s3 + $0xa8] sm:$0xff]
    %v2837 = vld [vmem:[%s3 + $0xb0] sm:$0xff]
    %v2838 = vld [vmem:[%s3 + $0xb8] sm:$0xff]
    %v2839 = vld [vmem:[%s3 + $0xc0] sm:$0xff]
    %v2840 = vld [vmem:[%s3 + $0xc8] sm:$0xff]
    %v2841 = vld [vmem:[%s3 + $0xd0] sm:$0xff]
    %v2842 = vld [vmem:[%s3 + $0xd8] sm:$0xff]
    %v2843 = vld [vmem:[%s3 + $0xe0] sm:$0xff]
    %v2844 = vld [vmem:[%s3 + $0xe8] sm:$0xff]
    %v2845 = vld [vmem:[%s3 + $0xf0] sm:$0xff]
    %v2846 = vld [vmem:[%s3 + $0xf8] sm:$0xff]
    %2847 = vmatprep.subr.mxu0 0.0
    %2848 = vmatpush1.msra.mxu0 %v2830
    %2849 = vmatprep.subr.mxu0 0.0
    %2850 = vmatpush1.msra.mxu0 %v2829
    %2851 = vmatprep.subr.mxu0 0.0
    %2852 = vmatpush1.msra.mxu0 %v2828
    %2853 = vmatprep.subr.mxu0 0.0
    %2854 = vmatpush1.msra.mxu0 %v2827
    %2855 = vmatprep.subr.mxu0 0.0
    %2856 = vmatpush1.msra.mxu0 %v2826
    %2857 = vmatprep.subr.mxu0 0.0
    %2858 = vmatpush1.msra.mxu0 %v2825
    %2859 = vmatprep.subr.mxu0 0.0
    %2860 = vmatpush1.msra.mxu0 %v2824
    %2861 = vmatprep.subr.mxu0 0.0
    %2862 = vmatpush1.msra.mxu0 %v2823
    %2863 = vmatprep.subr.mxu0 0.0
    %2864 = vmatpush1.msra.mxu0 %v2822
    %2865 = vmatprep.subr.mxu0 0.0
    %2866 = vmatpush1.msra.mxu0 %v2821
    %2867 = vmatprep.subr.mxu0 0.0
    %2868 = vmatpush1.msra.mxu0 %v2820
    %2869 = vmatprep.subr.mxu0 0.0
    %2870 = vmatpush1.msra.mxu0 %v2819
    %2871 = vmatprep.subr.mxu0 0.0
    %2872 = vmatpush1.msra.mxu0 %v2818
    %2873 = vmatprep.subr.mxu0 0.0
    %2874 = vmatpush1.msra.mxu0 %v2817
    %2875 = vmatprep.subr.mxu0 0.0
    %2876 = vmatpush1.msra.mxu0 %v2816
    %2877 = vmatprep.subr.mxu0 0.0
    %2878 = vmatpush1.msra.mxu0 %v2815
    %2879 = vmatprep.subr.mxu0 0.0
    %2880 = vmatpush2.msra.mxu0 %v2846
    %2881 = vmatprep.subr.mxu0 0.0
    %2882 = vmatpush2.msra.mxu0 %v2845
    %2883 = vmatprep.subr.mxu0 0.0
    %2884 = vmatpush2.msra.mxu0 %v2844
    %2885 = vmatprep.subr.mxu0 0.0
    %2886 = vmatpush2.msra.mxu0 %v2843
    %2887 = vmatprep.subr.mxu0 0.0
    %2888 = vmatpush2.msra.mxu0 %v2842
    %2889 = vmatprep.subr.mxu0 0.0
    %2890 = vmatpush2.msra.mxu0 %v2841
    %2891 = vmatprep.subr.mxu0 0.0
    %2892 = vmatpush2.msra.mxu0 %v2840
    %2893 = vmatprep.subr.mxu0 0.0
    %2894 = vmatpush2.msra.mxu0 %v2839
    %2895 = vmatprep.subr.mxu0 0.0
    %2896 = vmatpush2.msra.mxu0 %v2838
    %2897 = vmatprep.subr.mxu0 0.0
    %2898 = vmatpush2.msra.mxu0 %v2837
    %2899 = vmatprep.subr.mxu0 0.0
    %2900 = vmatpush2.msra.mxu0 %v2836
    %2901 = vmatprep.subr.mxu0 0.0
    %2902 = vmatpush2.msra.mxu0 %v2835
    %2903 = vmatprep.subr.mxu0 0.0
    %2904 = vmatpush2.msra.mxu0 %v2834
    %2905 = vmatprep.subr.mxu0 0.0
    %2906 = vmatpush2.msra.mxu0 %v2833
    %2907 = vmatprep.subr.mxu0 0.0
    %2908 = vmatpush2.msra.mxu0 %v2832
    %2909 = vmatprep.subr.mxu0 0.0
    %2910 = vmatpush2.msra.mxu0 %v2831
    %2911 = vmatprep.mubr.f32.mxu0 %v2808
    %2912 = vmatmul.mubr.f32.gmra.mxu0 %v2807
    %v2913 = vpop.f32.mrf.mxu0
    %v2914 = vadd.f32 0.0, %v2913
    %v2915 = vpop.f32.mrf.mxu0
    %2916 = vmatprep.mubr.f32.mxu0 %v2810
    %2917 = vmatmul.mubr.f32.gmra.mxu0 %v2809
    %v2918 = vpop.f32.mrf.mxu0
    %v2919 = vadd.f32 0.0, %v2918
    %v2920 = vpop.f32.mrf.mxu0
    %2921 = vmatprep.mubr.f32.mxu0 %v2812
    %2922 = vmatmul.mubr.f32.gmra.mxu0 %v2811
    %v2923 = vpop.f32.mrf.mxu0
    %v2924 = vadd.f32 0.0, %v2923
    %v2925 = vpop.f32.mrf.mxu0
    %2926 = vmatprep.mubr.f32.mxu0 %v2814
    %2927 = vmatmul.mubr.f32.gmra.mxu0 %v2813
    %v2928 = vpop.f32.mrf.mxu0
    %v2929 = vadd.f32 0.0, %v2928
    %v2930 = vpop.f32.mrf.mxu0
    %2931 = vdwg.mxu0
    %v2932 = vmax.f32 %v2914, %v2919
    %v2933 = vmax.f32 %v2924, %v2929
    %v2934 = vmax.f32 %v2932, %v2933
    %v2935 = vld [vmem:[%s4] sm:$0x1]
    %v2937 = vlaneseq
    %v2938 = vshrl.u32 %v2937, 7
    %v2939 = vsub.s32 0, %v2938
    %v2940 = vrot.slane %v2935, %v2939
    %v2942 = vadd.f32 %v2934, %v2940
    %v2943 = vmax.f32 %v2942, 0.0
    %vm2944 = vcmask 254976
    %2945 = vst.msk [vmem:[#allocation3] sm:$0x3] %vm2944, %v2943
    %2947 = vrot.lane.b32.xlu0 %v2943, 32
    %v2948 = vpop.permute.xlu0 %2947
    %vm2950 = vcmask 519426
    %2951 = vst.msk [vmem:[#allocation3 - $0x2] sm:$0xc] %vm2950, %v2948
    %2952 = vrot.lane.b32.xlu0 %v2943, 64
    %v2953 = vpop.permute.xlu0 %2952
    %vm2955 = vcmask 783876
    %2956 = vst.msk [vmem:[#allocation3 - $0x4] sm:$0x30] %vm2955, %v2953
    %2957 = vrot.lane.b32.xlu0 %v2943, 96
    %v2958 = vpop.permute.xlu0 %2957
    %vm2960 = vcmask 1048326
    %2961 = vst.msk [vmem:[#allocation3 - $0x6] sm:$0xc0] %vm2960, %v2958
    %v2962 = vld [vmem:[#allocation3] sm:$0x3]
    %v2963 = vld [vmem:[%s5] sm:$0xff]
    %v2964 = vld [vmem:[%s5 + $0x8] sm:$0xff]
    %v2965 = vld [vmem:[%s5 + $0x10] sm:$0xff]
    %v2966 = vld [vmem:[%s5 + $0x18] sm:$0xff]
    %v2967 = vld [vmem:[%s5 + $0x20] sm:$0xff]
    %v2968 = vld [vmem:[%s5 + $0x28] sm:$0xff]
    %v2969 = vld [vmem:[%s5 + $0x30] sm:$0xff]
    %v2970 = vld [vmem:[%s5 + $0x38] sm:$0xff]
    %v2971 = vld [vmem:[%s5 + $0x40] sm:$0xff]
    %v2972 = vld [vmem:[%s5 + $0x48] sm:$0xff]
    %v2973 = vld [vmem:[%s5 + $0x50] sm:$0xff]
    %v2974 = vld [vmem:[%s5 + $0x58] sm:$0xff]
    %v2975 = vld [vmem:[%s5 + $0x60] sm:$0xff]
    %v2976 = vld [vmem:[%s5 + $0x68] sm:$0xff]
    %v2977 = vld [vmem:[%s5 + $0x70] sm:$0xff]
    %v2978 = vld [vmem:[%s5 + $0x78] sm:$0xff]
    %v2979 = vld [vmem:[%s5 + $0x80] sm:$0xff]
    %v2980 = vld [vmem:[%s5 + $0x88] sm:$0xff]
    %v2981 = vld [vmem:[%s5 + $0x90] sm:$0xff]
    %v2982 = vld [vmem:[%s5 + $0x98] sm:$0xff]
    %v2983 = vld [vmem:[%s5 + $0xa0] sm:$0xff]
    %v2984 = vld [vmem:[%s5 + $0xa8] sm:$0xff]
    %v2985 = vld [vmem:[%s5 + $0xb0] sm:$0xff]
    %v2986 = vld [vmem:[%s5 + $0xb8] sm:$0xff]
    %v2987 = vld [vmem:[%s5 + $0xc0] sm:$0xff]
    %v2988 = vld [vmem:[%s5 + $0xc8] sm:$0xff]
    %v2989 = vld [vmem:[%s5 + $0xd0] sm:$0xff]
    %v2990 = vld [vmem:[%s5 + $0xd8] sm:$0xff]
    %v2991 = vld [vmem:[%s5 + $0xe0] sm:$0xff]
    %v2992 = vld [vmem:[%s5 + $0xe8] sm:$0xff]
    %v2993 = vld [vmem:[%s5 + $0xf0] sm:$0xff]
    %v2994 = vld [vmem:[%s5 + $0xf8] sm:$0xff]
    %v2995 = vld [vmem:[%s5 + $0x100] sm:$0xff]
    %v2996 = vld [vmem:[%s5 + $0x108] sm:$0xff]
    %v2997 = vld [vmem:[%s5 + $0x110] sm:$0xff]
    %v2998 = vld [vmem:[%s5 + $0x118] sm:$0xff]
    %v2999 = vld [vmem:[%s5 + $0x120] sm:$0xff]
    %v3000 = vld [vmem:[%s5 + $0x128] sm:$0xff]
    %v3001 = vld [vmem:[%s5 + $0x130] sm:$0xff]
    %v3002 = vld [vmem:[%s5 + $0x138] sm:$0xff]
    %v3003 = vld [vmem:[%s5 + $0x140] sm:$0xff]
    %v3004 = vld [vmem:[%s5 + $0x148] sm:$0xff]
    %v3005 = vld [vmem:[%s5 + $0x150] sm:$0xff]
    %v3006 = vld [vmem:[%s5 + $0x158] sm:$0xff]
    %v3007 = vld [vmem:[%s5 + $0x160] sm:$0xff]
    %v3008 = vld [vmem:[%s5 + $0x168] sm:$0xff]
    %v3009 = vld [vmem:[%s5 + $0x170] sm:$0xff]
    %v3010 = vld [vmem:[%s5 + $0x178] sm:$0xff]
    %v3011 = vld [vmem:[%s5 + $0x180] sm:$0xff]
    %v3012 = vld [vmem:[%s5 + $0x188] sm:$0xff]
    %v3013 = vld [vmem:[%s5 + $0x190] sm:$0xff]
    %v3014 = vld [vmem:[%s5 + $0x198] sm:$0xff]
    %v3015 = vld [vmem:[%s5 + $0x1a0] sm:$0xff]
    %v3016 = vld [vmem:[%s5 + $0x1a8] sm:$0xff]
    %v3017 = vld [vmem:[%s5 + $0x1b0] sm:$0xff]
    %v3018 = vld [vmem:[%s5 + $0x1b8] sm:$0xff]
    %v3019 = vld [vmem:[%s5 + $0x1c0] sm:$0xff]
    %v3020 = vld [vmem:[%s5 + $0x1c8] sm:$0xff]
    %v3021 = vld [vmem:[%s5 + $0x1d0] sm:$0xff]
    %v3022 = vld [vmem:[%s5 + $0x1d8] sm:$0xff]
    %v3023 = vld [vmem:[%s5 + $0x1e0] sm:$0xff]
    %v3024 = vld [vmem:[%s5 + $0x1e8] sm:$0xff]
    %v3025 = vld [vmem:[%s5 + $0x1f0] sm:$0xff]
    %v3026 = vld [vmem:[%s5 + $0x1f8] sm:$0xff]
    %v3027 = vld [vmem:[%s6] sm:$0xf]
    %v3029 = vlaneseq
    %v3030 = vshrl.u32 %v3029, 7
    %v3031 = vsub.s32 0, %v3030
    %v3032 = vrot.slane %v3027, %v3031
    %v3033 = vlaneseq
    %v3034 = vshrl.u32 %v3033, 7
    %v3035 = vsub.s32 1, %v3034
    %v3036 = vrot.slane %v3027, %v3035
    %v3037 = vlaneseq
    %v3038 = vshrl.u32 %v3037, 7
    %v3039 = vsub.s32 2, %v3038
    %v3040 = vrot.slane %v3027, %v3039
    %v3041 = vlaneseq
    %v3042 = vshrl.u32 %v3041, 7
    %v3043 = vsub.s32 3, %v3042
    %v3044 = vrot.slane %v3027, %v3043
    %3049 = vmatprep.subr.mxu0 %v3024
    %3050 = vmatpush1.msra.mxu0 %v3023
    %3051 = vmatprep.subr.mxu0 %v3020
    %3052 = vmatpush1.msra.mxu0 %v3019
    %3053 = vmatprep.subr.mxu0 %v3016
    %3054 = vmatpush1.msra.mxu0 %v3015
    %3055 = vmatprep.subr.mxu0 %v3012
    %3056 = vmatpush1.msra.mxu0 %v3011
    %3057 = vmatprep.subr.mxu0 %v3008
    %3058 = vmatpush1.msra.mxu0 %v3007
    %3059 = vmatprep.subr.mxu0 %v3004
    %3060 = vmatpush1.msra.mxu0 %v3003
    %3061 = vmatprep.subr.mxu0 %v3000
    %3062 = vmatpush1.msra.mxu0 %v2999
    %3063 = vmatprep.subr.mxu0 %v2996
    %3064 = vmatpush1.msra.mxu0 %v2995
    %3065 = vmatprep.subr.mxu0 %v2992
    %3066 = vmatpush1.msra.mxu0 %v2991
    %3067 = vmatprep.subr.mxu0 %v2988
    %3068 = vmatpush1.msra.mxu0 %v2987
    %3069 = vmatprep.subr.mxu0 %v2984
    %3070 = vmatpush1.msra.mxu0 %v2983
    %3071 = vmatprep.subr.mxu0 %v2980
    %3072 = vmatpush1.msra.mxu0 %v2979
    %3073 = vmatprep.subr.mxu0 %v2976
    %3074 = vmatpush1.msra.mxu0 %v2975
    %3075 = vmatprep.subr.mxu0 %v2972
    %3076 = vmatpush1.msra.mxu0 %v2971
    %3077 = vmatprep.subr.mxu0 %v2968
    %3078 = vmatpush1.msra.mxu0 %v2967
    %3079 = vmatprep.subr.mxu0 %v2964
    %3080 = vmatpush1.msra.mxu0 %v2963
    %3081 = vmatprep.subr.mxu0 0.0
    %3082 = vmatpush2.msra.mxu0 0.0
    %3083 = vmatprep.subr.mxu0 0.0
    %3084 = vmatpush2.msra.mxu0 0.0
    %3085 = vmatprep.subr.mxu0 0.0
    %3086 = vmatpush2.msra.mxu0 0.0
    %3087 = vmatprep.subr.mxu0 0.0
    %3088 = vmatpush2.msra.mxu0 0.0
    %3089 = vmatprep.subr.mxu0 0.0
    %3090 = vmatpush2.msra.mxu0 0.0
    %3091 = vmatprep.subr.mxu0 0.0
    %3092 = vmatpush2.msra.mxu0 0.0
    %3093 = vmatprep.subr.mxu0 0.0
    %3094 = vmatpush2.msra.mxu0 0.0
    %3095 = vmatprep.subr.mxu0 0.0
    %3096 = vmatpush2.msra.mxu0 0.0
    %3097 = vmatprep.subr.mxu0 0.0
    %3098 = vmatpush2.msra.mxu0 0.0
    %3099 = vmatprep.subr.mxu0 0.0
    %3100 = vmatpush2.msra.mxu0 0.0
    %3101 = vmatprep.subr.mxu0 0.0
    %3102 = vmatpush2.msra.mxu0 0.0
    %3103 = vmatprep.subr.mxu0 0.0
    %3104 = vmatpush2.msra.mxu0 0.0
    %3105 = vmatprep.subr.mxu0 0.0
    %3106 = vmatpush2.msra.mxu0 0.0
    %3107 = vmatprep.subr.mxu0 0.0
    %3108 = vmatpush2.msra.mxu0 0.0
    %3109 = vmatprep.subr.mxu0 0.0
    %3110 = vmatpush2.msra.mxu0 0.0
    %3111 = vmatprep.subr.mxu0 0.0
    %3112 = vmatpush2.msra.mxu0 0.0
    %3113 = vmatprep.mubr.f32.mxu0 0.0
    %3114 = vmatmul.mubr.f32.gmra.mxu0 %v2962
    %v3115 = vpop.f32.mrf.mxu0
    %v3116 = vadd.f32 %v3032, %v3115
    %v3117 = vpop.f32.mrf.mxu0
    %v3118 = vadd.f32 %v3036, %v3117
    %3119 = vdwg.mxu0
    %3120 = vmatprep.subr.mxu0 %v3026
    %3121 = vmatpush1.msra.mxu0 %v3025
    %3122 = vmatprep.subr.mxu0 %v3022
    %3123 = vmatpush1.msra.mxu0 %v3021
    %3124 = vmatprep.subr.mxu0 %v3018
    %3125 = vmatpush1.msra.mxu0 %v3017
    %3126 = vmatprep.subr.mxu0 %v3014
    %3127 = vmatpush1.msra.mxu0 %v3013
    %3128 = vmatprep.subr.mxu0 %v3010
    %3129 = vmatpush1.msra.mxu0 %v3009
    %3130 = vmatprep.subr.mxu0 %v3006
    %3131 = vmatpush1.msra.mxu0 %v3005
    %3132 = vmatprep.subr.mxu0 %v3002
    %3133 = vmatpush1.msra.mxu0 %v3001
    %3134 = vmatprep.subr.mxu0 %v2998
    %3135 = vmatpush1.msra.mxu0 %v2997
    %3136 = vmatprep.subr.mxu0 %v2994
    %3137 = vmatpush1.msra.mxu0 %v2993
    %3138 = vmatprep.subr.mxu0 %v2990
    %3139 = vmatpush1.msra.mxu0 %v2989
    %3140 = vmatprep.subr.mxu0 %v2986
    %3141 = vmatpush1.msra.mxu0 %v2985
    %3142 = vmatprep.subr.mxu0 %v2982
    %3143 = vmatpush1.msra.mxu0 %v2981
    %3144 = vmatprep.subr.mxu0 %v2978
    %3145 = vmatpush1.msra.mxu0 %v2977
    %3146 = vmatprep.subr.mxu0 %v2974
    %3147 = vmatpush1.msra.mxu0 %v2973
    %3148 = vmatprep.subr.mxu0 %v2970
    %3149 = vmatpush1.msra.mxu0 %v2969
    %3150 = vmatprep.subr.mxu0 %v2966
    %3151 = vmatpush1.msra.mxu0 %v2965
    %3152 = vmatprep.subr.mxu0 0.0
    %3153 = vmatpush2.msra.mxu0 0.0
    %3154 = vmatprep.subr.mxu0 0.0
    %3155 = vmatpush2.msra.mxu0 0.0
    %3156 = vmatprep.subr.mxu0 0.0
    %3157 = vmatpush2.msra.mxu0 0.0
    %3158 = vmatprep.subr.mxu0 0.0
    %3159 = vmatpush2.msra.mxu0 0.0
    %3160 = vmatprep.subr.mxu0 0.0
    %3161 = vmatpush2.msra.mxu0 0.0
    %3162 = vmatprep.subr.mxu0 0.0
    %3163 = vmatpush2.msra.mxu0 0.0
    %3164 = vmatprep.subr.mxu0 0.0
    %3165 = vmatpush2.msra.mxu0 0.0
    %3166 = vmatprep.subr.mxu0 0.0
    %3167 = vmatpush2.msra.mxu0 0.0
    %3168 = vmatprep.subr.mxu0 0.0
    %3169 = vmatpush2.msra.mxu0 0.0
    %3170 = vmatprep.subr.mxu0 0.0
    %3171 = vmatpush2.msra.mxu0 0.0
    %3172 = vmatprep.subr.mxu0 0.0
    %3173 = vmatpush2.msra.mxu0 0.0
    %3174 = vmatprep.subr.mxu0 0.0
    %3175 = vmatpush2.msra.mxu0 0.0
    %3176 = vmatprep.subr.mxu0 0.0
    %3177 = vmatpush2.msra.mxu0 0.0
    %3178 = vmatprep.subr.mxu0 0.0
    %3179 = vmatpush2.msra.mxu0 0.0
    %3180 = vmatprep.subr.mxu0 0.0
    %3181 = vmatpush2.msra.mxu0 0.0
    %3182 = vmatprep.subr.mxu0 0.0
    %3183 = vmatpush2.msra.mxu0 0.0
    %3184 = vmatprep.mubr.f32.mxu0 0.0
    %3185 = vmatmul.mubr.f32.gmra.mxu0 %v2962
    %v3186 = vpop.f32.mrf.mxu0
    %v3187 = vadd.f32 %v3040, %v3186
    %v3188 = vpop.f32.mrf.mxu0
    %v3189 = vadd.f32 %v3044, %v3188
    %3190 = vdwg.mxu0
    %v3191 = vmax.f32 %v3116, 0.0
    %v3192 = vmax.f32 %v3118, 0.0
    %v3193 = vmax.f32 %v3187, 0.0
    %v3194 = vmax.f32 %v3189, 0.0
    %v3195 = vld [vmem:[%s7] sm:$0xff]
    %v3196 = vld [vmem:[%s7 + $0x8] sm:$0xff]
    %v3197 = vld [vmem:[%s7 + $0x10] sm:$0xff]
    %v3198 = vld [vmem:[%s7 + $0x18] sm:$0xff]
    %v3199 = vld [vmem:[%s7 + $0x20] sm:$0xff]
    %v3200 = vld [vmem:[%s7 + $0x28] sm:$0xff]
    %v3201 = vld [vmem:[%s7 + $0x30] sm:$0xff]
    %v3202 = vld [vmem:[%s7 + $0x38] sm:$0xff]
    %v3203 = vld [vmem:[%s7 + $0x40] sm:$0xff]
    %v3204 = vld [vmem:[%s7 + $0x48] sm:$0xff]
    %v3205 = vld [vmem:[%s7 + $0x50] sm:$0xff]
    %v3206 = vld [vmem:[%s7 + $0x58] sm:$0xff]
    %v3207 = vld [vmem:[%s7 + $0x60] sm:$0xff]
    %v3208 = vld [vmem:[%s7 + $0x68] sm:$0xff]
    %v3209 = vld [vmem:[%s7 + $0x70] sm:$0xff]
    %v3210 = vld [vmem:[%s7 + $0x78] sm:$0xff]
    %v3211 = vld [vmem:[%s7 + $0x80] sm:$0xff]
    %v3212 = vld [vmem:[%s7 + $0x88] sm:$0xff]
    %v3213 = vld [vmem:[%s7 + $0x90] sm:$0xff]
    %v3214 = vld [vmem:[%s7 + $0x98] sm:$0xff]
    %v3215 = vld [vmem:[%s7 + $0xa0] sm:$0xff]
    %v3216 = vld [vmem:[%s7 + $0xa8] sm:$0xff]
    %v3217 = vld [vmem:[%s7 + $0xb0] sm:$0xff]
    %v3218 = vld [vmem:[%s7 + $0xb8] sm:$0xff]
    %v3219 = vld [vmem:[%s7 + $0xc0] sm:$0xff]
    %v3220 = vld [vmem:[%s7 + $0xc8] sm:$0xff]
    %v3221 = vld [vmem:[%s7 + $0xd0] sm:$0xff]
    %v3222 = vld [vmem:[%s7 + $0xd8] sm:$0xff]
    %v3223 = vld [vmem:[%s7 + $0xe0] sm:$0xff]
    %v3224 = vld [vmem:[%s7 + $0xe8] sm:$0xff]
    %v3225 = vld [vmem:[%s7 + $0xf0] sm:$0xff]
    %v3226 = vld [vmem:[%s7 + $0xf8] sm:$0xff]
    %v3227 = vld [vmem:[%s7 + $0x100] sm:$0xff]
    %v3228 = vld [vmem:[%s7 + $0x108] sm:$0xff]
    %v3229 = vld [vmem:[%s7 + $0x110] sm:$0xff]
    %v3230 = vld [vmem:[%s7 + $0x118] sm:$0xff]
    %v3231 = vld [vmem:[%s7 + $0x120] sm:$0xff]
    %v3232 = vld [vmem:[%s7 + $0x128] sm:$0xff]
    %v3233 = vld [vmem:[%s7 + $0x130] sm:$0xff]
    %v3234 = vld [vmem:[%s7 + $0x138] sm:$0xff]
    %v3235 = vld [vmem:[%s7 + $0x140] sm:$0xff]
    %v3236 = vld [vmem:[%s7 + $0x148] sm:$0xff]
    %v3237 = vld [vmem:[%s7 + $0x150] sm:$0xff]
    %v3238 = vld [vmem:[%s7 + $0x158] sm:$0xff]
    %v3239 = vld [vmem:[%s7 + $0x160] sm:$0xff]
    %v3240 = vld [vmem:[%s7 + $0x168] sm:$0xff]
    %v3241 = vld [vmem:[%s7 + $0x170] sm:$0xff]
    %v3242 = vld [vmem:[%s7 + $0x178] sm:$0xff]
    %v3243 = vld [vmem:[%s7 + $0x180] sm:$0xff]
    %v3244 = vld [vmem:[%s7 + $0x188] sm:$0xff]
    %v3245 = vld [vmem:[%s7 + $0x190] sm:$0xff]
    %v3246 = vld [vmem:[%s7 + $0x198] sm:$0xff]
    %v3247 = vld [vmem:[%s7 + $0x1a0] sm:$0xff]
    %v3248 = vld [vmem:[%s7 + $0x1a8] sm:$0xff]
    %v3249 = vld [vmem:[%s7 + $0x1b0] sm:$0xff]
    %v3250 = vld [vmem:[%s7 + $0x1b8] sm:$0xff]
    %v3251 = vld [vmem:[%s7 + $0x1c0] sm:$0xff]
    %v3252 = vld [vmem:[%s7 + $0x1c8] sm:$0xff]
    %v3253 = vld [vmem:[%s7 + $0x1d0] sm:$0xff]
    %v3254 = vld [vmem:[%s7 + $0x1d8] sm:$0xff]
    %v3255 = vld [vmem:[%s7 + $0x1e0] sm:$0xff]
    %v3256 = vld [vmem:[%s7 + $0x1e8] sm:$0xff]
    %v3257 = vld [vmem:[%s7 + $0x1f0] sm:$0xff]
    %v3258 = vld [vmem:[%s7 + $0x1f8] sm:$0xff]
    %v3259 = vld [vmem:[%s8] sm:$0x1]
    %v3261 = vlaneseq
    %v3262 = vshrl.u32 %v3261, 7
    %v3263 = vsub.s32 0, %v3262
    %v3264 = vrot.slane %v3259, %v3263
    %3266 = vmatprep.subr.mxu0 0.0
    %3267 = vmatpush1.msra.mxu0 %v3210
    %3268 = vmatprep.subr.mxu0 0.0
    %3269 = vmatpush1.msra.mxu0 %v3209
    %3270 = vmatprep.subr.mxu0 0.0
    %3271 = vmatpush1.msra.mxu0 %v3208
    %3272 = vmatprep.subr.mxu0 0.0
    %3273 = vmatpush1.msra.mxu0 %v3207
    %3274 = vmatprep.subr.mxu0 0.0
    %3275 = vmatpush1.msra.mxu0 %v3206
    %3276 = vmatprep.subr.mxu0 0.0
    %3277 = vmatpush1.msra.mxu0 %v3205
    %3278 = vmatprep.subr.mxu0 0.0
    %3279 = vmatpush1.msra.mxu0 %v3204
    %3280 = vmatprep.subr.mxu0 0.0
    %3281 = vmatpush1.msra.mxu0 %v3203
    %3282 = vmatprep.subr.mxu0 0.0
    %3283 = vmatpush1.msra.mxu0 %v3202
    %3284 = vmatprep.subr.mxu0 0.0
    %3285 = vmatpush1.msra.mxu0 %v3201
    %3286 = vmatprep.subr.mxu0 0.0
    %3287 = vmatpush1.msra.mxu0 %v3200
    %3288 = vmatprep.subr.mxu0 0.0
    %3289 = vmatpush1.msra.mxu0 %v3199
    %3290 = vmatprep.subr.mxu0 0.0
    %3291 = vmatpush1.msra.mxu0 %v3198
    %3292 = vmatprep.subr.mxu0 0.0
    %3293 = vmatpush1.msra.mxu0 %v3197
    %3294 = vmatprep.subr.mxu0 0.0
    %3295 = vmatpush1.msra.mxu0 %v3196
    %3296 = vmatprep.subr.mxu0 0.0
    %3297 = vmatpush1.msra.mxu0 %v3195
    %3298 = vmatprep.subr.mxu0 0.0
    %3299 = vmatpush2.msra.mxu0 %v3226
    %3300 = vmatprep.subr.mxu0 0.0
    %3301 = vmatpush2.msra.mxu0 %v3225
    %3302 = vmatprep.subr.mxu0 0.0
    %3303 = vmatpush2.msra.mxu0 %v3224
    %3304 = vmatprep.subr.mxu0 0.0
    %3305 = vmatpush2.msra.mxu0 %v3223
    %3306 = vmatprep.subr.mxu0 0.0
    %3307 = vmatpush2.msra.mxu0 %v3222
    %3308 = vmatprep.subr.mxu0 0.0
    %3309 = vmatpush2.msra.mxu0 %v3221
    %3310 = vmatprep.subr.mxu0 0.0
    %3311 = vmatpush2.msra.mxu0 %v3220
    %3312 = vmatprep.subr.mxu0 0.0
    %3313 = vmatpush2.msra.mxu0 %v3219
    %3314 = vmatprep.subr.mxu0 0.0
    %3315 = vmatpush2.msra.mxu0 %v3218
    %3316 = vmatprep.subr.mxu0 0.0
    %3317 = vmatpush2.msra.mxu0 %v3217
    %3318 = vmatprep.subr.mxu0 0.0
    %3319 = vmatpush2.msra.mxu0 %v3216
    %3320 = vmatprep.subr.mxu0 0.0
    %3321 = vmatpush2.msra.mxu0 %v3215
    %3322 = vmatprep.subr.mxu0 0.0
    %3323 = vmatpush2.msra.mxu0 %v3214
    %3324 = vmatprep.subr.mxu0 0.0
    %3325 = vmatpush2.msra.mxu0 %v3213
    %3326 = vmatprep.subr.mxu0 0.0
    %3327 = vmatpush2.msra.mxu0 %v3212
    %3328 = vmatprep.subr.mxu0 0.0
    %3329 = vmatpush2.msra.mxu0 %v3211
    %3330 = vmatprep.mubr.f32.mxu0 %v3192
    %3331 = vmatmul.mubr.f32.gmra.mxu0 %v3191
    %v3332 = vpop.f32.mrf.mxu0
    %v3333 = vadd.f32 %v3264, %v3332
    %v3334 = vpop.f32.mrf.mxu0
    %3335 = vdwg.mxu0
    %3336 = vmatprep.subr.mxu0 0.0
    %3337 = vmatpush1.msra.mxu0 %v3242
    %3338 = vmatprep.subr.mxu0 0.0
    %3339 = vmatpush1.msra.mxu0 %v3241
    %3340 = vmatprep.subr.mxu0 0.0
    %3341 = vmatpush1.msra.mxu0 %v3240
    %3342 = vmatprep.subr.mxu0 0.0
    %3343 = vmatpush1.msra.mxu0 %v3239
    %3344 = vmatprep.subr.mxu0 0.0
    %3345 = vmatpush1.msra.mxu0 %v3238
    %3346 = vmatprep.subr.mxu0 0.0
    %3347 = vmatpush1.msra.mxu0 %v3237
    %3348 = vmatprep.subr.mxu0 0.0
    %3349 = vmatpush1.msra.mxu0 %v3236
    %3350 = vmatprep.subr.mxu0 0.0
    %3351 = vmatpush1.msra.mxu0 %v3235
    %3352 = vmatprep.subr.mxu0 0.0
    %3353 = vmatpush1.msra.mxu0 %v3234
    %3354 = vmatprep.subr.mxu0 0.0
    %3355 = vmatpush1.msra.mxu0 %v3233
    %3356 = vmatprep.subr.mxu0 0.0
    %3357 = vmatpush1.msra.mxu0 %v3232
    %3358 = vmatprep.subr.mxu0 0.0
    %3359 = vmatpush1.msra.mxu0 %v3231
    %3360 = vmatprep.subr.mxu0 0.0
    %3361 = vmatpush1.msra.mxu0 %v3230
    %3362 = vmatprep.subr.mxu0 0.0
    %3363 = vmatpush1.msra.mxu0 %v3229
    %3364 = vmatprep.subr.mxu0 0.0
    %3365 = vmatpush1.msra.mxu0 %v3228
    %3366 = vmatprep.subr.mxu0 0.0
    %3367 = vmatpush1.msra.mxu0 %v3227
    %3368 = vmatprep.subr.mxu0 0.0
    %3369 = vmatpush2.msra.mxu0 %v3258
    %3370 = vmatprep.subr.mxu0 0.0
    %3371 = vmatpush2.msra.mxu0 %v3257
    %3372 = vmatprep.subr.mxu0 0.0
    %3373 = vmatpush2.msra.mxu0 %v3256
    %3374 = vmatprep.subr.mxu0 0.0
    %3375 = vmatpush2.msra.mxu0 %v3255
    %3376 = vmatprep.subr.mxu0 0.0
    %3377 = vmatpush2.msra.mxu0 %v3254
    %3378 = vmatprep.subr.mxu0 0.0
    %3379 = vmatpush2.msra.mxu0 %v3253
    %3380 = vmatprep.subr.mxu0 0.0
    %3381 = vmatpush2.msra.mxu0 %v3252
    %3382 = vmatprep.subr.mxu0 0.0
    %3383 = vmatpush2.msra.mxu0 %v3251
    %3384 = vmatprep.subr.mxu0 0.0
    %3385 = vmatpush2.msra.mxu0 %v3250
    %3386 = vmatprep.subr.mxu0 0.0
    %3387 = vmatpush2.msra.mxu0 %v3249
    %3388 = vmatprep.subr.mxu0 0.0
    %3389 = vmatpush2.msra.mxu0 %v3248
    %3390 = vmatprep.subr.mxu0 0.0
    %3391 = vmatpush2.msra.mxu0 %v3247
    %3392 = vmatprep.subr.mxu0 0.0
    %3393 = vmatpush2.msra.mxu0 %v3246
    %3394 = vmatprep.subr.mxu0 0.0
    %3395 = vmatpush2.msra.mxu0 %v3245
    %3396 = vmatprep.subr.mxu0 0.0
    %3397 = vmatpush2.msra.mxu0 %v3244
    %3398 = vmatprep.subr.mxu0 0.0
    %3399 = vmatpush2.msra.mxu0 %v3243
    %3400 = vmatprep.mubr.f32.mxu0 %v3194
    %3401 = vmatmul.mubr.f32.gmra.mxu0 %v3193
    %v3402 = vpop.f32.mrf.mxu0
    %v3403 = vadd.f32 %v3333, %v3402
    %v3404 = vpop.f32.mrf.mxu0
    %3405 = vdwg.mxu0
    %v3406 = vmax.f32 %v3403, 0.0
    %v3407 = vld [vmem:[%s9] sm:$0xff]
    %v3408 = vld [vmem:[%s9 + $0x8] sm:$0xff]
    %v3409 = vld [vmem:[%s9 + $0x10] sm:$0xff]
    %v3410 = vld [vmem:[%s9 + $0x18] sm:$0xff]
    %v3411 = vld [vmem:[%s9 + $0x20] sm:$0xff]
    %v3412 = vld [vmem:[%s9 + $0x28] sm:$0xff]
    %v3413 = vld [vmem:[%s9 + $0x30] sm:$0xff]
    %v3414 = vld [vmem:[%s9 + $0x38] sm:$0xff]
    %v3415 = vld [vmem:[%s9 + $0x40] sm:$0xff]
    %v3416 = vld [vmem:[%s9 + $0x48] sm:$0xff]
    %v3417 = vld [vmem:[%s9 + $0x50] sm:$0xff]
    %v3418 = vld [vmem:[%s9 + $0x58] sm:$0xff]
    %v3419 = vld [vmem:[%s9 + $0x60] sm:$0xff]
    %v3420 = vld [vmem:[%s9 + $0x68] sm:$0xff]
    %v3421 = vld [vmem:[%s9 + $0x70] sm:$0xff]
    %v3422 = vld [vmem:[%s9 + $0x78] sm:$0xff]
    %v3423 = vld [vmem:[%s10] sm:$0x1]
    %v3425 = vlaneseq
    %v3426 = vshrl.u32 %v3425, 7
    %v3427 = vsub.s32 0, %v3426
    %v3428 = vrot.slane %v3423, %v3427
    %3430 = vmatprep.subr.mxu0 0.0
    %3431 = vmatpush1.msra.mxu0 %v3422
    %3432 = vmatprep.subr.mxu0 0.0
    %3433 = vmatpush1.msra.mxu0 %v3421
    %3434 = vmatprep.subr.mxu0 0.0
    %3435 = vmatpush1.msra.mxu0 %v3420
    %3436 = vmatprep.subr.mxu0 0.0
    %3437 = vmatpush1.msra.mxu0 %v3419
    %3438 = vmatprep.subr.mxu0 0.0
    %3439 = vmatpush1.msra.mxu0 %v3418
    %3440 = vmatprep.subr.mxu0 0.0
    %3441 = vmatpush1.msra.mxu0 %v3417
    %3442 = vmatprep.subr.mxu0 0.0
    %3443 = vmatpush1.msra.mxu0 %v3416
    %3444 = vmatprep.subr.mxu0 0.0
    %3445 = vmatpush1.msra.mxu0 %v3415
    %3446 = vmatprep.subr.mxu0 0.0
    %3447 = vmatpush1.msra.mxu0 %v3414
    %3448 = vmatprep.subr.mxu0 0.0
    %3449 = vmatpush1.msra.mxu0 %v3413
    %3450 = vmatprep.subr.mxu0 0.0
    %3451 = vmatpush1.msra.mxu0 %v3412
    %3452 = vmatprep.subr.mxu0 0.0
    %3453 = vmatpush1.msra.mxu0 %v3411
    %3454 = vmatprep.subr.mxu0 0.0
    %3455 = vmatpush1.msra.mxu0 %v3410
    %3456 = vmatprep.subr.mxu0 0.0
    %3457 = vmatpush1.msra.mxu0 %v3409
    %3458 = vmatprep.subr.mxu0 0.0
    %3459 = vmatpush1.msra.mxu0 %v3408
    %3460 = vmatprep.subr.mxu0 0.0
    %3461 = vmatpush1.msra.mxu0 %v3407
    %3462 = vmatprep.subr.mxu0 0.0
    %3463 = vmatpush2.msra.mxu0 0.0
    %3464 = vmatprep.subr.mxu0 0.0
    %3465 = vmatpush2.msra.mxu0 0.0
    %3466 = vmatprep.subr.mxu0 0.0
    %3467 = vmatpush2.msra.mxu0 0.0
    %3468 = vmatprep.subr.mxu0 0.0
    %3469 = vmatpush2.msra.mxu0 0.0
    %3470 = vmatprep.subr.mxu0 0.0
    %3471 = vmatpush2.msra.mxu0 0.0
    %3472 = vmatprep.subr.mxu0 0.0
    %3473 = vmatpush2.msra.mxu0 0.0
    %3474 = vmatprep.subr.mxu0 0.0
    %3475 = vmatpush2.msra.mxu0 0.0
    %3476 = vmatprep.subr.mxu0 0.0
    %3477 = vmatpush2.msra.mxu0 0.0
    %3478 = vmatprep.subr.mxu0 0.0
    %3479 = vmatpush2.msra.mxu0 0.0
    %3480 = vmatprep.subr.mxu0 0.0
    %3481 = vmatpush2.msra.mxu0 0.0
    %3482 = vmatprep.subr.mxu0 0.0
    %3483 = vmatpush2.msra.mxu0 0.0
    %3484 = vmatprep.subr.mxu0 0.0
    %3485 = vmatpush2.msra.mxu0 0.0
    %3486 = vmatprep.subr.mxu0 0.0
    %3487 = vmatpush2.msra.mxu0 0.0
    %3488 = vmatprep.subr.mxu0 0.0
    %3489 = vmatpush2.msra.mxu0 0.0
    %3490 = vmatprep.subr.mxu0 0.0
    %3491 = vmatpush2.msra.mxu0 0.0
    %3492 = vmatprep.subr.mxu0 0.0
    %3493 = vmatpush2.msra.mxu0 0.0
    %3494 = vmatprep.mubr.f32.mxu0 0.0
    %3495 = vmatmul.mubr.f32.gmra.mxu0 %v3406
    %v3496 = vpop.f32.mrf.mxu0
    %v3497 = vadd.f32 %v3428, %v3496
    %v3498 = vpop.f32.mrf.mxu0
    %3499 = vdwg.mxu0
    %vm3500 = vcmask 33792
    %3501 = vst.msk [vmem:[#allocation4] sm:$0x3] %vm3500, %v3497
    // Predicated region
    $region46: #{dqn_forward.1} parent=1 // pred_check
      _
    $region47: #{dqn_forward.1} parent=1 // pred_check_branch
      %3503 = sbr.rel (0) target = $region49
    $region48: #{dqn_forward.1} parent=1 // pred_region
      %s3505 = ssub.s32 32, 32
      %3506 = vsyncadd [#allocation5], %s3505
      %s3508 = sshll.u32 [#allocation4], 4
      %s3509 = int_to_ptr.vmem [resolvable:$true] %s3508
      %3511 = dma.vmem_to_hbm [thread:$0]  %s3509, 32, %s11, [#allocation5]
    $region49: #{dqn_forward.1} parent=1 // pred_fallthru
      _
    // Predicated region
    $region50: #{dqn_forward.1} parent=1 // pred_check
      _
    $region51: #{dqn_forward.1} parent=1 // pred_check_branch
      %3513 = sbr.rel (0) target = $region53
    $region52: #{dqn_forward.1} parent=1 // pred_region
      %3514 = dma.done [#allocation5], 32
    $region53: #{dqn_forward.1} parent=1 // pred_fallthru
      _
    %3515 = vsyncpa [#allocation5], 1

</llo_original>
